<compile_context>
chip_gen: v7x
topology: tpu7x:2x2x1
jax: 0.10.0
libtpu: 0.0.40
codegen_flags: <defaults>
</compile_context>

<pallas_src>
import jax
import jax.numpy as jnp
from jax.experimental import pallas as pl
from jax.experimental.pallas import tpu as pltpu

# real / lane-padded feature dims
D_IN         = 784           # real input width (kept unpadded for x / recon / w4 cols)
D_H,  D_H_P  = 400, 512      # hidden 400 -> 4 * 128
D_Z,  D_Z_P  = 20,  128      # latent 20  -> 1 * 128
D_HEAD_P     = 2 * D_Z_P     # fused mu || logvar head (256 lanes)


def _round_up(n, m):
    return ((n + m - 1) // m) * m


def _choose_tb(B):
    """Batch tile: MXU fill + >=2 grid steps on v7x when the batch allows it."""
    if B < 128:
        return _round_up(B, 16)      # bf16 sublane packing unit
    if B >= 512:
        return 256                   # fills 256-wide MXU rows (v6e/v7x), grid >= 2
    return 128                       # matches v5e MXU; keeps grid >= 2 for B >= 256


# ----------------------------------------------------------------------------
# Kernel: fused encode -> reparameterize -> decode for one batch tile.
# ----------------------------------------------------------------------------
def vae_forward_kernel(
    x_ref, eps_ref,
    w1_ref, b1_ref,
    wh_ref, bh_ref,
    w3_ref, b3_ref,
    w4_ref, b4_ref,
    recon_ref, mu_ref, logvar_ref,
):
    x = x_ref[...]                                     # (TB, 784) bf16
    eps = eps_ref[...].astype(jnp.float32)             # (TB, 128) f32

    # ---- encode: fc1 + relu (bf16 matmul, f32 accumulate) ----
    h1 = jnp.dot(x, w1_ref[...],
                 preferred_element_type=jnp.float32) + b1_ref[...]
    h1 = jnp.maximum(h1, 0.0)                          # (TB, 512) f32

    # ---- fused fc21 || fc22 head: single lane-dense matmul ----
    head = jnp.dot(h1.astype(jnp.bfloat16), wh_ref[...],
                   preferred_element_type=jnp.float32) + bh_ref[...]   # (TB, 256)
    mu = head[:, :D_Z_P]                               # (TB, 128)
    logvar = head[:, D_Z_P:]                           # (TB, 128)

    # ---- reparameterize: z = mu + eps * exp(0.5 * logvar)  (f32, EUP exp) ----
    std = jnp.exp(0.5 * logvar)
    z = mu + eps * std                                 # (TB, 128)

    # ---- decode: fc3 + relu, fc4 + sigmoid ----
    h3 = jnp.dot(z.astype(jnp.bfloat16), w3_ref[...],
                 preferred_element_type=jnp.float32) + b3_ref[...]
    h3 = jnp.maximum(h3, 0.0)                          # (TB, 512)

    logits = jnp.dot(h3.astype(jnp.bfloat16), w4_ref[...],
                     preferred_element_type=jnp.float32) + b4_ref[...]  # (TB, 784)

    # sigmoid = 1 / (1 + exp(-x)): exp + approx reciprocal both on the EUP slot.
    recon = pl.reciprocal(1.0 + jnp.exp(-logits), approx=True)
    recon = jnp.minimum(jnp.maximum(recon, 0.0), 1.0)  # guard approx rounding

    recon_ref[...] = recon
    mu_ref[...] = mu
    logvar_ref[...] = logvar


# ----------------------------------------------------------------------------
# Wrapper: cast/pad, tile over batch, slice real rows/lanes back.
# ----------------------------------------------------------------------------
@jax.jit
def vae_forward(x_nchw, eps, params):
    B = x_nchw.shape[0]
    # One fused reshape+cast pass; x stays 784 wide (full-dim block, no padding).
    x = x_nchw.reshape(B, D_IN).astype(jnp.bfloat16)                      # (B, 784) bf16
    eps_p = jnp.pad(eps, ((0, 0), (0, D_Z_P - eps.shape[1]))).astype(jnp.bfloat16)

    TB = _choose_tb(B)
    B_pad = _round_up(B, TB)
    if B_pad != B:
        x = jnp.pad(x, ((0, B_pad - B), (0, 0)))
        eps_p = jnp.pad(eps_p, ((0, B_pad - B), (0, 0)))
    grid = (B_pad // TB,)

    (w1, b1, wh, bh, w3, b3, w4, b4) = params

    def batch_spec(n):
        return pl.BlockSpec((TB, n), lambda i: (i, 0))

    def const_spec(arr):
        # Same block for every grid step -> stays resident in VMEM.
        return pl.BlockSpec(arr.shape, lambda i: (0, 0))

    flops = 2 * B_pad * (D_IN * D_H_P + D_H_P * D_HEAD_P
                         + D_Z_P * D_H_P + D_H_P * D_IN)
    transcendentals = B_pad * (D_Z_P + D_IN)            # reparam exp + sigmoid exp
    weight_bytes = sum(int(p.size) * p.dtype.itemsize for p in params)
    bytes_accessed = (int(x.size) * 2 + int(eps_p.size) * 2 + weight_bytes
                      + B_pad * D_IN * 4 + 2 * B_pad * D_Z_P * 4)

    recon, mu, logvar = pl.pallas_call(
        vae_forward_kernel,
        out_shape=(
            jax.ShapeDtypeStruct((B_pad, D_IN), jnp.float32),
            jax.ShapeDtypeStruct((B_pad, D_Z_P), jnp.float32),
            jax.ShapeDtypeStruct((B_pad, D_Z_P), jnp.float32),
        ),
        grid=grid,
        in_specs=[
            batch_spec(D_IN),                 # x (bf16, unpadded lanes)
            batch_spec(D_Z_P),                # eps (bf16)
            const_spec(w1), const_spec(b1),
            const_spec(wh), const_spec(bh),
            const_spec(w3), const_spec(b3),
            const_spec(w4), const_spec(b4),
        ],
        out_specs=(batch_spec(D_IN), batch_spec(D_Z_P), batch_spec(D_Z_P)),
        compiler_params=pltpu.CompilerParams(
            dimension_semantics=("parallel",)),
        cost_estimate=pl.CostEstimate(
            flops=flops,
            transcendentals=transcendentals,
            bytes_accessed=bytes_accessed),
    )(x, eps_p, w1, b1, wh, bh, w3, b3, w4, b4)

    # Slice padded rows / latent lanes back to the module's real shapes.
    return recon[:B], mu[:B, :D_Z], logvar[:B, :D_Z]


# ----------------------------------------------------------------------------
# Deterministic parameter init (PyTorch-Linear-style uniform), stored
# pre-transposed (in, out), fc21/fc22 fused, weights bf16 (biases f32).
# Padded rows/columns are exactly zero so padded lanes never leak.
# ----------------------------------------------------------------------------
def init_params(key):
    def linear(key, fan_in, fan_out, in_p, out_p):
        kw, kb = jax.random.split(key)
        bound = 1.0 / jnp.sqrt(fan_in)
        w = jax.random.uniform(kw, (fan_in, fan_out), jnp.float32, -bound, bound)
        b = jax.random.uniform(kb, (fan_out,), jnp.float32, -bound, bound)
        w_p = jnp.zeros((in_p, out_p), jnp.float32).at[:fan_in, :fan_out].set(w)
        b_p = jnp.zeros((1, out_p), jnp.float32).at[0, :fan_out].set(b)
        return w_p, b_p

    k1, k21, k22, k3, k4 = jax.random.split(key, 5)
    w1, b1   = linear(k1,  D_IN, D_H, D_IN,  D_H_P)    # fc1   (784 real rows)
    w21, b21 = linear(k21, D_H,  D_Z, D_H_P, D_Z_P)    # fc21  (mu)
    w22, b22 = linear(k22, D_H,  D_Z, D_H_P, D_Z_P)    # fc22  (logvar)
    w3, b3   = linear(k3,  D_Z,  D_H, D_Z_P, D_H_P)    # fc3
    w4, b4   = linear(k4,  D_H,  D_IN, D_H_P, D_IN)    # fc4   (784 real cols)

    # fuse fc21 || fc22 into one lane-dense head
    wh = jnp.concatenate([w21, w22], axis=1)            # (512, 256)
    bh = jnp.concatenate([b21, b22], axis=1)            # (1, 256)

    bf16 = lambda a: a.astype(jnp.bfloat16)
    return (bf16(w1), b1, bf16(wh), bh, bf16(w3), b3, bf16(w4), b4)


# Pure-JAX f32 reference (same bf16 inputs / weights) for a correctness check.
def vae_reference(x_nchw, eps, params):
    w1, b1, wh, bh, w3, b3, w4, b4 = [jnp.asarray(p, jnp.float32) for p in params]
    B = x_nchw.shape[0]
    x = x_nchw.reshape(B, D_IN).astype(jnp.bfloat16).astype(jnp.float32)
    eps_p = jnp.pad(eps, ((0, 0), (0, D_Z_P - D_Z)))
    eps_p = eps_p.astype(jnp.bfloat16).astype(jnp.float32)
    h1 = jnp.maximum(x @ w1 + b1, 0.0)
    head = h1 @ wh + bh
    mu, logvar = head[:, :D_Z_P], head[:, D_Z_P:]
    z = mu + eps_p * jnp.exp(0.5 * logvar)
    h3 = jnp.maximum(z @ w3 + b3, 0.0)
    recon = jax.nn.sigmoid(h3 @ w4 + b4)
    return recon, mu[:, :D_Z], logvar[:, :D_Z]


if __name__ == "__main__":
    key = jax.random.PRNGKey(0)
    kp, kx, ke = jax.random.split(key, 3)

    params = init_params(kp)

    B = 8
    x = jax.random.uniform(kx, (B, 1, 28, 28), jnp.float32, 0.0, 1.0)
    eps = jax.random.normal(ke, (B, D_Z), jnp.float32)

    recon, mu, logvar = vae_forward(x, eps, params)
    jax.block_until_ready((recon, mu, logvar))

    assert recon.shape == (B, 784)
    assert mu.shape == (B, 20)
    assert logvar.shape == (B, 20)
    assert bool(jnp.all(jnp.isfinite(recon)))
    assert bool(jnp.all((recon >= 0.0) & (recon <= 1.0)))

    # Compare against the f32 reference (difference = bf16 matmul rounding).
    r_ref, mu_ref, lv_ref = vae_reference(x, eps, params)
    assert float(jnp.max(jnp.abs(recon - r_ref))) < 5e-2
    assert float(jnp.max(jnp.abs(mu - mu_ref))) < 5e-2
    assert float(jnp.max(jnp.abs(logvar - lv_ref))) < 5e-2

    print("KERNEL_OK")
</pallas_src>

<mosaic_0001>
module attributes {stable_mosaic.version = 11 : i64} {
  func.func @vae_forward_kernel(%arg0: i32, %arg1: memref<16x784xbf16, #tpu.memory_space<vmem>>, %arg2: memref<16x128xbf16, #tpu.memory_space<vmem>>, %arg3: memref<784x512xbf16, #tpu.memory_space<vmem>>, %arg4: memref<1x512xf32, #tpu.memory_space<vmem>>, %arg5: memref<512x256xbf16, #tpu.memory_space<vmem>>, %arg6: memref<1x256xf32, #tpu.memory_space<vmem>>, %arg7: memref<128x512xbf16, #tpu.memory_space<vmem>>, %arg8: memref<1x512xf32, #tpu.memory_space<vmem>>, %arg9: memref<512x784xbf16, #tpu.memory_space<vmem>>, %arg10: memref<1x784xf32, #tpu.memory_space<vmem>>, %arg11: memref<16x784xf32, #tpu.memory_space<vmem>>, %arg12: memref<16x128xf32, #tpu.memory_space<vmem>>, %arg13: memref<16x128xf32, #tpu.memory_space<vmem>>) attributes {dimension_semantics = [#tpu.dimension_semantics<parallel>], iteration_bounds = array<i64: 1>, scalar_prefetch = 0 : i64, scratch_operands = 0 : i64, tpu.core_type = #tpu.core_type<tc>, window_params = [{transform_indices = @transform_0, window_bounds = array<i64: 16, 784>}, {transform_indices = @transform_1, window_bounds = array<i64: 16, 128>}, {pipeline_mode = #tpu.pipeline_mode<synchronous>, transform_indices = @transform_2, window_bounds = array<i64: 784, 512>}, {pipeline_mode = #tpu.pipeline_mode<synchronous>, transform_indices = @transform_3, window_bounds = array<i64: 1, 512>}, {pipeline_mode = #tpu.pipeline_mode<synchronous>, transform_indices = @transform_4, window_bounds = array<i64: 512, 256>}, {pipeline_mode = #tpu.pipeline_mode<synchronous>, transform_indices = @transform_5, window_bounds = array<i64: 1, 256>}, {pipeline_mode = #tpu.pipeline_mode<synchronous>, transform_indices = @transform_6, window_bounds = array<i64: 128, 512>}, {pipeline_mode = #tpu.pipeline_mode<synchronous>, transform_indices = @transform_7, window_bounds = array<i64: 1, 512>}, {pipeline_mode = #tpu.pipeline_mode<synchronous>, transform_indices = @transform_8, window_bounds = array<i64: 512, 784>}, {pipeline_mode = #tpu.pipeline_mode<synchronous>, transform_indices = @transform_9, window_bounds = array<i64: 1, 784>}, {transform_indices = @transform_10, window_bounds = array<i64: 16, 784>}, {transform_indices = @transform_11, window_bounds = array<i64: 16, 128>}, {transform_indices = @transform_12, window_bounds = array<i64: 16, 128>}]} {
    %c0 = arith.constant 0 : index
    %c0_0 = arith.constant 0 : index
    %0 = vector.load %arg1[%c0, %c0_0] : memref<16x784xbf16, #tpu.memory_space<vmem>>, vector<16x784xbf16>
    %c0_1 = arith.constant 0 : index
    %c0_2 = arith.constant 0 : index
    %1 = vector.load %arg2[%c0_1, %c0_2] : memref<16x128xbf16, #tpu.memory_space<vmem>>, vector<16x128xbf16>
    %2 = arith.extf %1 : vector<16x128xbf16> to vector<16x128xf32>
    %c0_3 = arith.constant 0 : index
    %c0_4 = arith.constant 0 : index
    %3 = vector.load %arg3[%c0_3, %c0_4] : memref<784x512xbf16, #tpu.memory_space<vmem>>, vector<784x512xbf16>
    %cst = arith.constant dense<0.000000e+00> : vector<16x512xf32>
    %4 = tpu.matmul %0, %3, %cst {dimension_numbers = #tpu.dot_dimension_numbers<[1], [0], [0], [1], [0, 0, 1, 1], [], []>} : vector<16x784xbf16>, vector<784x512xbf16>, vector<16x512xf32> -> vector<16x512xf32>
    %c0_5 = arith.constant 0 : index
    %c0_6 = arith.constant 0 : index
    %5 = vector.load %arg4[%c0_5, %c0_6] : memref<1x512xf32, #tpu.memory_space<vmem>>, vector<1x512xf32>
    %6 = vector.broadcast %5 : vector<1x512xf32> to vector<16x512xf32>
    %7 = arith.addf %4, %6 : vector<16x512xf32>
    %cst_7 = arith.constant 0.000000e+00 : f32
    %8 = vector.broadcast %cst_7 : f32 to vector<16x512xf32>
    %9 = arith.maximumf %7, %8 : vector<16x512xf32>
    %10 = arith.truncf %9 : vector<16x512xf32> to vector<16x512xbf16>
    %c0_8 = arith.constant 0 : index
    %c0_9 = arith.constant 0 : index
    %11 = vector.load %arg5[%c0_8, %c0_9] : memref<512x256xbf16, #tpu.memory_space<vmem>>, vector<512x256xbf16>
    %cst_10 = arith.constant dense<0.000000e+00> : vector<16x256xf32>
    %12 = tpu.matmul %10, %11, %cst_10 {dimension_numbers = #tpu.dot_dimension_numbers<[1], [0], [0], [1], [0, 0, 1, 1], [], []>} : vector<16x512xbf16>, vector<512x256xbf16>, vector<16x256xf32> -> vector<16x256xf32>
    %c0_11 = arith.constant 0 : index
    %c0_12 = arith.constant 0 : index
    %13 = vector.load %arg6[%c0_11, %c0_12] : memref<1x256xf32, #tpu.memory_space<vmem>>, vector<1x256xf32>
    %14 = vector.broadcast %13 : vector<1x256xf32> to vector<16x256xf32>
    %15 = arith.addf %12, %14 : vector<16x256xf32>
    %16 = vector.extract_strided_slice %15 {offsets = [0, 0], sizes = [16, 128], strides = [1, 1]} : vector<16x256xf32> to vector<16x128xf32>
    %17 = vector.extract_strided_slice %15 {offsets = [0, 128], sizes = [16, 128], strides = [1, 1]} : vector<16x256xf32> to vector<16x128xf32>
    %cst_13 = arith.constant 5.000000e-01 : f32
    %18 = vector.broadcast %cst_13 : f32 to vector<16x128xf32>
    %19 = arith.mulf %18, %17 : vector<16x128xf32>
    %20 = math.exp %19 : vector<16x128xf32>
    %21 = arith.mulf %2, %20 : vector<16x128xf32>
    %22 = arith.addf %16, %21 : vector<16x128xf32>
    %23 = arith.truncf %22 : vector<16x128xf32> to vector<16x128xbf16>
    %c0_14 = arith.constant 0 : index
    %c0_15 = arith.constant 0 : index
    %24 = vector.load %arg7[%c0_14, %c0_15] : memref<128x512xbf16, #tpu.memory_space<vmem>>, vector<128x512xbf16>
    %cst_16 = arith.constant dense<0.000000e+00> : vector<16x512xf32>
    %25 = tpu.matmul %23, %24, %cst_16 {dimension_numbers = #tpu.dot_dimension_numbers<[1], [0], [0], [1], [0, 0, 1, 1], [], []>} : vector<16x128xbf16>, vector<128x512xbf16>, vector<16x512xf32> -> vector<16x512xf32>
    %c0_17 = arith.constant 0 : index
    %c0_18 = arith.constant 0 : index
    %26 = vector.load %arg8[%c0_17, %c0_18] : memref<1x512xf32, #tpu.memory_space<vmem>>, vector<1x512xf32>
    %27 = vector.broadcast %26 : vector<1x512xf32> to vector<16x512xf32>
    %28 = arith.addf %25, %27 : vector<16x512xf32>
    %cst_19 = arith.constant 0.000000e+00 : f32
    %29 = vector.broadcast %cst_19 : f32 to vector<16x512xf32>
    %30 = arith.maximumf %28, %29 : vector<16x512xf32>
    %31 = arith.truncf %30 : vector<16x512xf32> to vector<16x512xbf16>
    %c0_20 = arith.constant 0 : index
    %c0_21 = arith.constant 0 : index
    %32 = vector.load %arg9[%c0_20, %c0_21] : memref<512x784xbf16, #tpu.memory_space<vmem>>, vector<512x784xbf16>
    %cst_22 = arith.constant dense<0.000000e+00> : vector<16x784xf32>
    %33 = tpu.matmul %31, %32, %cst_22 {dimension_numbers = #tpu.dot_dimension_numbers<[1], [0], [0], [1], [0, 0, 1, 1], [], []>} : vector<16x512xbf16>, vector<512x784xbf16>, vector<16x784xf32> -> vector<16x784xf32>
    %c0_23 = arith.constant 0 : index
    %c0_24 = arith.constant 0 : index
    %34 = vector.load %arg10[%c0_23, %c0_24] : memref<1x784xf32, #tpu.memory_space<vmem>>, vector<1x784xf32>
    %35 = vector.broadcast %34 : vector<1x784xf32> to vector<16x784xf32>
    %36 = arith.addf %33, %35 : vector<16x784xf32>
    %cst_25 = arith.constant 0.000000e+00 : f32
    %37 = vector.broadcast %cst_25 : f32 to vector<16x784xf32>
    %38 = arith.subf %37, %36 : vector<16x784xf32>
    %39 = math.exp %38 : vector<16x784xf32>
    %cst_26 = arith.constant 1.000000e+00 : f32
    %40 = vector.broadcast %cst_26 : f32 to vector<16x784xf32>
    %41 = arith.addf %40, %39 : vector<16x784xf32>
    %42 = tpu.reciprocal %41 {approx = true} : vector<16x784xf32> -> vector<16x784xf32>
    %cst_27 = arith.constant 0.000000e+00 : f32
    %43 = vector.broadcast %cst_27 : f32 to vector<16x784xf32>
    %44 = arith.maximumf %42, %43 : vector<16x784xf32>
    %cst_28 = arith.constant 1.000000e+00 : f32
    %45 = vector.broadcast %cst_28 : f32 to vector<16x784xf32>
    %46 = arith.minimumf %44, %45 : vector<16x784xf32>
    %c0_29 = arith.constant 0 : index
    %c0_30 = arith.constant 0 : index
    %47 = vector.load %arg11[%c0_29, %c0_30] : memref<16x784xf32, #tpu.memory_space<vmem>>, vector<16x784xf32>
    tpu.vector_store %arg11[%c0_29, %c0_30], %46 {strides = array<i32>} : memref<16x784xf32, #tpu.memory_space<vmem>>, vector<16x784xf32>,
    %c0_31 = arith.constant 0 : index
    %c0_32 = arith.constant 0 : index
    %48 = vector.load %arg12[%c0_31, %c0_32] : memref<16x128xf32, #tpu.memory_space<vmem>>, vector<16x128xf32>
    tpu.vector_store %arg12[%c0_31, %c0_32], %16 {strides = array<i32>} : memref<16x128xf32, #tpu.memory_space<vmem>>, vector<16x128xf32>,
    %c0_33 = arith.constant 0 : index
    %c0_34 = arith.constant 0 : index
    %49 = vector.load %arg13[%c0_33, %c0_34] : memref<16x128xf32, #tpu.memory_space<vmem>>, vector<16x128xf32>
    tpu.vector_store %arg13[%c0_33, %c0_34], %17 {strides = array<i32>} : memref<16x128xf32, #tpu.memory_space<vmem>>, vector<16x128xf32>,
    return
  }
  func.func @transform_0(%arg0: i32) -> (i32, i32) {
    %c0_i32 = arith.constant 0 : i32
    %c0_i32_0 = arith.constant 0 : i32
    return %arg0, %c0_i32 : i32, i32
  }
  func.func @transform_1(%arg0: i32) -> (i32, i32) {
    %c0_i32 = arith.constant 0 : i32
    %c0_i32_0 = arith.constant 0 : i32
    return %arg0, %c0_i32 : i32, i32
  }
  func.func @transform_2(%arg0: i32) -> (i32, i32) {
    %c0_i32 = arith.constant 0 : i32
    %c0_i32_0 = arith.constant 0 : i32
    %c0_i32_1 = arith.constant 0 : i32
    return %c0_i32, %c0_i32_0 : i32, i32
  }
  func.func @transform_3(%arg0: i32) -> (i32, i32) {
    %c0_i32 = arith.constant 0 : i32
    %c0_i32_0 = arith.constant 0 : i32
    %c0_i32_1 = arith.constant 0 : i32
    return %c0_i32, %c0_i32_0 : i32, i32
  }
  func.func @transform_4(%arg0: i32) -> (i32, i32) {
    %c0_i32 = arith.constant 0 : i32
    %c0_i32_0 = arith.constant 0 : i32
    %c0_i32_1 = arith.constant 0 : i32
    return %c0_i32, %c0_i32_0 : i32, i32
  }
  func.func @transform_5(%arg0: i32) -> (i32, i32) {
    %c0_i32 = arith.constant 0 : i32
    %c0_i32_0 = arith.constant 0 : i32
    %c0_i32_1 = arith.constant 0 : i32
    return %c0_i32, %c0_i32_0 : i32, i32
  }
  func.func @transform_6(%arg0: i32) -> (i32, i32) {
    %c0_i32 = arith.constant 0 : i32
    %c0_i32_0 = arith.constant 0 : i32
    %c0_i32_1 = arith.constant 0 : i32
    return %c0_i32, %c0_i32_0 : i32, i32
  }
  func.func @transform_7(%arg0: i32) -> (i32, i32) {
    %c0_i32 = arith.constant 0 : i32
    %c0_i32_0 = arith.constant 0 : i32
    %c0_i32_1 = arith.constant 0 : i32
    return %c0_i32, %c0_i32_0 : i32, i32
  }
  func.func @transform_8(%arg0: i32) -> (i32, i32) {
    %c0_i32 = arith.constant 0 : i32
    %c0_i32_0 = arith.constant 0 : i32
    %c0_i32_1 = arith.constant 0 : i32
    return %c0_i32, %c0_i32_0 : i32, i32
  }
  func.func @transform_9(%arg0: i32) -> (i32, i32) {
    %c0_i32 = arith.constant 0 : i32
    %c0_i32_0 = arith.constant 0 : i32
    %c0_i32_1 = arith.constant 0 : i32
    return %c0_i32, %c0_i32_0 : i32, i32
  }
  func.func @transform_10(%arg0: i32) -> (i32, i32) {
    %c0_i32 = arith.constant 0 : i32
    %c0_i32_0 = arith.constant 0 : i32
    return %arg0, %c0_i32 : i32, i32
  }
  func.func @transform_11(%arg0: i32) -> (i32, i32) {
    %c0_i32 = arith.constant 0 : i32
    %c0_i32_0 = arith.constant 0 : i32
    return %arg0, %c0_i32 : i32, i32
  }
  func.func @transform_12(%arg0: i32) -> (i32, i32) {
    %c0_i32 = arith.constant 0 : i32
    %c0_i32_0 = arith.constant 0 : i32
    return %arg0, %c0_i32 : i32, i32
  }
}

</mosaic_0001>

<llo_original>
// kernel: vae_forward.1
$region0: #{vae_forward.1}
  #allocation0 [shape = 'u32[]', space=smem, size = 0x4, offset = 0x4, fixed_abs, tag = 'smem constant byte address 0x4 - core index']
  #allocation1 [shape = 'u32[144,128]{1,0:T(1,128)}', space=vmem, size = 0x12000, scoped, tag = 'internal scratch']
  %s0 = inlined_call_operand.vmem [shape: bf16[16,784], index: 0, kind: input, shape index: {}]
  %s1 = inlined_call_operand.vmem [shape: bf16[16,128], index: 1, kind: input, shape index: {}]
  %s2 = inlined_call_operand.vmem [shape: bf16[784,512], index: 2, kind: input, shape index: {}]
  %s3 = inlined_call_operand.vmem [shape: f32[1,512], index: 3, kind: input, shape index: {}]
  %s4 = inlined_call_operand.vmem [shape: bf16[512,256], index: 4, kind: input, shape index: {}]
  %s5 = inlined_call_operand.vmem [shape: f32[1,256], index: 5, kind: input, shape index: {}]
  %s6 = inlined_call_operand.vmem [shape: bf16[128,512], index: 6, kind: input, shape index: {}]
  %s7 = inlined_call_operand.vmem [shape: f32[1,512], index: 7, kind: input, shape index: {}]
  %s8 = inlined_call_operand.vmem [shape: bf16[512,784], index: 8, kind: input, shape index: {}]
  %s9 = inlined_call_operand.vmem [shape: f32[1,784], index: 9, kind: input, shape index: {}]
  %s10 = inlined_call_operand.vmem [shape: f32[16,784], index: 10, kind: output, shape index: {0}]
  %s11 = inlined_call_operand.vmem [shape: f32[16,128], index: 11, kind: output, shape index: {1}]
  %s12 = inlined_call_operand.vmem [shape: f32[16,128], index: 12, kind: output, shape index: {2}]
  %13 = xla_tuple %s10, %s11, %s12
  %s14 = sld [smem:[#allocation0]]
  $region66: #{vae_forward.1} parent=0
    _
  %s16 = ssub.s32 1, %s14
  %s17 = scalar_select 0, %s16, %s14
  // Predicated region
  $region2: #{vae_forward.1} parent=0 // pred_check
    _
  $region3: #{vae_forward.1} parent=0 // pred_check_branch
    %19 = sbr.rel (0) target = $region5
  $region4: #{vae_forward.1} parent=0 // pred_region
    _
  $region5: #{vae_forward.1} parent=0 // pred_fallthru
    _
  // Predicated region
  $region6: #{vae_forward.1} parent=0 // pred_check
    _
  $region7: #{vae_forward.1} parent=0 // pred_check_branch
    %21 = sbr.rel (0) target = $region9
  $region8: #{vae_forward.1} parent=0 // pred_region
    _
  $region9: #{vae_forward.1} parent=0 // pred_fallthru
    _
  // Predicated region
  $region10: #{vae_forward.1} parent=0 // pred_check
    _
  $region11: #{vae_forward.1} parent=0 // pred_check_branch
    %23 = sbr.rel (0) target = $region13
  $region12: #{vae_forward.1} parent=0 // pred_region
    _
  $region13: #{vae_forward.1} parent=0 // pred_fallthru
    _
  // Predicated region
  $region14: #{vae_forward.1} parent=0 // pred_check
    _
  $region15: #{vae_forward.1} parent=0 // pred_check_branch
    %25 = sbr.rel (0) target = $region17
  $region16: #{vae_forward.1} parent=0 // pred_region
    _
  $region17: #{vae_forward.1} parent=0 // pred_fallthru
    _
  // Predicated region
  $region18: #{vae_forward.1} parent=0 // pred_check
    _
  $region19: #{vae_forward.1} parent=0 // pred_check_branch
    %27 = sbr.rel (0) target = $region21
  $region20: #{vae_forward.1} parent=0 // pred_region
    _
  $region21: #{vae_forward.1} parent=0 // pred_fallthru
    _
  // Predicated region
  $region22: #{vae_forward.1} parent=0 // pred_check
    _
  $region23: #{vae_forward.1} parent=0 // pred_check_branch
    %29 = sbr.rel (0) target = $region25
  $region24: #{vae_forward.1} parent=0 // pred_region
    _
  $region25: #{vae_forward.1} parent=0 // pred_fallthru
    _
  // Predicated region
  $region26: #{vae_forward.1} parent=0 // pred_check
    _
  $region27: #{vae_forward.1} parent=0 // pred_check_branch
    %31 = sbr.rel (0) target = $region29
  $region28: #{vae_forward.1} parent=0 // pred_region
    _
  $region29: #{vae_forward.1} parent=0 // pred_fallthru
    _
  // Predicated region
  $region30: #{vae_forward.1} parent=0 // pred_check
    _
  $region31: #{vae_forward.1} parent=0 // pred_check_branch
    %33 = sbr.rel (0) target = $region33
  $region32: #{vae_forward.1} parent=0 // pred_region
    _
  $region33: #{vae_forward.1} parent=0 // pred_fallthru
    _
  // Predicated region
  $region34: #{vae_forward.1} parent=0 // pred_check
    _
  $region35: #{vae_forward.1} parent=0 // pred_check_branch
    %35 = sbr.rel (0) target = $region37
  $region36: #{vae_forward.1} parent=0 // pred_region
    _
  $region37: #{vae_forward.1} parent=0 // pred_fallthru
    _
  // Predicated region
  $region38: #{vae_forward.1} parent=0 // pred_check
    _
  $region39: #{vae_forward.1} parent=0 // pred_check_branch
    %37 = sbr.rel (0) target = $region41
  $region40: #{vae_forward.1} parent=0 // pred_region
    _
  $region41: #{vae_forward.1} parent=0 // pred_fallthru
    _
  %v39 = vld [vmem:[%s0] sm:$0xff]
  %v40 = vld [vmem:[%s0 + $0x8] sm:$0xff]
  %v41 = vld [vmem:[%s0 + $0x10] sm:$0xff]
  %v42 = vld [vmem:[%s0 + $0x18] sm:$0xf]
  %v43 = vld [vmem:[%s0 + $0x1c] sm:$0xff]
  %v44 = vld [vmem:[%s0 + $0x24] sm:$0xff]
  %v45 = vld [vmem:[%s0 + $0x2c] sm:$0xff]
  %v46 = vld [vmem:[%s0 + $0x34] sm:$0xf]
  %v47 = vld [vmem:[%s1] sm:$0xf]
  %v48 = vld [vmem:[%s1 + $0x4] sm:$0xf]
  %v49 = vunpack.c.l.bf16 %v47
  %v50 = vunpack.c.l.bf16 %v48
  %v51 = vld [vmem:[%s2] sm:$0xff]
  %v52 = vld [vmem:[%s2 + $0x8] sm:$0xff]
  %v53 = vld [vmem:[%s2 + $0x10] sm:$0xff]
  %v54 = vld [vmem:[%s2 + $0x18] sm:$0xff]
  %v55 = vld [vmem:[%s2 + $0x20] sm:$0xff]
  %v56 = vld [vmem:[%s2 + $0x28] sm:$0xff]
  %v57 = vld [vmem:[%s2 + $0x30] sm:$0xff]
  %v58 = vld [vmem:[%s2 + $0x38] sm:$0xff]
  %v59 = vld [vmem:[%s2 + $0x40] sm:$0xff]
  %v60 = vld [vmem:[%s2 + $0x48] sm:$0xff]
  %v61 = vld [vmem:[%s2 + $0x50] sm:$0xff]
  %v62 = vld [vmem:[%s2 + $0x58] sm:$0xff]
  %v63 = vld [vmem:[%s2 + $0x60] sm:$0xff]
  %v64 = vld [vmem:[%s2 + $0x68] sm:$0xff]
  %v65 = vld [vmem:[%s2 + $0x70] sm:$0xff]
  %v66 = vld [vmem:[%s2 + $0x78] sm:$0xff]
  %v67 = vld [vmem:[%s2 + $0x80] sm:$0xff]
  %v68 = vld [vmem:[%s2 + $0x88] sm:$0xff]
  %v69 = vld [vmem:[%s2 + $0x90] sm:$0xff]
  %v70 = vld [vmem:[%s2 + $0x98] sm:$0xff]
  %v71 = vld [vmem:[%s2 + $0xa0] sm:$0xff]
  %v72 = vld [vmem:[%s2 + $0xa8] sm:$0xff]
  %v73 = vld [vmem:[%s2 + $0xb0] sm:$0xff]
  %v74 = vld [vmem:[%s2 + $0xb8] sm:$0xff]
  %v75 = vld [vmem:[%s2 + $0xc0] sm:$0xff]
  %v76 = vld [vmem:[%s2 + $0xc8] sm:$0xff]
  %v77 = vld [vmem:[%s2 + $0xd0] sm:$0xff]
  %v78 = vld [vmem:[%s2 + $0xd8] sm:$0xff]
  %v79 = vld [vmem:[%s2 + $0xe0] sm:$0xff]
  %v80 = vld [vmem:[%s2 + $0xe8] sm:$0xff]
  %v81 = vld [vmem:[%s2 + $0xf0] sm:$0xff]
  %v82 = vld [vmem:[%s2 + $0xf8] sm:$0xff]
  %v83 = vld [vmem:[%s2 + $0x100] sm:$0xff]
  %v84 = vld [vmem:[%s2 + $0x108] sm:$0xff]
  %v85 = vld [vmem:[%s2 + $0x110] sm:$0xff]
  %v86 = vld [vmem:[%s2 + $0x118] sm:$0xff]
  %v87 = vld [vmem:[%s2 + $0x120] sm:$0xff]
  %v88 = vld [vmem:[%s2 + $0x128] sm:$0xff]
  %v89 = vld [vmem:[%s2 + $0x130] sm:$0xff]
  %v90 = vld [vmem:[%s2 + $0x138] sm:$0xff]
  %v91 = vld [vmem:[%s2 + $0x140] sm:$0xff]
  %v92 = vld [vmem:[%s2 + $0x148] sm:$0xff]
  %v93 = vld [vmem:[%s2 + $0x150] sm:$0xff]
  %v94 = vld [vmem:[%s2 + $0x158] sm:$0xff]
  %v95 = vld [vmem:[%s2 + $0x160] sm:$0xff]
  %v96 = vld [vmem:[%s2 + $0x168] sm:$0xff]
  %v97 = vld [vmem:[%s2 + $0x170] sm:$0xff]
  %v98 = vld [vmem:[%s2 + $0x178] sm:$0xff]
  %v99 = vld [vmem:[%s2 + $0x180] sm:$0xff]
  %v100 = vld [vmem:[%s2 + $0x188] sm:$0xff]
  %v101 = vld [vmem:[%s2 + $0x190] sm:$0xff]
  %v102 = vld [vmem:[%s2 + $0x198] sm:$0xff]
  %v103 = vld [vmem:[%s2 + $0x1a0] sm:$0xff]
  %v104 = vld [vmem:[%s2 + $0x1a8] sm:$0xff]
  %v105 = vld [vmem:[%s2 + $0x1b0] sm:$0xff]
  %v106 = vld [vmem:[%s2 + $0x1b8] sm:$0xff]
  %v107 = vld [vmem:[%s2 + $0x1c0] sm:$0xff]
  %v108 = vld [vmem:[%s2 + $0x1c8] sm:$0xff]
  %v109 = vld [vmem:[%s2 + $0x1d0] sm:$0xff]
  %v110 = vld [vmem:[%s2 + $0x1d8] sm:$0xff]
  %v111 = vld [vmem:[%s2 + $0x1e0] sm:$0xff]
  %v112 = vld [vmem:[%s2 + $0x1e8] sm:$0xff]
  %v113 = vld [vmem:[%s2 + $0x1f0] sm:$0xff]
  %v114 = vld [vmem:[%s2 + $0x1f8] sm:$0xff]
  %v115 = vld [vmem:[%s2 + $0x200] sm:$0xff]
  %v116 = vld [vmem:[%s2 + $0x208] sm:$0xff]
  %v117 = vld [vmem:[%s2 + $0x210] sm:$0xff]
  %v118 = vld [vmem:[%s2 + $0x218] sm:$0xff]
  %v119 = vld [vmem:[%s2 + $0x220] sm:$0xff]
  %v120 = vld [vmem:[%s2 + $0x228] sm:$0xff]
  %v121 = vld [vmem:[%s2 + $0x230] sm:$0xff]
  %v122 = vld [vmem:[%s2 + $0x238] sm:$0xff]
  %v123 = vld [vmem:[%s2 + $0x240] sm:$0xff]
  %v124 = vld [vmem:[%s2 + $0x248] sm:$0xff]
  %v125 = vld [vmem:[%s2 + $0x250] sm:$0xff]
  %v126 = vld [vmem:[%s2 + $0x258] sm:$0xff]
  %v127 = vld [vmem:[%s2 + $0x260] sm:$0xff]
  %v128 = vld [vmem:[%s2 + $0x268] sm:$0xff]
  %v129 = vld [vmem:[%s2 + $0x270] sm:$0xff]
  %v130 = vld [vmem:[%s2 + $0x278] sm:$0xff]
  %v131 = vld [vmem:[%s2 + $0x280] sm:$0xff]
  %v132 = vld [vmem:[%s2 + $0x288] sm:$0xff]
  %v133 = vld [vmem:[%s2 + $0x290] sm:$0xff]
  %v134 = vld [vmem:[%s2 + $0x298] sm:$0xff]
  %v135 = vld [vmem:[%s2 + $0x2a0] sm:$0xff]
  %v136 = vld [vmem:[%s2 + $0x2a8] sm:$0xff]
  %v137 = vld [vmem:[%s2 + $0x2b0] sm:$0xff]
  %v138 = vld [vmem:[%s2 + $0x2b8] sm:$0xff]
  %v139 = vld [vmem:[%s2 + $0x2c0] sm:$0xff]
  %v140 = vld [vmem:[%s2 + $0x2c8] sm:$0xff]
  %v141 = vld [vmem:[%s2 + $0x2d0] sm:$0xff]
  %v142 = vld [vmem:[%s2 + $0x2d8] sm:$0xff]
  %v143 = vld [vmem:[%s2 + $0x2e0] sm:$0xff]
  %v144 = vld [vmem:[%s2 + $0x2e8] sm:$0xff]
  %v145 = vld [vmem:[%s2 + $0x2f0] sm:$0xff]
  %v146 = vld [vmem:[%s2 + $0x2f8] sm:$0xff]
  %v147 = vld [vmem:[%s2 + $0x300] sm:$0xff]
  %v148 = vld [vmem:[%s2 + $0x308] sm:$0xff]
  %v149 = vld [vmem:[%s2 + $0x310] sm:$0xff]
  %v150 = vld [vmem:[%s2 + $0x318] sm:$0xff]
  %v151 = vld [vmem:[%s2 + $0x320] sm:$0xff]
  %v152 = vld [vmem:[%s2 + $0x328] sm:$0xff]
  %v153 = vld [vmem:[%s2 + $0x330] sm:$0xff]
  %v154 = vld [vmem:[%s2 + $0x338] sm:$0xff]
  %v155 = vld [vmem:[%s2 + $0x340] sm:$0xff]
  %v156 = vld [vmem:[%s2 + $0x348] sm:$0xff]
  %v157 = vld [vmem:[%s2 + $0x350] sm:$0xff]
  %v158 = vld [vmem:[%s2 + $0x358] sm:$0xff]
  %v159 = vld [vmem:[%s2 + $0x360] sm:$0xff]
  %v160 = vld [vmem:[%s2 + $0x368] sm:$0xff]
  %v161 = vld [vmem:[%s2 + $0x370] sm:$0xff]
  %v162 = vld [vmem:[%s2 + $0x378] sm:$0xff]
  %v163 = vld [vmem:[%s2 + $0x380] sm:$0xff]
  %v164 = vld [vmem:[%s2 + $0x388] sm:$0xff]
  %v165 = vld [vmem:[%s2 + $0x390] sm:$0xff]
  %v166 = vld [vmem:[%s2 + $0x398] sm:$0xff]
  %v167 = vld [vmem:[%s2 + $0x3a0] sm:$0xff]
  %v168 = vld [vmem:[%s2 + $0x3a8] sm:$0xff]
  %v169 = vld [vmem:[%s2 + $0x3b0] sm:$0xff]
  %v170 = vld [vmem:[%s2 + $0x3b8] sm:$0xff]
  %v171 = vld [vmem:[%s2 + $0x3c0] sm:$0xff]
  %v172 = vld [vmem:[%s2 + $0x3c8] sm:$0xff]
  %v173 = vld [vmem:[%s2 + $0x3d0] sm:$0xff]
  %v174 = vld [vmem:[%s2 + $0x3d8] sm:$0xff]
  %v175 = vld [vmem:[%s2 + $0x3e0] sm:$0xff]
  %v176 = vld [vmem:[%s2 + $0x3e8] sm:$0xff]
  %v177 = vld [vmem:[%s2 + $0x3f0] sm:$0xff]
  %v178 = vld [vmem:[%s2 + $0x3f8] sm:$0xff]
  %v179 = vld [vmem:[%s2 + $0x400] sm:$0xff]
  %v180 = vld [vmem:[%s2 + $0x408] sm:$0xff]
  %v181 = vld [vmem:[%s2 + $0x410] sm:$0xff]
  %v182 = vld [vmem:[%s2 + $0x418] sm:$0xff]
  %v183 = vld [vmem:[%s2 + $0x420] sm:$0xff]
  %v184 = vld [vmem:[%s2 + $0x428] sm:$0xff]
  %v185 = vld [vmem:[%s2 + $0x430] sm:$0xff]
  %v186 = vld [vmem:[%s2 + $0x438] sm:$0xff]
  %v187 = vld [vmem:[%s2 + $0x440] sm:$0xff]
  %v188 = vld [vmem:[%s2 + $0x448] sm:$0xff]
  %v189 = vld [vmem:[%s2 + $0x450] sm:$0xff]
  %v190 = vld [vmem:[%s2 + $0x458] sm:$0xff]
  %v191 = vld [vmem:[%s2 + $0x460] sm:$0xff]
  %v192 = vld [vmem:[%s2 + $0x468] sm:$0xff]
  %v193 = vld [vmem:[%s2 + $0x470] sm:$0xff]
  %v194 = vld [vmem:[%s2 + $0x478] sm:$0xff]
  %v195 = vld [vmem:[%s2 + $0x480] sm:$0xff]
  %v196 = vld [vmem:[%s2 + $0x488] sm:$0xff]
  %v197 = vld [vmem:[%s2 + $0x490] sm:$0xff]
  %v198 = vld [vmem:[%s2 + $0x498] sm:$0xff]
  %v199 = vld [vmem:[%s2 + $0x4a0] sm:$0xff]
  %v200 = vld [vmem:[%s2 + $0x4a8] sm:$0xff]
  %v201 = vld [vmem:[%s2 + $0x4b0] sm:$0xff]
  %v202 = vld [vmem:[%s2 + $0x4b8] sm:$0xff]
  %v203 = vld [vmem:[%s2 + $0x4c0] sm:$0xff]
  %v204 = vld [vmem:[%s2 + $0x4c8] sm:$0xff]
  %v205 = vld [vmem:[%s2 + $0x4d0] sm:$0xff]
  %v206 = vld [vmem:[%s2 + $0x4d8] sm:$0xff]
  %v207 = vld [vmem:[%s2 + $0x4e0] sm:$0xff]
  %v208 = vld [vmem:[%s2 + $0x4e8] sm:$0xff]
  %v209 = vld [vmem:[%s2 + $0x4f0] sm:$0xff]
  %v210 = vld [vmem:[%s2 + $0x4f8] sm:$0xff]
  %v211 = vld [vmem:[%s2 + $0x500] sm:$0xff]
  %v212 = vld [vmem:[%s2 + $0x508] sm:$0xff]
  %v213 = vld [vmem:[%s2 + $0x510] sm:$0xff]
  %v214 = vld [vmem:[%s2 + $0x518] sm:$0xff]
  %v215 = vld [vmem:[%s2 + $0x520] sm:$0xff]
  %v216 = vld [vmem:[%s2 + $0x528] sm:$0xff]
  %v217 = vld [vmem:[%s2 + $0x530] sm:$0xff]
  %v218 = vld [vmem:[%s2 + $0x538] sm:$0xff]
  %v219 = vld [vmem:[%s2 + $0x540] sm:$0xff]
  %v220 = vld [vmem:[%s2 + $0x548] sm:$0xff]
  %v221 = vld [vmem:[%s2 + $0x550] sm:$0xff]
  %v222 = vld [vmem:[%s2 + $0x558] sm:$0xff]
  %v223 = vld [vmem:[%s2 + $0x560] sm:$0xff]
  %v224 = vld [vmem:[%s2 + $0x568] sm:$0xff]
  %v225 = vld [vmem:[%s2 + $0x570] sm:$0xff]
  %v226 = vld [vmem:[%s2 + $0x578] sm:$0xff]
  %v227 = vld [vmem:[%s2 + $0x580] sm:$0xff]
  %v228 = vld [vmem:[%s2 + $0x588] sm:$0xff]
  %v229 = vld [vmem:[%s2 + $0x590] sm:$0xff]
  %v230 = vld [vmem:[%s2 + $0x598] sm:$0xff]
  %v231 = vld [vmem:[%s2 + $0x5a0] sm:$0xff]
  %v232 = vld [vmem:[%s2 + $0x5a8] sm:$0xff]
  %v233 = vld [vmem:[%s2 + $0x5b0] sm:$0xff]
  %v234 = vld [vmem:[%s2 + $0x5b8] sm:$0xff]
  %v235 = vld [vmem:[%s2 + $0x5c0] sm:$0xff]
  %v236 = vld [vmem:[%s2 + $0x5c8] sm:$0xff]
  %v237 = vld [vmem:[%s2 + $0x5d0] sm:$0xff]
  %v238 = vld [vmem:[%s2 + $0x5d8] sm:$0xff]
  %v239 = vld [vmem:[%s2 + $0x5e0] sm:$0xff]
  %v240 = vld [vmem:[%s2 + $0x5e8] sm:$0xff]
  %v241 = vld [vmem:[%s2 + $0x5f0] sm:$0xff]
  %v242 = vld [vmem:[%s2 + $0x5f8] sm:$0xff]
  %v243 = vld [vmem:[%s2 + $0x600] sm:$0xff]
  %v244 = vld [vmem:[%s2 + $0x608] sm:$0xff]
  %v245 = vld [vmem:[%s2 + $0x610] sm:$0xff]
  %v246 = vld [vmem:[%s2 + $0x618] sm:$0xff]
  %v247 = vld [vmem:[%s3] sm:$0xf]
  %v249 = vlaneseq
  %v250 = vshrl.u32 %v249, 7
  %v251 = vsub.s32 0, %v250
  %v252 = vrot.slane %v247, %v251
  %v253 = vlaneseq
  %v254 = vshrl.u32 %v253, 7
  %v255 = vsub.s32 1, %v254
  %v256 = vrot.slane %v247, %v255
  %v257 = vlaneseq
  %v258 = vshrl.u32 %v257, 7
  %v259 = vsub.s32 2, %v258
  %v260 = vrot.slane %v247, %v259
  %v261 = vlaneseq
  %v262 = vshrl.u32 %v261, 7
  %v263 = vsub.s32 3, %v262
  %v264 = vrot.slane %v247, %v263
  %v277 = vunpack.c.l.b16 %v39
  %v278 = vunpack.c.h.b16 %v39
  %v279 = vunpack.c.l.b16 %v40
  %v280 = vunpack.c.h.b16 %v40
  %v281 = vunpack.c.l.b16 %v41
  %v282 = vunpack.c.h.b16 %v41
  %v283 = vunpack.c.l.b16 %v42
  %v284 = vunpack.c.l.b16 %v43
  %v285 = vunpack.c.h.b16 %v43
  %v286 = vunpack.c.l.b16 %v44
  %v287 = vunpack.c.h.b16 %v44
  %v288 = vunpack.c.l.b16 %v45
  %v289 = vunpack.c.h.b16 %v45
  %v290 = vunpack.c.l.b16 %v46
  %v291 = vpack.c.b16 %v284, %v277
  %v292 = vpack.c.b16 %v285, %v278
  %v293 = vpack.c.b16 %v286, %v279
  %v294 = vpack.c.b16 %v287, %v280
  %v295 = vpack.c.b16 %v288, %v281
  %v296 = vpack.c.b16 %v289, %v282
  %v297 = vpack.c.b16 %v290, %v283
  %v500 = vunpack.c.l.b16 %v51
  %v501 = vunpack.c.h.b16 %v51
  %v502 = vunpack.c.l.b16 %v52
  %v503 = vunpack.c.h.b16 %v52
  %v504 = vunpack.c.l.b16 %v53
  %v505 = vunpack.c.h.b16 %v53
  %v506 = vunpack.c.l.b16 %v54
  %v507 = vunpack.c.h.b16 %v54
  %v508 = vunpack.c.l.b16 %v55
  %v509 = vunpack.c.h.b16 %v55
  %v510 = vunpack.c.l.b16 %v56
  %v511 = vunpack.c.h.b16 %v56
  %v512 = vunpack.c.l.b16 %v57
  %v513 = vunpack.c.h.b16 %v57
  %v514 = vunpack.c.l.b16 %v58
  %v515 = vunpack.c.h.b16 %v58
  %v516 = vunpack.c.l.b16 %v59
  %v517 = vunpack.c.h.b16 %v59
  %v518 = vunpack.c.l.b16 %v60
  %v519 = vunpack.c.h.b16 %v60
  %v520 = vunpack.c.l.b16 %v61
  %v521 = vunpack.c.h.b16 %v61
  %v522 = vunpack.c.l.b16 %v62
  %v523 = vunpack.c.h.b16 %v62
  %v524 = vunpack.c.l.b16 %v63
  %v525 = vunpack.c.h.b16 %v63
  %v526 = vunpack.c.l.b16 %v64
  %v527 = vunpack.c.h.b16 %v64
  %v528 = vunpack.c.l.b16 %v65
  %v529 = vunpack.c.h.b16 %v65
  %v530 = vunpack.c.l.b16 %v66
  %v531 = vunpack.c.h.b16 %v66
  %v532 = vunpack.c.l.b16 %v67
  %v533 = vunpack.c.h.b16 %v67
  %v534 = vunpack.c.l.b16 %v68
  %v535 = vunpack.c.h.b16 %v68
  %v536 = vunpack.c.l.b16 %v69
  %v537 = vunpack.c.h.b16 %v69
  %v538 = vunpack.c.l.b16 %v70
  %v539 = vunpack.c.h.b16 %v70
  %v540 = vunpack.c.l.b16 %v71
  %v541 = vunpack.c.h.b16 %v71
  %v542 = vunpack.c.l.b16 %v72
  %v543 = vunpack.c.h.b16 %v72
  %v544 = vunpack.c.l.b16 %v73
  %v545 = vunpack.c.h.b16 %v73
  %v546 = vunpack.c.l.b16 %v74
  %v547 = vunpack.c.h.b16 %v74
  %v548 = vunpack.c.l.b16 %v75
  %v549 = vunpack.c.h.b16 %v75
  %v550 = vunpack.c.l.b16 %v76
  %v551 = vunpack.c.h.b16 %v76
  %v552 = vunpack.c.l.b16 %v77
  %v553 = vunpack.c.h.b16 %v77
  %v554 = vunpack.c.l.b16 %v78
  %v555 = vunpack.c.h.b16 %v78
  %v556 = vunpack.c.l.b16 %v79
  %v557 = vunpack.c.h.b16 %v79
  %v558 = vunpack.c.l.b16 %v80
  %v559 = vunpack.c.h.b16 %v80
  %v560 = vunpack.c.l.b16 %v81
  %v561 = vunpack.c.h.b16 %v81
  %v562 = vunpack.c.l.b16 %v82
  %v563 = vunpack.c.h.b16 %v82
  %v564 = vunpack.c.l.b16 %v83
  %v565 = vunpack.c.h.b16 %v83
  %v566 = vunpack.c.l.b16 %v84
  %v567 = vunpack.c.h.b16 %v84
  %v568 = vunpack.c.l.b16 %v85
  %v569 = vunpack.c.h.b16 %v85
  %v570 = vunpack.c.l.b16 %v86
  %v571 = vunpack.c.h.b16 %v86
  %v572 = vunpack.c.l.b16 %v87
  %v573 = vunpack.c.h.b16 %v87
  %v574 = vunpack.c.l.b16 %v88
  %v575 = vunpack.c.h.b16 %v88
  %v576 = vunpack.c.l.b16 %v89
  %v577 = vunpack.c.h.b16 %v89
  %v578 = vunpack.c.l.b16 %v90
  %v579 = vunpack.c.h.b16 %v90
  %v580 = vunpack.c.l.b16 %v91
  %v581 = vunpack.c.h.b16 %v91
  %v582 = vunpack.c.l.b16 %v92
  %v583 = vunpack.c.h.b16 %v92
  %v584 = vunpack.c.l.b16 %v93
  %v585 = vunpack.c.h.b16 %v93
  %v586 = vunpack.c.l.b16 %v94
  %v587 = vunpack.c.h.b16 %v94
  %v588 = vunpack.c.l.b16 %v95
  %v589 = vunpack.c.h.b16 %v95
  %v590 = vunpack.c.l.b16 %v96
  %v591 = vunpack.c.h.b16 %v96
  %v592 = vunpack.c.l.b16 %v97
  %v593 = vunpack.c.h.b16 %v97
  %v594 = vunpack.c.l.b16 %v98
  %v595 = vunpack.c.h.b16 %v98
  %v596 = vunpack.c.l.b16 %v99
  %v597 = vunpack.c.h.b16 %v99
  %v598 = vunpack.c.l.b16 %v100
  %v599 = vunpack.c.h.b16 %v100
  %v600 = vunpack.c.l.b16 %v101
  %v601 = vunpack.c.h.b16 %v101
  %v602 = vunpack.c.l.b16 %v102
  %v603 = vunpack.c.h.b16 %v102
  %v604 = vunpack.c.l.b16 %v103
  %v605 = vunpack.c.h.b16 %v103
  %v606 = vunpack.c.l.b16 %v104
  %v607 = vunpack.c.h.b16 %v104
  %v608 = vunpack.c.l.b16 %v105
  %v609 = vunpack.c.h.b16 %v105
  %v610 = vunpack.c.l.b16 %v106
  %v611 = vunpack.c.h.b16 %v106
  %v612 = vunpack.c.l.b16 %v107
  %v613 = vunpack.c.h.b16 %v107
  %v614 = vunpack.c.l.b16 %v108
  %v615 = vunpack.c.h.b16 %v108
  %v616 = vunpack.c.l.b16 %v109
  %v617 = vunpack.c.h.b16 %v109
  %v618 = vunpack.c.l.b16 %v110
  %v619 = vunpack.c.h.b16 %v110
  %v620 = vunpack.c.l.b16 %v111
  %v621 = vunpack.c.h.b16 %v111
  %v622 = vunpack.c.l.b16 %v112
  %v623 = vunpack.c.h.b16 %v112
  %v624 = vunpack.c.l.b16 %v113
  %v625 = vunpack.c.h.b16 %v113
  %v626 = vunpack.c.l.b16 %v114
  %v627 = vunpack.c.h.b16 %v114
  %v628 = vunpack.c.l.b16 %v115
  %v629 = vunpack.c.h.b16 %v115
  %v630 = vunpack.c.l.b16 %v116
  %v631 = vunpack.c.h.b16 %v116
  %v632 = vunpack.c.l.b16 %v117
  %v633 = vunpack.c.h.b16 %v117
  %v634 = vunpack.c.l.b16 %v118
  %v635 = vunpack.c.h.b16 %v118
  %v636 = vunpack.c.l.b16 %v119
  %v637 = vunpack.c.h.b16 %v119
  %v638 = vunpack.c.l.b16 %v120
  %v639 = vunpack.c.h.b16 %v120
  %v640 = vunpack.c.l.b16 %v121
  %v641 = vunpack.c.h.b16 %v121
  %v642 = vunpack.c.l.b16 %v122
  %v643 = vunpack.c.h.b16 %v122
  %v644 = vunpack.c.l.b16 %v123
  %v645 = vunpack.c.h.b16 %v123
  %v646 = vunpack.c.l.b16 %v124
  %v647 = vunpack.c.h.b16 %v124
  %v648 = vunpack.c.l.b16 %v125
  %v649 = vunpack.c.h.b16 %v125
  %v650 = vunpack.c.l.b16 %v126
  %v651 = vunpack.c.h.b16 %v126
  %v652 = vunpack.c.l.b16 %v127
  %v653 = vunpack.c.h.b16 %v127
  %v654 = vunpack.c.l.b16 %v128
  %v655 = vunpack.c.h.b16 %v128
  %v656 = vunpack.c.l.b16 %v129
  %v657 = vunpack.c.h.b16 %v129
  %v658 = vunpack.c.l.b16 %v130
  %v659 = vunpack.c.h.b16 %v130
  %v660 = vunpack.c.l.b16 %v131
  %v661 = vunpack.c.h.b16 %v131
  %v662 = vunpack.c.l.b16 %v132
  %v663 = vunpack.c.h.b16 %v132
  %v664 = vunpack.c.l.b16 %v133
  %v665 = vunpack.c.h.b16 %v133
  %v666 = vunpack.c.l.b16 %v134
  %v667 = vunpack.c.h.b16 %v134
  %v668 = vunpack.c.l.b16 %v135
  %v669 = vunpack.c.h.b16 %v135
  %v670 = vunpack.c.l.b16 %v136
  %v671 = vunpack.c.h.b16 %v136
  %v672 = vunpack.c.l.b16 %v137
  %v673 = vunpack.c.h.b16 %v137
  %v674 = vunpack.c.l.b16 %v138
  %v675 = vunpack.c.h.b16 %v138
  %v676 = vunpack.c.l.b16 %v139
  %v677 = vunpack.c.h.b16 %v139
  %v678 = vunpack.c.l.b16 %v140
  %v679 = vunpack.c.h.b16 %v140
  %v680 = vunpack.c.l.b16 %v141
  %v681 = vunpack.c.h.b16 %v141
  %v682 = vunpack.c.l.b16 %v142
  %v683 = vunpack.c.h.b16 %v142
  %v684 = vunpack.c.l.b16 %v143
  %v685 = vunpack.c.h.b16 %v143
  %v686 = vunpack.c.l.b16 %v144
  %v687 = vunpack.c.h.b16 %v144
  %v688 = vunpack.c.l.b16 %v145
  %v689 = vunpack.c.h.b16 %v145
  %v690 = vunpack.c.l.b16 %v146
  %v691 = vunpack.c.h.b16 %v146
  %v692 = vunpack.c.l.b16 %v147
  %v693 = vunpack.c.h.b16 %v147
  %v694 = vunpack.c.l.b16 %v148
  %v695 = vunpack.c.h.b16 %v148
  %v696 = vunpack.c.l.b16 %v149
  %v697 = vunpack.c.h.b16 %v149
  %v698 = vunpack.c.l.b16 %v150
  %v699 = vunpack.c.h.b16 %v150
  %v700 = vunpack.c.l.b16 %v151
  %v701 = vunpack.c.h.b16 %v151
  %v702 = vunpack.c.l.b16 %v152
  %v703 = vunpack.c.h.b16 %v152
  %v704 = vunpack.c.l.b16 %v153
  %v705 = vunpack.c.h.b16 %v153
  %v706 = vunpack.c.l.b16 %v154
  %v707 = vunpack.c.h.b16 %v154
  %v708 = vunpack.c.l.b16 %v155
  %v709 = vunpack.c.h.b16 %v155
  %v710 = vunpack.c.l.b16 %v156
  %v711 = vunpack.c.h.b16 %v156
  %v712 = vunpack.c.l.b16 %v157
  %v713 = vunpack.c.h.b16 %v157
  %v714 = vunpack.c.l.b16 %v158
  %v715 = vunpack.c.h.b16 %v158
  %v716 = vunpack.c.l.b16 %v159
  %v717 = vunpack.c.h.b16 %v159
  %v718 = vunpack.c.l.b16 %v160
  %v719 = vunpack.c.h.b16 %v160
  %v720 = vunpack.c.l.b16 %v161
  %v721 = vunpack.c.h.b16 %v161
  %v722 = vunpack.c.l.b16 %v162
  %v723 = vunpack.c.h.b16 %v162
  %v724 = vunpack.c.l.b16 %v163
  %v725 = vunpack.c.h.b16 %v163
  %v726 = vunpack.c.l.b16 %v164
  %v727 = vunpack.c.h.b16 %v164
  %v728 = vunpack.c.l.b16 %v165
  %v729 = vunpack.c.h.b16 %v165
  %v730 = vunpack.c.l.b16 %v166
  %v731 = vunpack.c.h.b16 %v166
  %v732 = vunpack.c.l.b16 %v167
  %v733 = vunpack.c.h.b16 %v167
  %v734 = vunpack.c.l.b16 %v168
  %v735 = vunpack.c.h.b16 %v168
  %v736 = vunpack.c.l.b16 %v169
  %v737 = vunpack.c.h.b16 %v169
  %v738 = vunpack.c.l.b16 %v170
  %v739 = vunpack.c.h.b16 %v170
  %v740 = vunpack.c.l.b16 %v171
  %v741 = vunpack.c.h.b16 %v171
  %v742 = vunpack.c.l.b16 %v172
  %v743 = vunpack.c.h.b16 %v172
  %v744 = vunpack.c.l.b16 %v173
  %v745 = vunpack.c.h.b16 %v173
  %v746 = vunpack.c.l.b16 %v174
  %v747 = vunpack.c.h.b16 %v174
  %v748 = vunpack.c.l.b16 %v175
  %v749 = vunpack.c.h.b16 %v175
  %v750 = vunpack.c.l.b16 %v176
  %v751 = vunpack.c.h.b16 %v176
  %v752 = vunpack.c.l.b16 %v177
  %v753 = vunpack.c.h.b16 %v177
  %v754 = vunpack.c.l.b16 %v178
  %v755 = vunpack.c.h.b16 %v178
  %v756 = vunpack.c.l.b16 %v179
  %v757 = vunpack.c.h.b16 %v179
  %v758 = vunpack.c.l.b16 %v180
  %v759 = vunpack.c.h.b16 %v180
  %v760 = vunpack.c.l.b16 %v181
  %v761 = vunpack.c.h.b16 %v181
  %v762 = vunpack.c.l.b16 %v182
  %v763 = vunpack.c.h.b16 %v182
  %v764 = vunpack.c.l.b16 %v183
  %v765 = vunpack.c.h.b16 %v183
  %v766 = vunpack.c.l.b16 %v184
  %v767 = vunpack.c.h.b16 %v184
  %v768 = vunpack.c.l.b16 %v185
  %v769 = vunpack.c.h.b16 %v185
  %v770 = vunpack.c.l.b16 %v186
  %v771 = vunpack.c.h.b16 %v186
  %v772 = vunpack.c.l.b16 %v187
  %v773 = vunpack.c.h.b16 %v187
  %v774 = vunpack.c.l.b16 %v188
  %v775 = vunpack.c.h.b16 %v188
  %v776 = vunpack.c.l.b16 %v189
  %v777 = vunpack.c.h.b16 %v189
  %v778 = vunpack.c.l.b16 %v190
  %v779 = vunpack.c.h.b16 %v190
  %v780 = vunpack.c.l.b16 %v191
  %v781 = vunpack.c.h.b16 %v191
  %v782 = vunpack.c.l.b16 %v192
  %v783 = vunpack.c.h.b16 %v192
  %v784 = vunpack.c.l.b16 %v193
  %v785 = vunpack.c.h.b16 %v193
  %v786 = vunpack.c.l.b16 %v194
  %v787 = vunpack.c.h.b16 %v194
  %v788 = vunpack.c.l.b16 %v195
  %v789 = vunpack.c.h.b16 %v195
  %v790 = vunpack.c.l.b16 %v196
  %v791 = vunpack.c.h.b16 %v196
  %v792 = vunpack.c.l.b16 %v197
  %v793 = vunpack.c.h.b16 %v197
  %v794 = vunpack.c.l.b16 %v198
  %v795 = vunpack.c.h.b16 %v198
  %v796 = vunpack.c.l.b16 %v199
  %v797 = vunpack.c.h.b16 %v199
  %v798 = vunpack.c.l.b16 %v200
  %v799 = vunpack.c.h.b16 %v200
  %v800 = vunpack.c.l.b16 %v201
  %v801 = vunpack.c.h.b16 %v201
  %v802 = vunpack.c.l.b16 %v202
  %v803 = vunpack.c.h.b16 %v202
  %v804 = vunpack.c.l.b16 %v203
  %v805 = vunpack.c.h.b16 %v203
  %v806 = vunpack.c.l.b16 %v204
  %v807 = vunpack.c.h.b16 %v204
  %v808 = vunpack.c.l.b16 %v205
  %v809 = vunpack.c.h.b16 %v205
  %v810 = vunpack.c.l.b16 %v206
  %v811 = vunpack.c.h.b16 %v206
  %v812 = vunpack.c.l.b16 %v207
  %v813 = vunpack.c.h.b16 %v207
  %v814 = vunpack.c.l.b16 %v208
  %v815 = vunpack.c.h.b16 %v208
  %v816 = vunpack.c.l.b16 %v209
  %v817 = vunpack.c.h.b16 %v209
  %v818 = vunpack.c.l.b16 %v210
  %v819 = vunpack.c.h.b16 %v210
  %v820 = vunpack.c.l.b16 %v211
  %v821 = vunpack.c.h.b16 %v211
  %v822 = vunpack.c.l.b16 %v212
  %v823 = vunpack.c.h.b16 %v212
  %v824 = vunpack.c.l.b16 %v213
  %v825 = vunpack.c.h.b16 %v213
  %v826 = vunpack.c.l.b16 %v214
  %v827 = vunpack.c.h.b16 %v214
  %v828 = vunpack.c.l.b16 %v215
  %v829 = vunpack.c.h.b16 %v215
  %v830 = vunpack.c.l.b16 %v216
  %v831 = vunpack.c.h.b16 %v216
  %v832 = vunpack.c.l.b16 %v217
  %v833 = vunpack.c.h.b16 %v217
  %v834 = vunpack.c.l.b16 %v218
  %v835 = vunpack.c.h.b16 %v218
  %v836 = vunpack.c.l.b16 %v219
  %v837 = vunpack.c.h.b16 %v219
  %v838 = vunpack.c.l.b16 %v220
  %v839 = vunpack.c.h.b16 %v220
  %v840 = vunpack.c.l.b16 %v221
  %v841 = vunpack.c.h.b16 %v221
  %v842 = vunpack.c.l.b16 %v222
  %v843 = vunpack.c.h.b16 %v222
  %v844 = vunpack.c.l.b16 %v223
  %v845 = vunpack.c.h.b16 %v223
  %v846 = vunpack.c.l.b16 %v224
  %v847 = vunpack.c.h.b16 %v224
  %v848 = vunpack.c.l.b16 %v225
  %v849 = vunpack.c.h.b16 %v225
  %v850 = vunpack.c.l.b16 %v226
  %v851 = vunpack.c.h.b16 %v226
  %v852 = vunpack.c.l.b16 %v227
  %v853 = vunpack.c.h.b16 %v227
  %v854 = vunpack.c.l.b16 %v228
  %v855 = vunpack.c.h.b16 %v228
  %v856 = vunpack.c.l.b16 %v229
  %v857 = vunpack.c.h.b16 %v229
  %v858 = vunpack.c.l.b16 %v230
  %v859 = vunpack.c.h.b16 %v230
  %v860 = vunpack.c.l.b16 %v231
  %v861 = vunpack.c.h.b16 %v231
  %v862 = vunpack.c.l.b16 %v232
  %v863 = vunpack.c.h.b16 %v232
  %v864 = vunpack.c.l.b16 %v233
  %v865 = vunpack.c.h.b16 %v233
  %v866 = vunpack.c.l.b16 %v234
  %v867 = vunpack.c.h.b16 %v234
  %v868 = vunpack.c.l.b16 %v235
  %v869 = vunpack.c.h.b16 %v235
  %v870 = vunpack.c.l.b16 %v236
  %v871 = vunpack.c.h.b16 %v236
  %v872 = vunpack.c.l.b16 %v237
  %v873 = vunpack.c.h.b16 %v237
  %v874 = vunpack.c.l.b16 %v238
  %v875 = vunpack.c.h.b16 %v238
  %v876 = vunpack.c.l.b16 %v239
  %v877 = vunpack.c.h.b16 %v239
  %v878 = vunpack.c.l.b16 %v240
  %v879 = vunpack.c.h.b16 %v240
  %v880 = vunpack.c.l.b16 %v241
  %v881 = vunpack.c.h.b16 %v241
  %v882 = vunpack.c.l.b16 %v242
  %v883 = vunpack.c.h.b16 %v242
  %v884 = vunpack.c.l.b16 %v243
  %v885 = vunpack.c.h.b16 %v243
  %v886 = vunpack.c.l.b16 %v244
  %v887 = vunpack.c.h.b16 %v244
  %v888 = vunpack.c.l.b16 %v245
  %v889 = vunpack.c.h.b16 %v245
  %v890 = vunpack.c.l.b16 %v246
  %v891 = vunpack.c.h.b16 %v246
  %v892 = vpack.c.b16 %v504, %v500
  %v893 = vpack.c.b16 %v505, %v501
  %v894 = vpack.c.b16 %v506, %v502
  %v895 = vpack.c.b16 %v507, %v503
  %v896 = vpack.c.b16 %v512, %v508
  %v897 = vpack.c.b16 %v513, %v509
  %v898 = vpack.c.b16 %v514, %v510
  %v899 = vpack.c.b16 %v515, %v511
  %v900 = vpack.c.b16 %v520, %v516
  %v901 = vpack.c.b16 %v521, %v517
  %v902 = vpack.c.b16 %v522, %v518
  %v903 = vpack.c.b16 %v523, %v519
  %v904 = vpack.c.b16 %v528, %v524
  %v905 = vpack.c.b16 %v529, %v525
  %v906 = vpack.c.b16 %v530, %v526
  %v907 = vpack.c.b16 %v531, %v527
  %v908 = vpack.c.b16 %v536, %v532
  %v909 = vpack.c.b16 %v537, %v533
  %v910 = vpack.c.b16 %v538, %v534
  %v911 = vpack.c.b16 %v539, %v535
  %v912 = vpack.c.b16 %v544, %v540
  %v913 = vpack.c.b16 %v545, %v541
  %v914 = vpack.c.b16 %v546, %v542
  %v915 = vpack.c.b16 %v547, %v543
  %v916 = vpack.c.b16 %v552, %v548
  %v917 = vpack.c.b16 %v553, %v549
  %v918 = vpack.c.b16 %v554, %v550
  %v919 = vpack.c.b16 %v555, %v551
  %v920 = vpack.c.b16 %v560, %v556
  %v921 = vpack.c.b16 %v561, %v557
  %v922 = vpack.c.b16 %v562, %v558
  %v923 = vpack.c.b16 %v563, %v559
  %v924 = vpack.c.b16 %v568, %v564
  %v925 = vpack.c.b16 %v569, %v565
  %v926 = vpack.c.b16 %v570, %v566
  %v927 = vpack.c.b16 %v571, %v567
  %v928 = vpack.c.b16 %v576, %v572
  %v929 = vpack.c.b16 %v577, %v573
  %v930 = vpack.c.b16 %v578, %v574
  %v931 = vpack.c.b16 %v579, %v575
  %v932 = vpack.c.b16 %v584, %v580
  %v933 = vpack.c.b16 %v585, %v581
  %v934 = vpack.c.b16 %v586, %v582
  %v935 = vpack.c.b16 %v587, %v583
  %v936 = vpack.c.b16 %v592, %v588
  %v937 = vpack.c.b16 %v593, %v589
  %v938 = vpack.c.b16 %v594, %v590
  %v939 = vpack.c.b16 %v595, %v591
  %v940 = vpack.c.b16 %v600, %v596
  %v941 = vpack.c.b16 %v601, %v597
  %v942 = vpack.c.b16 %v602, %v598
  %v943 = vpack.c.b16 %v603, %v599
  %v944 = vpack.c.b16 %v608, %v604
  %v945 = vpack.c.b16 %v609, %v605
  %v946 = vpack.c.b16 %v610, %v606
  %v947 = vpack.c.b16 %v611, %v607
  %v948 = vpack.c.b16 %v616, %v612
  %v949 = vpack.c.b16 %v617, %v613
  %v950 = vpack.c.b16 %v618, %v614
  %v951 = vpack.c.b16 %v619, %v615
  %v952 = vpack.c.b16 %v624, %v620
  %v953 = vpack.c.b16 %v625, %v621
  %v954 = vpack.c.b16 %v626, %v622
  %v955 = vpack.c.b16 %v627, %v623
  %v956 = vpack.c.b16 %v632, %v628
  %v957 = vpack.c.b16 %v633, %v629
  %v958 = vpack.c.b16 %v634, %v630
  %v959 = vpack.c.b16 %v635, %v631
  %v960 = vpack.c.b16 %v640, %v636
  %v961 = vpack.c.b16 %v641, %v637
  %v962 = vpack.c.b16 %v642, %v638
  %v963 = vpack.c.b16 %v643, %v639
  %v964 = vpack.c.b16 %v648, %v644
  %v965 = vpack.c.b16 %v649, %v645
  %v966 = vpack.c.b16 %v650, %v646
  %v967 = vpack.c.b16 %v651, %v647
  %v968 = vpack.c.b16 %v656, %v652
  %v969 = vpack.c.b16 %v657, %v653
  %v970 = vpack.c.b16 %v658, %v654
  %v971 = vpack.c.b16 %v659, %v655
  %v972 = vpack.c.b16 %v664, %v660
  %v973 = vpack.c.b16 %v665, %v661
  %v974 = vpack.c.b16 %v666, %v662
  %v975 = vpack.c.b16 %v667, %v663
  %v976 = vpack.c.b16 %v672, %v668
  %v977 = vpack.c.b16 %v673, %v669
  %v978 = vpack.c.b16 %v674, %v670
  %v979 = vpack.c.b16 %v675, %v671
  %v980 = vpack.c.b16 %v680, %v676
  %v981 = vpack.c.b16 %v681, %v677
  %v982 = vpack.c.b16 %v682, %v678
  %v983 = vpack.c.b16 %v683, %v679
  %v984 = vpack.c.b16 %v688, %v684
  %v985 = vpack.c.b16 %v689, %v685
  %v986 = vpack.c.b16 %v690, %v686
  %v987 = vpack.c.b16 %v691, %v687
  %v988 = vpack.c.b16 %v696, %v692
  %v989 = vpack.c.b16 %v697, %v693
  %v990 = vpack.c.b16 %v698, %v694
  %v991 = vpack.c.b16 %v699, %v695
  %v992 = vpack.c.b16 %v704, %v700
  %v993 = vpack.c.b16 %v705, %v701
  %v994 = vpack.c.b16 %v706, %v702
  %v995 = vpack.c.b16 %v707, %v703
  %v996 = vpack.c.b16 %v712, %v708
  %v997 = vpack.c.b16 %v713, %v709
  %v998 = vpack.c.b16 %v714, %v710
  %v999 = vpack.c.b16 %v715, %v711
  %v1000 = vpack.c.b16 %v720, %v716
  %v1001 = vpack.c.b16 %v721, %v717
  %v1002 = vpack.c.b16 %v722, %v718
  %v1003 = vpack.c.b16 %v723, %v719
  %v1004 = vpack.c.b16 %v728, %v724
  %v1005 = vpack.c.b16 %v729, %v725
  %v1006 = vpack.c.b16 %v730, %v726
  %v1007 = vpack.c.b16 %v731, %v727
  %v1008 = vpack.c.b16 %v736, %v732
  %v1009 = vpack.c.b16 %v737, %v733
  %v1010 = vpack.c.b16 %v738, %v734
  %v1011 = vpack.c.b16 %v739, %v735
  %v1012 = vpack.c.b16 %v744, %v740
  %v1013 = vpack.c.b16 %v745, %v741
  %v1014 = vpack.c.b16 %v746, %v742
  %v1015 = vpack.c.b16 %v747, %v743
  %v1016 = vpack.c.b16 %v752, %v748
  %v1017 = vpack.c.b16 %v753, %v749
  %v1018 = vpack.c.b16 %v754, %v750
  %v1019 = vpack.c.b16 %v755, %v751
  %v1020 = vpack.c.b16 %v760, %v756
  %v1021 = vpack.c.b16 %v761, %v757
  %v1022 = vpack.c.b16 %v762, %v758
  %v1023 = vpack.c.b16 %v763, %v759
  %v1024 = vpack.c.b16 %v768, %v764
  %v1025 = vpack.c.b16 %v769, %v765
  %v1026 = vpack.c.b16 %v770, %v766
  %v1027 = vpack.c.b16 %v771, %v767
  %v1028 = vpack.c.b16 %v776, %v772
  %v1029 = vpack.c.b16 %v777, %v773
  %v1030 = vpack.c.b16 %v778, %v774
  %v1031 = vpack.c.b16 %v779, %v775
  %v1032 = vpack.c.b16 %v784, %v780
  %v1033 = vpack.c.b16 %v785, %v781
  %v1034 = vpack.c.b16 %v786, %v782
  %v1035 = vpack.c.b16 %v787, %v783
  %v1036 = vpack.c.b16 %v792, %v788
  %v1037 = vpack.c.b16 %v793, %v789
  %v1038 = vpack.c.b16 %v794, %v790
  %v1039 = vpack.c.b16 %v795, %v791
  %v1040 = vpack.c.b16 %v800, %v796
  %v1041 = vpack.c.b16 %v801, %v797
  %v1042 = vpack.c.b16 %v802, %v798
  %v1043 = vpack.c.b16 %v803, %v799
  %v1044 = vpack.c.b16 %v808, %v804
  %v1045 = vpack.c.b16 %v809, %v805
  %v1046 = vpack.c.b16 %v810, %v806
  %v1047 = vpack.c.b16 %v811, %v807
  %v1048 = vpack.c.b16 %v816, %v812
  %v1049 = vpack.c.b16 %v817, %v813
  %v1050 = vpack.c.b16 %v818, %v814
  %v1051 = vpack.c.b16 %v819, %v815
  %v1052 = vpack.c.b16 %v824, %v820
  %v1053 = vpack.c.b16 %v825, %v821
  %v1054 = vpack.c.b16 %v826, %v822
  %v1055 = vpack.c.b16 %v827, %v823
  %v1056 = vpack.c.b16 %v832, %v828
  %v1057 = vpack.c.b16 %v833, %v829
  %v1058 = vpack.c.b16 %v834, %v830
  %v1059 = vpack.c.b16 %v835, %v831
  %v1060 = vpack.c.b16 %v840, %v836
  %v1061 = vpack.c.b16 %v841, %v837
  %v1062 = vpack.c.b16 %v842, %v838
  %v1063 = vpack.c.b16 %v843, %v839
  %v1064 = vpack.c.b16 %v848, %v844
  %v1065 = vpack.c.b16 %v849, %v845
  %v1066 = vpack.c.b16 %v850, %v846
  %v1067 = vpack.c.b16 %v851, %v847
  %v1068 = vpack.c.b16 %v856, %v852
  %v1069 = vpack.c.b16 %v857, %v853
  %v1070 = vpack.c.b16 %v858, %v854
  %v1071 = vpack.c.b16 %v859, %v855
  %v1072 = vpack.c.b16 %v864, %v860
  %v1073 = vpack.c.b16 %v865, %v861
  %v1074 = vpack.c.b16 %v866, %v862
  %v1075 = vpack.c.b16 %v867, %v863
  %v1076 = vpack.c.b16 %v872, %v868
  %v1077 = vpack.c.b16 %v873, %v869
  %v1078 = vpack.c.b16 %v874, %v870
  %v1079 = vpack.c.b16 %v875, %v871
  %v1080 = vpack.c.b16 %v880, %v876
  %v1081 = vpack.c.b16 %v881, %v877
  %v1082 = vpack.c.b16 %v882, %v878
  %v1083 = vpack.c.b16 %v883, %v879
  %v1084 = vpack.c.b16 %v888, %v884
  %v1085 = vpack.c.b16 %v889, %v885
  %v1086 = vpack.c.b16 %v890, %v886
  %v1087 = vpack.c.b16 %v891, %v887
  %vm1284 = vcmask 130048
  %v1286 = vsel %vm1284, %v297, 0
  %1288 = vmatprep.subr.bf16.mxu0 %v893
  %1289 = vmatpush1.bf16.msra.mxu0 %v892
  %1290 = vmatprep.subr.bf16.mxu0 %v897
  %1291 = vmatpush1.bf16.msra.mxu0 %v896
  %1292 = vmatprep.subr.bf16.mxu0 %v901
  %1293 = vmatpush1.bf16.msra.mxu0 %v900
  %1294 = vmatprep.subr.bf16.mxu0 %v905
  %1295 = vmatpush1.bf16.msra.mxu0 %v904
  %1296 = vmatprep.subr.bf16.mxu0 %v909
  %1297 = vmatpush1.bf16.msra.mxu0 %v908
  %1298 = vmatprep.subr.bf16.mxu0 %v913
  %1299 = vmatpush1.bf16.msra.mxu0 %v912
  %1300 = vmatprep.subr.bf16.mxu0 %v917
  %1301 = vmatpush1.bf16.msra.mxu0 %v916
  %1302 = vmatprep.subr.bf16.mxu0 %v921
  %1303 = vmatpush1.bf16.msra.mxu0 %v920
  %1304 = vmatprep.subr.bf16.mxu0 %v925
  %1305 = vmatpush1.bf16.msra.mxu0 %v924
  %1306 = vmatprep.subr.bf16.mxu0 %v929
  %1307 = vmatpush1.bf16.msra.mxu0 %v928
  %1308 = vmatprep.subr.bf16.mxu0 %v933
  %1309 = vmatpush1.bf16.msra.mxu0 %v932
  %1310 = vmatprep.subr.bf16.mxu0 %v937
  %1311 = vmatpush1.bf16.msra.mxu0 %v936
  %1312 = vmatprep.subr.bf16.mxu0 %v941
  %1313 = vmatpush1.bf16.msra.mxu0 %v940
  %1314 = vmatprep.subr.bf16.mxu0 %v945
  %1315 = vmatpush1.bf16.msra.mxu0 %v944
  %1316 = vmatprep.subr.bf16.mxu0 %v949
  %1317 = vmatpush1.bf16.msra.mxu0 %v948
  %1318 = vmatprep.subr.bf16.mxu0 %v953
  %1319 = vmatpush1.bf16.msra.mxu0 %v952
  %1320 = vmatprep.mubr.bf16.mxu0 %v292
  %1321 = vmatmul.mubr.bf16.gmra.mrb[0].mxu0 %v291
  %v1322 = vpop.f32.mrb[0].mxu0
  %v1323 = vadd.f32 %v252, %v1322
  %v1324 = vpop.f32.mrb[0].mxu0
  %v1325 = vadd.f32 %v256, %v1324
  %v1326 = vpop.f32.mrb[0].mxu0
  %v1327 = vadd.f32 %v252, %v1326
  %v1328 = vpop.f32.mrb[0].mxu0
  %v1329 = vadd.f32 %v256, %v1328
  %1330 = vdwg.mxu0
  %1331 = vmatprep.subr.bf16.mxu0 %v957
  %1332 = vmatpush1.bf16.msra.mxu0 %v956
  %1333 = vmatprep.subr.bf16.mxu0 %v961
  %1334 = vmatpush1.bf16.msra.mxu0 %v960
  %1335 = vmatprep.subr.bf16.mxu0 %v965
  %1336 = vmatpush1.bf16.msra.mxu0 %v964
  %1337 = vmatprep.subr.bf16.mxu0 %v969
  %1338 = vmatpush1.bf16.msra.mxu0 %v968
  %1339 = vmatprep.subr.bf16.mxu0 %v973
  %1340 = vmatpush1.bf16.msra.mxu0 %v972
  %1341 = vmatprep.subr.bf16.mxu0 %v977
  %1342 = vmatpush1.bf16.msra.mxu0 %v976
  %1343 = vmatprep.subr.bf16.mxu0 %v981
  %1344 = vmatpush1.bf16.msra.mxu0 %v980
  %1345 = vmatprep.subr.bf16.mxu0 %v985
  %1346 = vmatpush1.bf16.msra.mxu0 %v984
  %1347 = vmatprep.subr.bf16.mxu0 %v989
  %1348 = vmatpush1.bf16.msra.mxu0 %v988
  %1349 = vmatprep.subr.bf16.mxu0 %v993
  %1350 = vmatpush1.bf16.msra.mxu0 %v992
  %1351 = vmatprep.subr.bf16.mxu0 %v997
  %1352 = vmatpush1.bf16.msra.mxu0 %v996
  %1353 = vmatprep.subr.bf16.mxu0 %v1001
  %1354 = vmatpush1.bf16.msra.mxu0 %v1000
  %1355 = vmatprep.subr.bf16.mxu0 %v1005
  %1356 = vmatpush1.bf16.msra.mxu0 %v1004
  %1357 = vmatprep.subr.bf16.mxu0 %v1009
  %1358 = vmatpush1.bf16.msra.mxu0 %v1008
  %1359 = vmatprep.subr.bf16.mxu0 %v1013
  %1360 = vmatpush1.bf16.msra.mxu0 %v1012
  %1361 = vmatprep.subr.bf16.mxu0 %v1017
  %1362 = vmatpush1.bf16.msra.mxu0 %v1016
  %1363 = vmatprep.mubr.bf16.mxu0 %v294
  %1364 = vmatmul.mubr.bf16.gmra.mrb[0].mxu0 %v293
  %v1365 = vpop.f32.mrb[0].mxu0
  %v1366 = vadd.f32 %v1323, %v1365
  %v1367 = vpop.f32.mrb[0].mxu0
  %v1368 = vadd.f32 %v1325, %v1367
  %v1369 = vpop.f32.mrb[0].mxu0
  %v1370 = vadd.f32 %v1327, %v1369
  %v1371 = vpop.f32.mrb[0].mxu0
  %v1372 = vadd.f32 %v1329, %v1371
  %1373 = vdwg.mxu0
  %1374 = vmatprep.subr.bf16.mxu0 %v1021
  %1375 = vmatpush1.bf16.msra.mxu0 %v1020
  %1376 = vmatprep.subr.bf16.mxu0 %v1025
  %1377 = vmatpush1.bf16.msra.mxu0 %v1024
  %1378 = vmatprep.subr.bf16.mxu0 %v1029
  %1379 = vmatpush1.bf16.msra.mxu0 %v1028
  %1380 = vmatprep.subr.bf16.mxu0 %v1033
  %1381 = vmatpush1.bf16.msra.mxu0 %v1032
  %1382 = vmatprep.subr.bf16.mxu0 %v1037
  %1383 = vmatpush1.bf16.msra.mxu0 %v1036
  %1384 = vmatprep.subr.bf16.mxu0 %v1041
  %1385 = vmatpush1.bf16.msra.mxu0 %v1040
  %1386 = vmatprep.subr.bf16.mxu0 %v1045
  %1387 = vmatpush1.bf16.msra.mxu0 %v1044
  %1388 = vmatprep.subr.bf16.mxu0 %v1049
  %1389 = vmatpush1.bf16.msra.mxu0 %v1048
  %1390 = vmatprep.subr.bf16.mxu0 %v1053
  %1391 = vmatpush1.bf16.msra.mxu0 %v1052
  %1392 = vmatprep.subr.bf16.mxu0 %v1057
  %1393 = vmatpush1.bf16.msra.mxu0 %v1056
  %1394 = vmatprep.subr.bf16.mxu0 %v1061
  %1395 = vmatpush1.bf16.msra.mxu0 %v1060
  %1396 = vmatprep.subr.bf16.mxu0 %v1065
  %1397 = vmatpush1.bf16.msra.mxu0 %v1064
  %1398 = vmatprep.subr.bf16.mxu0 %v1069
  %1399 = vmatpush1.bf16.msra.mxu0 %v1068
  %1400 = vmatprep.subr.bf16.mxu0 %v1073
  %1401 = vmatpush1.bf16.msra.mxu0 %v1072
  %1402 = vmatprep.subr.bf16.mxu0 %v1077
  %1403 = vmatpush1.bf16.msra.mxu0 %v1076
  %1404 = vmatprep.subr.bf16.mxu0 %v1081
  %1405 = vmatpush1.bf16.msra.mxu0 %v1080
  %1406 = vmatprep.mubr.bf16.mxu0 %v296
  %1407 = vmatmul.mubr.bf16.gmra.mrb[0].mxu0 %v295
  %v1408 = vpop.f32.mrb[0].mxu0
  %v1409 = vadd.f32 %v1366, %v1408
  %v1410 = vpop.f32.mrb[0].mxu0
  %v1411 = vadd.f32 %v1368, %v1410
  %v1412 = vpop.f32.mrb[0].mxu0
  %v1413 = vadd.f32 %v1370, %v1412
  %v1414 = vpop.f32.mrb[0].mxu0
  %v1415 = vadd.f32 %v1372, %v1414
  %1416 = vdwg.mxu0
  %1417 = vmatprep.subr.bf16.mxu0 %v1085
  %1418 = vmatpush1.bf16.msra.mxu0 %v1084
  %1419 = vmatprep.subr.bf16.mxu0 0
  %1420 = vmatpush1.bf16.msra.mxu0 0
  %1421 = vmatprep.subr.bf16.mxu0 0
  %1422 = vmatpush1.bf16.msra.mxu0 0
  %1423 = vmatprep.subr.bf16.mxu0 0
  %1424 = vmatpush1.bf16.msra.mxu0 0
  %1425 = vmatprep.subr.bf16.mxu0 0
  %1426 = vmatpush1.bf16.msra.mxu0 0
  %1427 = vmatprep.subr.bf16.mxu0 0
  %1428 = vmatpush1.bf16.msra.mxu0 0
  %1429 = vmatprep.subr.bf16.mxu0 0
  %1430 = vmatpush1.bf16.msra.mxu0 0
  %1431 = vmatprep.subr.bf16.mxu0 0
  %1432 = vmatpush1.bf16.msra.mxu0 0
  %1433 = vmatprep.subr.bf16.mxu0 0
  %1434 = vmatpush1.bf16.msra.mxu0 0
  %1435 = vmatprep.subr.bf16.mxu0 0
  %1436 = vmatpush1.bf16.msra.mxu0 0
  %1437 = vmatprep.subr.bf16.mxu0 0
  %1438 = vmatpush1.bf16.msra.mxu0 0
  %1439 = vmatprep.subr.bf16.mxu0 0
  %1440 = vmatpush1.bf16.msra.mxu0 0
  %1441 = vmatprep.subr.bf16.mxu0 0
  %1442 = vmatpush1.bf16.msra.mxu0 0
  %1443 = vmatprep.subr.bf16.mxu0 0
  %1444 = vmatpush1.bf16.msra.mxu0 0
  %1445 = vmatprep.subr.bf16.mxu0 0
  %1446 = vmatpush1.bf16.msra.mxu0 0
  %1447 = vmatprep.subr.bf16.mxu0 0
  %1448 = vmatpush1.bf16.msra.mxu0 0
  %1449 = vmatprep.mubr.bf16.mxu0 0
  %1450 = vmatmul.mubr.bf16.gmra.mrb[0].mxu0 %v1286
  %v1451 = vpop.f32.mrb[0].mxu0
  %v1452 = vadd.f32 %v1409, %v1451
  %v1453 = vpop.f32.mrb[0].mxu0
  %v1454 = vadd.f32 %v1411, %v1453
  %v1455 = vpop.f32.mrb[0].mxu0
  %v1456 = vadd.f32 %v1413, %v1455
  %v1457 = vpop.f32.mrb[0].mxu0
  %v1458 = vadd.f32 %v1415, %v1457
  %1459 = vdwg.mxu0
  %1460 = vmatprep.subr.bf16.mxu0 %v895
  %1461 = vmatpush1.bf16.msra.mxu0 %v894
  %1462 = vmatprep.subr.bf16.mxu0 %v899
  %1463 = vmatpush1.bf16.msra.mxu0 %v898
  %1464 = vmatprep.subr.bf16.mxu0 %v903
  %1465 = vmatpush1.bf16.msra.mxu0 %v902
  %1466 = vmatprep.subr.bf16.mxu0 %v907
  %1467 = vmatpush1.bf16.msra.mxu0 %v906
  %1468 = vmatprep.subr.bf16.mxu0 %v911
  %1469 = vmatpush1.bf16.msra.mxu0 %v910
  %1470 = vmatprep.subr.bf16.mxu0 %v915
  %1471 = vmatpush1.bf16.msra.mxu0 %v914
  %1472 = vmatprep.subr.bf16.mxu0 %v919
  %1473 = vmatpush1.bf16.msra.mxu0 %v918
  %1474 = vmatprep.subr.bf16.mxu0 %v923
  %1475 = vmatpush1.bf16.msra.mxu0 %v922
  %1476 = vmatprep.subr.bf16.mxu0 %v927
  %1477 = vmatpush1.bf16.msra.mxu0 %v926
  %1478 = vmatprep.subr.bf16.mxu0 %v931
  %1479 = vmatpush1.bf16.msra.mxu0 %v930
  %1480 = vmatprep.subr.bf16.mxu0 %v935
  %1481 = vmatpush1.bf16.msra.mxu0 %v934
  %1482 = vmatprep.subr.bf16.mxu0 %v939
  %1483 = vmatpush1.bf16.msra.mxu0 %v938
  %1484 = vmatprep.subr.bf16.mxu0 %v943
  %1485 = vmatpush1.bf16.msra.mxu0 %v942
  %1486 = vmatprep.subr.bf16.mxu0 %v947
  %1487 = vmatpush1.bf16.msra.mxu0 %v946
  %1488 = vmatprep.subr.bf16.mxu0 %v951
  %1489 = vmatpush1.bf16.msra.mxu0 %v950
  %1490 = vmatprep.subr.bf16.mxu0 %v955
  %1491 = vmatpush1.bf16.msra.mxu0 %v954
  %1492 = vmatprep.mubr.bf16.mxu0 %v292
  %1493 = vmatmul.mubr.bf16.gmra.mrb[0].mxu0 %v291
  %v1494 = vpop.f32.mrb[0].mxu0
  %v1495 = vadd.f32 %v260, %v1494
  %v1496 = vpop.f32.mrb[0].mxu0
  %v1497 = vadd.f32 %v264, %v1496
  %v1498 = vpop.f32.mrb[0].mxu0
  %v1499 = vadd.f32 %v260, %v1498
  %v1500 = vpop.f32.mrb[0].mxu0
  %v1501 = vadd.f32 %v264, %v1500
  %1502 = vdwg.mxu0
  %1503 = vmatprep.subr.bf16.mxu0 %v959
  %1504 = vmatpush1.bf16.msra.mxu0 %v958
  %1505 = vmatprep.subr.bf16.mxu0 %v963
  %1506 = vmatpush1.bf16.msra.mxu0 %v962
  %1507 = vmatprep.subr.bf16.mxu0 %v967
  %1508 = vmatpush1.bf16.msra.mxu0 %v966
  %1509 = vmatprep.subr.bf16.mxu0 %v971
  %1510 = vmatpush1.bf16.msra.mxu0 %v970
  %1511 = vmatprep.subr.bf16.mxu0 %v975
  %1512 = vmatpush1.bf16.msra.mxu0 %v974
  %1513 = vmatprep.subr.bf16.mxu0 %v979
  %1514 = vmatpush1.bf16.msra.mxu0 %v978
  %1515 = vmatprep.subr.bf16.mxu0 %v983
  %1516 = vmatpush1.bf16.msra.mxu0 %v982
  %1517 = vmatprep.subr.bf16.mxu0 %v987
  %1518 = vmatpush1.bf16.msra.mxu0 %v986
  %1519 = vmatprep.subr.bf16.mxu0 %v991
  %1520 = vmatpush1.bf16.msra.mxu0 %v990
  %1521 = vmatprep.subr.bf16.mxu0 %v995
  %1522 = vmatpush1.bf16.msra.mxu0 %v994
  %1523 = vmatprep.subr.bf16.mxu0 %v999
  %1524 = vmatpush1.bf16.msra.mxu0 %v998
  %1525 = vmatprep.subr.bf16.mxu0 %v1003
  %1526 = vmatpush1.bf16.msra.mxu0 %v1002
  %1527 = vmatprep.subr.bf16.mxu0 %v1007
  %1528 = vmatpush1.bf16.msra.mxu0 %v1006
  %1529 = vmatprep.subr.bf16.mxu0 %v1011
  %1530 = vmatpush1.bf16.msra.mxu0 %v1010
  %1531 = vmatprep.subr.bf16.mxu0 %v1015
  %1532 = vmatpush1.bf16.msra.mxu0 %v1014
  %1533 = vmatprep.subr.bf16.mxu0 %v1019
  %1534 = vmatpush1.bf16.msra.mxu0 %v1018
  %1535 = vmatprep.mubr.bf16.mxu0 %v294
  %1536 = vmatmul.mubr.bf16.gmra.mrb[0].mxu0 %v293
  %v1537 = vpop.f32.mrb[0].mxu0
  %v1538 = vadd.f32 %v1495, %v1537
  %v1539 = vpop.f32.mrb[0].mxu0
  %v1540 = vadd.f32 %v1497, %v1539
  %v1541 = vpop.f32.mrb[0].mxu0
  %v1542 = vadd.f32 %v1499, %v1541
  %v1543 = vpop.f32.mrb[0].mxu0
  %v1544 = vadd.f32 %v1501, %v1543
  %1545 = vdwg.mxu0
  %1546 = vmatprep.subr.bf16.mxu0 %v1023
  %1547 = vmatpush1.bf16.msra.mxu0 %v1022
  %1548 = vmatprep.subr.bf16.mxu0 %v1027
  %1549 = vmatpush1.bf16.msra.mxu0 %v1026
  %1550 = vmatprep.subr.bf16.mxu0 %v1031
  %1551 = vmatpush1.bf16.msra.mxu0 %v1030
  %1552 = vmatprep.subr.bf16.mxu0 %v1035
  %1553 = vmatpush1.bf16.msra.mxu0 %v1034
  %1554 = vmatprep.subr.bf16.mxu0 %v1039
  %1555 = vmatpush1.bf16.msra.mxu0 %v1038
  %1556 = vmatprep.subr.bf16.mxu0 %v1043
  %1557 = vmatpush1.bf16.msra.mxu0 %v1042
  %1558 = vmatprep.subr.bf16.mxu0 %v1047
  %1559 = vmatpush1.bf16.msra.mxu0 %v1046
  %1560 = vmatprep.subr.bf16.mxu0 %v1051
  %1561 = vmatpush1.bf16.msra.mxu0 %v1050
  %1562 = vmatprep.subr.bf16.mxu0 %v1055
  %1563 = vmatpush1.bf16.msra.mxu0 %v1054
  %1564 = vmatprep.subr.bf16.mxu0 %v1059
  %1565 = vmatpush1.bf16.msra.mxu0 %v1058
  %1566 = vmatprep.subr.bf16.mxu0 %v1063
  %1567 = vmatpush1.bf16.msra.mxu0 %v1062
  %1568 = vmatprep.subr.bf16.mxu0 %v1067
  %1569 = vmatpush1.bf16.msra.mxu0 %v1066
  %1570 = vmatprep.subr.bf16.mxu0 %v1071
  %1571 = vmatpush1.bf16.msra.mxu0 %v1070
  %1572 = vmatprep.subr.bf16.mxu0 %v1075
  %1573 = vmatpush1.bf16.msra.mxu0 %v1074
  %1574 = vmatprep.subr.bf16.mxu0 %v1079
  %1575 = vmatpush1.bf16.msra.mxu0 %v1078
  %1576 = vmatprep.subr.bf16.mxu0 %v1083
  %1577 = vmatpush1.bf16.msra.mxu0 %v1082
  %1578 = vmatprep.mubr.bf16.mxu0 %v296
  %1579 = vmatmul.mubr.bf16.gmra.mrb[0].mxu0 %v295
  %v1580 = vpop.f32.mrb[0].mxu0
  %v1581 = vadd.f32 %v1538, %v1580
  %v1582 = vpop.f32.mrb[0].mxu0
  %v1583 = vadd.f32 %v1540, %v1582
  %v1584 = vpop.f32.mrb[0].mxu0
  %v1585 = vadd.f32 %v1542, %v1584
  %v1586 = vpop.f32.mrb[0].mxu0
  %v1587 = vadd.f32 %v1544, %v1586
  %1588 = vdwg.mxu0
  %1589 = vmatprep.subr.bf16.mxu0 %v1087
  %1590 = vmatpush1.bf16.msra.mxu0 %v1086
  %1591 = vmatprep.subr.bf16.mxu0 0
  %1592 = vmatpush1.bf16.msra.mxu0 0
  %1593 = vmatprep.subr.bf16.mxu0 0
  %1594 = vmatpush1.bf16.msra.mxu0 0
  %1595 = vmatprep.subr.bf16.mxu0 0
  %1596 = vmatpush1.bf16.msra.mxu0 0
  %1597 = vmatprep.subr.bf16.mxu0 0
  %1598 = vmatpush1.bf16.msra.mxu0 0
  %1599 = vmatprep.subr.bf16.mxu0 0
  %1600 = vmatpush1.bf16.msra.mxu0 0
  %1601 = vmatprep.subr.bf16.mxu0 0
  %1602 = vmatpush1.bf16.msra.mxu0 0
  %1603 = vmatprep.subr.bf16.mxu0 0
  %1604 = vmatpush1.bf16.msra.mxu0 0
  %1605 = vmatprep.subr.bf16.mxu0 0
  %1606 = vmatpush1.bf16.msra.mxu0 0
  %1607 = vmatprep.subr.bf16.mxu0 0
  %1608 = vmatpush1.bf16.msra.mxu0 0
  %1609 = vmatprep.subr.bf16.mxu0 0
  %1610 = vmatpush1.bf16.msra.mxu0 0
  %1611 = vmatprep.subr.bf16.mxu0 0
  %1612 = vmatpush1.bf16.msra.mxu0 0
  %1613 = vmatprep.subr.bf16.mxu0 0
  %1614 = vmatpush1.bf16.msra.mxu0 0
  %1615 = vmatprep.subr.bf16.mxu0 0
  %1616 = vmatpush1.bf16.msra.mxu0 0
  %1617 = vmatprep.subr.bf16.mxu0 0
  %1618 = vmatpush1.bf16.msra.mxu0 0
  %1619 = vmatprep.subr.bf16.mxu0 0
  %1620 = vmatpush1.bf16.msra.mxu0 0
  %1621 = vmatprep.mubr.bf16.mxu0 0
  %1622 = vmatmul.mubr.bf16.gmra.mrb[0].mxu0 %v1286
  %v1623 = vpop.f32.mrb[0].mxu0
  %v1624 = vadd.f32 %v1581, %v1623
  %v1625 = vpop.f32.mrb[0].mxu0
  %v1626 = vadd.f32 %v1583, %v1625
  %v1627 = vpop.f32.mrb[0].mxu0
  %v1628 = vadd.f32 %v1585, %v1627
  %v1629 = vpop.f32.mrb[0].mxu0
  %v1630 = vadd.f32 %v1587, %v1629
  %1631 = vdwg.mxu0
  %v1632 = vmax.f32 %v1452, 0.0
  %v1633 = vmax.f32 %v1454, 0.0
  %v1634 = vmax.f32 %v1624, 0.0
  %v1635 = vmax.f32 %v1626, 0.0
  %v1636 = vmax.f32 %v1456, 0.0
  %v1637 = vmax.f32 %v1458, 0.0
  %v1638 = vmax.f32 %v1628, 0.0
  %v1639 = vmax.f32 %v1630, 0.0
  %v1640 = vpack.c.bf16 %v1636, %v1632
  %v1641 = vpack.c.bf16 %v1637, %v1633
  %v1642 = vpack.c.bf16 %v1638, %v1634
  %v1643 = vpack.c.bf16 %v1639, %v1635
  %v1644 = vld [vmem:[%s4] sm:$0xff]
  %v1645 = vld [vmem:[%s4 + $0x8] sm:$0xff]
  %v1646 = vld [vmem:[%s4 + $0x10] sm:$0xff]
  %v1647 = vld [vmem:[%s4 + $0x18] sm:$0xff]
  %v1648 = vld [vmem:[%s4 + $0x20] sm:$0xff]
  %v1649 = vld [vmem:[%s4 + $0x28] sm:$0xff]
  %v1650 = vld [vmem:[%s4 + $0x30] sm:$0xff]
  %v1651 = vld [vmem:[%s4 + $0x38] sm:$0xff]
  %v1652 = vld [vmem:[%s4 + $0x40] sm:$0xff]
  %v1653 = vld [vmem:[%s4 + $0x48] sm:$0xff]
  %v1654 = vld [vmem:[%s4 + $0x50] sm:$0xff]
  %v1655 = vld [vmem:[%s4 + $0x58] sm:$0xff]
  %v1656 = vld [vmem:[%s4 + $0x60] sm:$0xff]
  %v1657 = vld [vmem:[%s4 + $0x68] sm:$0xff]
  %v1658 = vld [vmem:[%s4 + $0x70] sm:$0xff]
  %v1659 = vld [vmem:[%s4 + $0x78] sm:$0xff]
  %v1660 = vld [vmem:[%s4 + $0x80] sm:$0xff]
  %v1661 = vld [vmem:[%s4 + $0x88] sm:$0xff]
  %v1662 = vld [vmem:[%s4 + $0x90] sm:$0xff]
  %v1663 = vld [vmem:[%s4 + $0x98] sm:$0xff]
  %v1664 = vld [vmem:[%s4 + $0xa0] sm:$0xff]
  %v1665 = vld [vmem:[%s4 + $0xa8] sm:$0xff]
  %v1666 = vld [vmem:[%s4 + $0xb0] sm:$0xff]
  %v1667 = vld [vmem:[%s4 + $0xb8] sm:$0xff]
  %v1668 = vld [vmem:[%s4 + $0xc0] sm:$0xff]
  %v1669 = vld [vmem:[%s4 + $0xc8] sm:$0xff]
  %v1670 = vld [vmem:[%s4 + $0xd0] sm:$0xff]
  %v1671 = vld [vmem:[%s4 + $0xd8] sm:$0xff]
  %v1672 = vld [vmem:[%s4 + $0xe0] sm:$0xff]
  %v1673 = vld [vmem:[%s4 + $0xe8] sm:$0xff]
  %v1674 = vld [vmem:[%s4 + $0xf0] sm:$0xff]
  %v1675 = vld [vmem:[%s4 + $0xf8] sm:$0xff]
  %v1676 = vld [vmem:[%s4 + $0x100] sm:$0xff]
  %v1677 = vld [vmem:[%s4 + $0x108] sm:$0xff]
  %v1678 = vld [vmem:[%s4 + $0x110] sm:$0xff]
  %v1679 = vld [vmem:[%s4 + $0x118] sm:$0xff]
  %v1680 = vld [vmem:[%s4 + $0x120] sm:$0xff]
  %v1681 = vld [vmem:[%s4 + $0x128] sm:$0xff]
  %v1682 = vld [vmem:[%s4 + $0x130] sm:$0xff]
  %v1683 = vld [vmem:[%s4 + $0x138] sm:$0xff]
  %v1684 = vld [vmem:[%s4 + $0x140] sm:$0xff]
  %v1685 = vld [vmem:[%s4 + $0x148] sm:$0xff]
  %v1686 = vld [vmem:[%s4 + $0x150] sm:$0xff]
  %v1687 = vld [vmem:[%s4 + $0x158] sm:$0xff]
  %v1688 = vld [vmem:[%s4 + $0x160] sm:$0xff]
  %v1689 = vld [vmem:[%s4 + $0x168] sm:$0xff]
  %v1690 = vld [vmem:[%s4 + $0x170] sm:$0xff]
  %v1691 = vld [vmem:[%s4 + $0x178] sm:$0xff]
  %v1692 = vld [vmem:[%s4 + $0x180] sm:$0xff]
  %v1693 = vld [vmem:[%s4 + $0x188] sm:$0xff]
  %v1694 = vld [vmem:[%s4 + $0x190] sm:$0xff]
  %v1695 = vld [vmem:[%s4 + $0x198] sm:$0xff]
  %v1696 = vld [vmem:[%s4 + $0x1a0] sm:$0xff]
  %v1697 = vld [vmem:[%s4 + $0x1a8] sm:$0xff]
  %v1698 = vld [vmem:[%s4 + $0x1b0] sm:$0xff]
  %v1699 = vld [vmem:[%s4 + $0x1b8] sm:$0xff]
  %v1700 = vld [vmem:[%s4 + $0x1c0] sm:$0xff]
  %v1701 = vld [vmem:[%s4 + $0x1c8] sm:$0xff]
  %v1702 = vld [vmem:[%s4 + $0x1d0] sm:$0xff]
  %v1703 = vld [vmem:[%s4 + $0x1d8] sm:$0xff]
  %v1704 = vld [vmem:[%s4 + $0x1e0] sm:$0xff]
  %v1705 = vld [vmem:[%s4 + $0x1e8] sm:$0xff]
  %v1706 = vld [vmem:[%s4 + $0x1f0] sm:$0xff]
  %v1707 = vld [vmem:[%s4 + $0x1f8] sm:$0xff]
  %v1708 = vld [vmem:[%s5] sm:$0x3]
  %v1710 = vlaneseq
  %v1711 = vshrl.u32 %v1710, 7
  %v1712 = vsub.s32 0, %v1711
  %v1713 = vrot.slane %v1708, %v1712
  %v1714 = vlaneseq
  %v1715 = vshrl.u32 %v1714, 7
  %v1716 = vsub.s32 1, %v1715
  %v1717 = vrot.slane %v1708, %v1716
  %v1784 = vunpack.c.l.b16 %v1644
  %v1785 = vunpack.c.h.b16 %v1644
  %v1786 = vunpack.c.l.b16 %v1645
  %v1787 = vunpack.c.h.b16 %v1645
  %v1788 = vunpack.c.l.b16 %v1646
  %v1789 = vunpack.c.h.b16 %v1646
  %v1790 = vunpack.c.l.b16 %v1647
  %v1791 = vunpack.c.h.b16 %v1647
  %v1792 = vunpack.c.l.b16 %v1648
  %v1793 = vunpack.c.h.b16 %v1648
  %v1794 = vunpack.c.l.b16 %v1649
  %v1795 = vunpack.c.h.b16 %v1649
  %v1796 = vunpack.c.l.b16 %v1650
  %v1797 = vunpack.c.h.b16 %v1650
  %v1798 = vunpack.c.l.b16 %v1651
  %v1799 = vunpack.c.h.b16 %v1651
  %v1800 = vunpack.c.l.b16 %v1652
  %v1801 = vunpack.c.h.b16 %v1652
  %v1802 = vunpack.c.l.b16 %v1653
  %v1803 = vunpack.c.h.b16 %v1653
  %v1804 = vunpack.c.l.b16 %v1654
  %v1805 = vunpack.c.h.b16 %v1654
  %v1806 = vunpack.c.l.b16 %v1655
  %v1807 = vunpack.c.h.b16 %v1655
  %v1808 = vunpack.c.l.b16 %v1656
  %v1809 = vunpack.c.h.b16 %v1656
  %v1810 = vunpack.c.l.b16 %v1657
  %v1811 = vunpack.c.h.b16 %v1657
  %v1812 = vunpack.c.l.b16 %v1658
  %v1813 = vunpack.c.h.b16 %v1658
  %v1814 = vunpack.c.l.b16 %v1659
  %v1815 = vunpack.c.h.b16 %v1659
  %v1816 = vunpack.c.l.b16 %v1660
  %v1817 = vunpack.c.h.b16 %v1660
  %v1818 = vunpack.c.l.b16 %v1661
  %v1819 = vunpack.c.h.b16 %v1661
  %v1820 = vunpack.c.l.b16 %v1662
  %v1821 = vunpack.c.h.b16 %v1662
  %v1822 = vunpack.c.l.b16 %v1663
  %v1823 = vunpack.c.h.b16 %v1663
  %v1824 = vunpack.c.l.b16 %v1664
  %v1825 = vunpack.c.h.b16 %v1664
  %v1826 = vunpack.c.l.b16 %v1665
  %v1827 = vunpack.c.h.b16 %v1665
  %v1828 = vunpack.c.l.b16 %v1666
  %v1829 = vunpack.c.h.b16 %v1666
  %v1830 = vunpack.c.l.b16 %v1667
  %v1831 = vunpack.c.h.b16 %v1667
  %v1832 = vunpack.c.l.b16 %v1668
  %v1833 = vunpack.c.h.b16 %v1668
  %v1834 = vunpack.c.l.b16 %v1669
  %v1835 = vunpack.c.h.b16 %v1669
  %v1836 = vunpack.c.l.b16 %v1670
  %v1837 = vunpack.c.h.b16 %v1670
  %v1838 = vunpack.c.l.b16 %v1671
  %v1839 = vunpack.c.h.b16 %v1671
  %v1840 = vunpack.c.l.b16 %v1672
  %v1841 = vunpack.c.h.b16 %v1672
  %v1842 = vunpack.c.l.b16 %v1673
  %v1843 = vunpack.c.h.b16 %v1673
  %v1844 = vunpack.c.l.b16 %v1674
  %v1845 = vunpack.c.h.b16 %v1674
  %v1846 = vunpack.c.l.b16 %v1675
  %v1847 = vunpack.c.h.b16 %v1675
  %v1848 = vunpack.c.l.b16 %v1676
  %v1849 = vunpack.c.h.b16 %v1676
  %v1850 = vunpack.c.l.b16 %v1677
  %v1851 = vunpack.c.h.b16 %v1677
  %v1852 = vunpack.c.l.b16 %v1678
  %v1853 = vunpack.c.h.b16 %v1678
  %v1854 = vunpack.c.l.b16 %v1679
  %v1855 = vunpack.c.h.b16 %v1679
  %v1856 = vunpack.c.l.b16 %v1680
  %v1857 = vunpack.c.h.b16 %v1680
  %v1858 = vunpack.c.l.b16 %v1681
  %v1859 = vunpack.c.h.b16 %v1681
  %v1860 = vunpack.c.l.b16 %v1682
  %v1861 = vunpack.c.h.b16 %v1682
  %v1862 = vunpack.c.l.b16 %v1683
  %v1863 = vunpack.c.h.b16 %v1683
  %v1864 = vunpack.c.l.b16 %v1684
  %v1865 = vunpack.c.h.b16 %v1684
  %v1866 = vunpack.c.l.b16 %v1685
  %v1867 = vunpack.c.h.b16 %v1685
  %v1868 = vunpack.c.l.b16 %v1686
  %v1869 = vunpack.c.h.b16 %v1686
  %v1870 = vunpack.c.l.b16 %v1687
  %v1871 = vunpack.c.h.b16 %v1687
  %v1872 = vunpack.c.l.b16 %v1688
  %v1873 = vunpack.c.h.b16 %v1688
  %v1874 = vunpack.c.l.b16 %v1689
  %v1875 = vunpack.c.h.b16 %v1689
  %v1876 = vunpack.c.l.b16 %v1690
  %v1877 = vunpack.c.h.b16 %v1690
  %v1878 = vunpack.c.l.b16 %v1691
  %v1879 = vunpack.c.h.b16 %v1691
  %v1880 = vunpack.c.l.b16 %v1692
  %v1881 = vunpack.c.h.b16 %v1692
  %v1882 = vunpack.c.l.b16 %v1693
  %v1883 = vunpack.c.h.b16 %v1693
  %v1884 = vunpack.c.l.b16 %v1694
  %v1885 = vunpack.c.h.b16 %v1694
  %v1886 = vunpack.c.l.b16 %v1695
  %v1887 = vunpack.c.h.b16 %v1695
  %v1888 = vunpack.c.l.b16 %v1696
  %v1889 = vunpack.c.h.b16 %v1696
  %v1890 = vunpack.c.l.b16 %v1697
  %v1891 = vunpack.c.h.b16 %v1697
  %v1892 = vunpack.c.l.b16 %v1698
  %v1893 = vunpack.c.h.b16 %v1698
  %v1894 = vunpack.c.l.b16 %v1699
  %v1895 = vunpack.c.h.b16 %v1699
  %v1896 = vunpack.c.l.b16 %v1700
  %v1897 = vunpack.c.h.b16 %v1700
  %v1898 = vunpack.c.l.b16 %v1701
  %v1899 = vunpack.c.h.b16 %v1701
  %v1900 = vunpack.c.l.b16 %v1702
  %v1901 = vunpack.c.h.b16 %v1702
  %v1902 = vunpack.c.l.b16 %v1703
  %v1903 = vunpack.c.h.b16 %v1703
  %v1904 = vunpack.c.l.b16 %v1704
  %v1905 = vunpack.c.h.b16 %v1704
  %v1906 = vunpack.c.l.b16 %v1705
  %v1907 = vunpack.c.h.b16 %v1705
  %v1908 = vunpack.c.l.b16 %v1706
  %v1909 = vunpack.c.h.b16 %v1706
  %v1910 = vunpack.c.l.b16 %v1707
  %v1911 = vunpack.c.h.b16 %v1707
  %v1912 = vpack.c.b16 %v1786, %v1784
  %v1913 = vpack.c.b16 %v1787, %v1785
  %v1914 = vpack.c.b16 %v1790, %v1788
  %v1915 = vpack.c.b16 %v1791, %v1789
  %v1916 = vpack.c.b16 %v1794, %v1792
  %v1917 = vpack.c.b16 %v1795, %v1793
  %v1918 = vpack.c.b16 %v1798, %v1796
  %v1919 = vpack.c.b16 %v1799, %v1797
  %v1920 = vpack.c.b16 %v1802, %v1800
  %v1921 = vpack.c.b16 %v1803, %v1801
  %v1922 = vpack.c.b16 %v1806, %v1804
  %v1923 = vpack.c.b16 %v1807, %v1805
  %v1924 = vpack.c.b16 %v1810, %v1808
  %v1925 = vpack.c.b16 %v1811, %v1809
  %v1926 = vpack.c.b16 %v1814, %v1812
  %v1927 = vpack.c.b16 %v1815, %v1813
  %v1928 = vpack.c.b16 %v1818, %v1816
  %v1929 = vpack.c.b16 %v1819, %v1817
  %v1930 = vpack.c.b16 %v1822, %v1820
  %v1931 = vpack.c.b16 %v1823, %v1821
  %v1932 = vpack.c.b16 %v1826, %v1824
  %v1933 = vpack.c.b16 %v1827, %v1825
  %v1934 = vpack.c.b16 %v1830, %v1828
  %v1935 = vpack.c.b16 %v1831, %v1829
  %v1936 = vpack.c.b16 %v1834, %v1832
  %v1937 = vpack.c.b16 %v1835, %v1833
  %v1938 = vpack.c.b16 %v1838, %v1836
  %v1939 = vpack.c.b16 %v1839, %v1837
  %v1940 = vpack.c.b16 %v1842, %v1840
  %v1941 = vpack.c.b16 %v1843, %v1841
  %v1942 = vpack.c.b16 %v1846, %v1844
  %v1943 = vpack.c.b16 %v1847, %v1845
  %v1944 = vpack.c.b16 %v1850, %v1848
  %v1945 = vpack.c.b16 %v1851, %v1849
  %v1946 = vpack.c.b16 %v1854, %v1852
  %v1947 = vpack.c.b16 %v1855, %v1853
  %v1948 = vpack.c.b16 %v1858, %v1856
  %v1949 = vpack.c.b16 %v1859, %v1857
  %v1950 = vpack.c.b16 %v1862, %v1860
  %v1951 = vpack.c.b16 %v1863, %v1861
  %v1952 = vpack.c.b16 %v1866, %v1864
  %v1953 = vpack.c.b16 %v1867, %v1865
  %v1954 = vpack.c.b16 %v1870, %v1868
  %v1955 = vpack.c.b16 %v1871, %v1869
  %v1956 = vpack.c.b16 %v1874, %v1872
  %v1957 = vpack.c.b16 %v1875, %v1873
  %v1958 = vpack.c.b16 %v1878, %v1876
  %v1959 = vpack.c.b16 %v1879, %v1877
  %v1960 = vpack.c.b16 %v1882, %v1880
  %v1961 = vpack.c.b16 %v1883, %v1881
  %v1962 = vpack.c.b16 %v1886, %v1884
  %v1963 = vpack.c.b16 %v1887, %v1885
  %v1964 = vpack.c.b16 %v1890, %v1888
  %v1965 = vpack.c.b16 %v1891, %v1889
  %v1966 = vpack.c.b16 %v1894, %v1892
  %v1967 = vpack.c.b16 %v1895, %v1893
  %v1968 = vpack.c.b16 %v1898, %v1896
  %v1969 = vpack.c.b16 %v1899, %v1897
  %v1970 = vpack.c.b16 %v1902, %v1900
  %v1971 = vpack.c.b16 %v1903, %v1901
  %v1972 = vpack.c.b16 %v1906, %v1904
  %v1973 = vpack.c.b16 %v1907, %v1905
  %v1974 = vpack.c.b16 %v1910, %v1908
  %v1975 = vpack.c.b16 %v1911, %v1909
  %2040 = vmatprep.subr.bf16.mxu0 %v1913
  %2041 = vmatpush1.bf16.msra.mxu0 %v1912
  %2042 = vmatprep.subr.bf16.mxu0 %v1915
  %2043 = vmatpush1.bf16.msra.mxu0 %v1914
  %2044 = vmatprep.subr.bf16.mxu0 %v1917
  %2045 = vmatpush1.bf16.msra.mxu0 %v1916
  %2046 = vmatprep.subr.bf16.mxu0 %v1919
  %2047 = vmatpush1.bf16.msra.mxu0 %v1918
  %2048 = vmatprep.subr.bf16.mxu0 %v1921
  %2049 = vmatpush1.bf16.msra.mxu0 %v1920
  %2050 = vmatprep.subr.bf16.mxu0 %v1923
  %2051 = vmatpush1.bf16.msra.mxu0 %v1922
  %2052 = vmatprep.subr.bf16.mxu0 %v1925
  %2053 = vmatpush1.bf16.msra.mxu0 %v1924
  %2054 = vmatprep.subr.bf16.mxu0 %v1927
  %2055 = vmatpush1.bf16.msra.mxu0 %v1926
  %2056 = vmatprep.subr.bf16.mxu0 %v1929
  %2057 = vmatpush1.bf16.msra.mxu0 %v1928
  %2058 = vmatprep.subr.bf16.mxu0 %v1931
  %2059 = vmatpush1.bf16.msra.mxu0 %v1930
  %2060 = vmatprep.subr.bf16.mxu0 %v1933
  %2061 = vmatpush1.bf16.msra.mxu0 %v1932
  %2062 = vmatprep.subr.bf16.mxu0 %v1935
  %2063 = vmatpush1.bf16.msra.mxu0 %v1934
  %2064 = vmatprep.subr.bf16.mxu0 %v1937
  %2065 = vmatpush1.bf16.msra.mxu0 %v1936
  %2066 = vmatprep.subr.bf16.mxu0 %v1939
  %2067 = vmatpush1.bf16.msra.mxu0 %v1938
  %2068 = vmatprep.subr.bf16.mxu0 %v1941
  %2069 = vmatpush1.bf16.msra.mxu0 %v1940
  %2070 = vmatprep.subr.bf16.mxu0 %v1943
  %2071 = vmatpush1.bf16.msra.mxu0 %v1942
  %2072 = vmatprep.mubr.bf16.mxu0 %v1641
  %2073 = vmatmul.mubr.bf16.gmra.mrb[0].mxu0 %v1640
  %v2074 = vpop.f32.mrb[0].mxu0
  %v2075 = vadd.f32 %v1713, %v2074
  %v2076 = vpop.f32.mrb[0].mxu0
  %v2077 = vadd.f32 %v1717, %v2076
  %v2078 = vpop.f32.mrb[0].mxu0
  %v2079 = vadd.f32 %v1713, %v2078
  %v2080 = vpop.f32.mrb[0].mxu0
  %v2081 = vadd.f32 %v1717, %v2080
  %2082 = vdwg.mxu0
  %2083 = vmatprep.subr.bf16.mxu0 %v1945
  %2084 = vmatpush1.bf16.msra.mxu0 %v1944
  %2085 = vmatprep.subr.bf16.mxu0 %v1947
  %2086 = vmatpush1.bf16.msra.mxu0 %v1946
  %2087 = vmatprep.subr.bf16.mxu0 %v1949
  %2088 = vmatpush1.bf16.msra.mxu0 %v1948
  %2089 = vmatprep.subr.bf16.mxu0 %v1951
  %2090 = vmatpush1.bf16.msra.mxu0 %v1950
  %2091 = vmatprep.subr.bf16.mxu0 %v1953
  %2092 = vmatpush1.bf16.msra.mxu0 %v1952
  %2093 = vmatprep.subr.bf16.mxu0 %v1955
  %2094 = vmatpush1.bf16.msra.mxu0 %v1954
  %2095 = vmatprep.subr.bf16.mxu0 %v1957
  %2096 = vmatpush1.bf16.msra.mxu0 %v1956
  %2097 = vmatprep.subr.bf16.mxu0 %v1959
  %2098 = vmatpush1.bf16.msra.mxu0 %v1958
  %2099 = vmatprep.subr.bf16.mxu0 %v1961
  %2100 = vmatpush1.bf16.msra.mxu0 %v1960
  %2101 = vmatprep.subr.bf16.mxu0 %v1963
  %2102 = vmatpush1.bf16.msra.mxu0 %v1962
  %2103 = vmatprep.subr.bf16.mxu0 %v1965
  %2104 = vmatpush1.bf16.msra.mxu0 %v1964
  %2105 = vmatprep.subr.bf16.mxu0 %v1967
  %2106 = vmatpush1.bf16.msra.mxu0 %v1966
  %2107 = vmatprep.subr.bf16.mxu0 %v1969
  %2108 = vmatpush1.bf16.msra.mxu0 %v1968
  %2109 = vmatprep.subr.bf16.mxu0 %v1971
  %2110 = vmatpush1.bf16.msra.mxu0 %v1970
  %2111 = vmatprep.subr.bf16.mxu0 %v1973
  %2112 = vmatpush1.bf16.msra.mxu0 %v1972
  %2113 = vmatprep.subr.bf16.mxu0 %v1975
  %2114 = vmatpush1.bf16.msra.mxu0 %v1974
  %2115 = vmatprep.mubr.bf16.mxu0 %v1643
  %2116 = vmatmul.mubr.bf16.gmra.mrb[0].mxu0 %v1642
  %v2117 = vpop.f32.mrb[0].mxu0
  %v2118 = vadd.f32 %v2075, %v2117
  %v2119 = vpop.f32.mrb[0].mxu0
  %v2120 = vadd.f32 %v2077, %v2119
  %v2121 = vpop.f32.mrb[0].mxu0
  %v2122 = vadd.f32 %v2079, %v2121
  %v2123 = vpop.f32.mrb[0].mxu0
  %v2124 = vadd.f32 %v2081, %v2123
  %2125 = vdwg.mxu0
  %v2126 = vmul.f32 %v2120, 0.5
  %v2127 = vmul.f32 %v2124, 0.5
  %v2128 = vmul.f32 %v2126, 1.442695
  %v2129 = vpow.pop %v2128
  %v2130 = vmul.f32 %v2127, 1.442695
  %v2131 = vpow.pop %v2130
  %v2132 = vmul.f32 %v49, %v2129
  %v2133 = vmul.f32 %v50, %v2131
  %v2134 = vadd.f32 %v2118, %v2132
  %v2135 = vadd.f32 %v2122, %v2133
  %v2136 = vpack.c.bf16 %v2135, %v2134
  %v2137 = vld [vmem:[%s6] sm:$0xff]
  %v2138 = vld [vmem:[%s6 + $0x8] sm:$0xff]
  %v2139 = vld [vmem:[%s6 + $0x10] sm:$0xff]
  %v2140 = vld [vmem:[%s6 + $0x18] sm:$0xff]
  %v2141 = vld [vmem:[%s6 + $0x20] sm:$0xff]
  %v2142 = vld [vmem:[%s6 + $0x28] sm:$0xff]
  %v2143 = vld [vmem:[%s6 + $0x30] sm:$0xff]
  %v2144 = vld [vmem:[%s6 + $0x38] sm:$0xff]
  %v2145 = vld [vmem:[%s6 + $0x40] sm:$0xff]
  %v2146 = vld [vmem:[%s6 + $0x48] sm:$0xff]
  %v2147 = vld [vmem:[%s6 + $0x50] sm:$0xff]
  %v2148 = vld [vmem:[%s6 + $0x58] sm:$0xff]
  %v2149 = vld [vmem:[%s6 + $0x60] sm:$0xff]
  %v2150 = vld [vmem:[%s6 + $0x68] sm:$0xff]
  %v2151 = vld [vmem:[%s6 + $0x70] sm:$0xff]
  %v2152 = vld [vmem:[%s6 + $0x78] sm:$0xff]
  %v2153 = vld [vmem:[%s6 + $0x80] sm:$0xff]
  %v2154 = vld [vmem:[%s6 + $0x88] sm:$0xff]
  %v2155 = vld [vmem:[%s6 + $0x90] sm:$0xff]
  %v2156 = vld [vmem:[%s6 + $0x98] sm:$0xff]
  %v2157 = vld [vmem:[%s6 + $0xa0] sm:$0xff]
  %v2158 = vld [vmem:[%s6 + $0xa8] sm:$0xff]
  %v2159 = vld [vmem:[%s6 + $0xb0] sm:$0xff]
  %v2160 = vld [vmem:[%s6 + $0xb8] sm:$0xff]
  %v2161 = vld [vmem:[%s6 + $0xc0] sm:$0xff]
  %v2162 = vld [vmem:[%s6 + $0xc8] sm:$0xff]
  %v2163 = vld [vmem:[%s6 + $0xd0] sm:$0xff]
  %v2164 = vld [vmem:[%s6 + $0xd8] sm:$0xff]
  %v2165 = vld [vmem:[%s6 + $0xe0] sm:$0xff]
  %v2166 = vld [vmem:[%s6 + $0xe8] sm:$0xff]
  %v2167 = vld [vmem:[%s6 + $0xf0] sm:$0xff]
  %v2168 = vld [vmem:[%s6 + $0xf8] sm:$0xff]
  %v2169 = vld [vmem:[%s7] sm:$0xf]
  %v2171 = vlaneseq
  %v2172 = vshrl.u32 %v2171, 7
  %v2173 = vsub.s32 0, %v2172
  %v2174 = vrot.slane %v2169, %v2173
  %v2175 = vlaneseq
  %v2176 = vshrl.u32 %v2175, 7
  %v2177 = vsub.s32 1, %v2176
  %v2178 = vrot.slane %v2169, %v2177
  %v2179 = vlaneseq
  %v2180 = vshrl.u32 %v2179, 7
  %v2181 = vsub.s32 2, %v2180
  %v2182 = vrot.slane %v2169, %v2181
  %v2183 = vlaneseq
  %v2184 = vshrl.u32 %v2183, 7
  %v2185 = vsub.s32 3, %v2184
  %v2186 = vrot.slane %v2169, %v2185
  %v2223 = vunpack.c.l.b16 %v2137
  %v2224 = vunpack.c.h.b16 %v2137
  %v2225 = vunpack.c.l.b16 %v2138
  %v2226 = vunpack.c.h.b16 %v2138
  %v2227 = vunpack.c.l.b16 %v2139
  %v2228 = vunpack.c.h.b16 %v2139
  %v2229 = vunpack.c.l.b16 %v2140
  %v2230 = vunpack.c.h.b16 %v2140
  %v2231 = vunpack.c.l.b16 %v2141
  %v2232 = vunpack.c.h.b16 %v2141
  %v2233 = vunpack.c.l.b16 %v2142
  %v2234 = vunpack.c.h.b16 %v2142
  %v2235 = vunpack.c.l.b16 %v2143
  %v2236 = vunpack.c.h.b16 %v2143
  %v2237 = vunpack.c.l.b16 %v2144
  %v2238 = vunpack.c.h.b16 %v2144
  %v2239 = vunpack.c.l.b16 %v2145
  %v2240 = vunpack.c.h.b16 %v2145
  %v2241 = vunpack.c.l.b16 %v2146
  %v2242 = vunpack.c.h.b16 %v2146
  %v2243 = vunpack.c.l.b16 %v2147
  %v2244 = vunpack.c.h.b16 %v2147
  %v2245 = vunpack.c.l.b16 %v2148
  %v2246 = vunpack.c.h.b16 %v2148
  %v2247 = vunpack.c.l.b16 %v2149
  %v2248 = vunpack.c.h.b16 %v2149
  %v2249 = vunpack.c.l.b16 %v2150
  %v2250 = vunpack.c.h.b16 %v2150
  %v2251 = vunpack.c.l.b16 %v2151
  %v2252 = vunpack.c.h.b16 %v2151
  %v2253 = vunpack.c.l.b16 %v2152
  %v2254 = vunpack.c.h.b16 %v2152
  %v2255 = vunpack.c.l.b16 %v2153
  %v2256 = vunpack.c.h.b16 %v2153
  %v2257 = vunpack.c.l.b16 %v2154
  %v2258 = vunpack.c.h.b16 %v2154
  %v2259 = vunpack.c.l.b16 %v2155
  %v2260 = vunpack.c.h.b16 %v2155
  %v2261 = vunpack.c.l.b16 %v2156
  %v2262 = vunpack.c.h.b16 %v2156
  %v2263 = vunpack.c.l.b16 %v2157
  %v2264 = vunpack.c.h.b16 %v2157
  %v2265 = vunpack.c.l.b16 %v2158
  %v2266 = vunpack.c.h.b16 %v2158
  %v2267 = vunpack.c.l.b16 %v2159
  %v2268 = vunpack.c.h.b16 %v2159
  %v2269 = vunpack.c.l.b16 %v2160
  %v2270 = vunpack.c.h.b16 %v2160
  %v2271 = vunpack.c.l.b16 %v2161
  %v2272 = vunpack.c.h.b16 %v2161
  %v2273 = vunpack.c.l.b16 %v2162
  %v2274 = vunpack.c.h.b16 %v2162
  %v2275 = vunpack.c.l.b16 %v2163
  %v2276 = vunpack.c.h.b16 %v2163
  %v2277 = vunpack.c.l.b16 %v2164
  %v2278 = vunpack.c.h.b16 %v2164
  %v2279 = vunpack.c.l.b16 %v2165
  %v2280 = vunpack.c.h.b16 %v2165
  %v2281 = vunpack.c.l.b16 %v2166
  %v2282 = vunpack.c.h.b16 %v2166
  %v2283 = vunpack.c.l.b16 %v2167
  %v2284 = vunpack.c.h.b16 %v2167
  %v2285 = vunpack.c.l.b16 %v2168
  %v2286 = vunpack.c.h.b16 %v2168
  %v2287 = vpack.c.b16 %v2227, %v2223
  %v2288 = vpack.c.b16 %v2228, %v2224
  %v2289 = vpack.c.b16 %v2229, %v2225
  %v2290 = vpack.c.b16 %v2230, %v2226
  %v2291 = vpack.c.b16 %v2235, %v2231
  %v2292 = vpack.c.b16 %v2236, %v2232
  %v2293 = vpack.c.b16 %v2237, %v2233
  %v2294 = vpack.c.b16 %v2238, %v2234
  %v2295 = vpack.c.b16 %v2243, %v2239
  %v2296 = vpack.c.b16 %v2244, %v2240
  %v2297 = vpack.c.b16 %v2245, %v2241
  %v2298 = vpack.c.b16 %v2246, %v2242
  %v2299 = vpack.c.b16 %v2251, %v2247
  %v2300 = vpack.c.b16 %v2252, %v2248
  %v2301 = vpack.c.b16 %v2253, %v2249
  %v2302 = vpack.c.b16 %v2254, %v2250
  %v2303 = vpack.c.b16 %v2259, %v2255
  %v2304 = vpack.c.b16 %v2260, %v2256
  %v2305 = vpack.c.b16 %v2261, %v2257
  %v2306 = vpack.c.b16 %v2262, %v2258
  %v2307 = vpack.c.b16 %v2267, %v2263
  %v2308 = vpack.c.b16 %v2268, %v2264
  %v2309 = vpack.c.b16 %v2269, %v2265
  %v2310 = vpack.c.b16 %v2270, %v2266
  %v2311 = vpack.c.b16 %v2275, %v2271
  %v2312 = vpack.c.b16 %v2276, %v2272
  %v2313 = vpack.c.b16 %v2277, %v2273
  %v2314 = vpack.c.b16 %v2278, %v2274
  %v2315 = vpack.c.b16 %v2283, %v2279
  %v2316 = vpack.c.b16 %v2284, %v2280
  %v2317 = vpack.c.b16 %v2285, %v2281
  %v2318 = vpack.c.b16 %v2286, %v2282
  %2351 = vmatprep.subr.bf16.mxu0 %v2288
  %2352 = vmatpush1.bf16.msra.mxu0 %v2287
  %2353 = vmatprep.subr.bf16.mxu0 %v2292
  %2354 = vmatpush1.bf16.msra.mxu0 %v2291
  %2355 = vmatprep.subr.bf16.mxu0 %v2296
  %2356 = vmatpush1.bf16.msra.mxu0 %v2295
  %2357 = vmatprep.subr.bf16.mxu0 %v2300
  %2358 = vmatpush1.bf16.msra.mxu0 %v2299
  %2359 = vmatprep.subr.bf16.mxu0 %v2304
  %2360 = vmatpush1.bf16.msra.mxu0 %v2303
  %2361 = vmatprep.subr.bf16.mxu0 %v2308
  %2362 = vmatpush1.bf16.msra.mxu0 %v2307
  %2363 = vmatprep.subr.bf16.mxu0 %v2312
  %2364 = vmatpush1.bf16.msra.mxu0 %v2311
  %2365 = vmatprep.subr.bf16.mxu0 %v2316
  %2366 = vmatpush1.bf16.msra.mxu0 %v2315
  %2367 = vmatprep.subr.bf16.mxu0 0
  %2368 = vmatpush1.bf16.msra.mxu0 0
  %2369 = vmatprep.subr.bf16.mxu0 0
  %2370 = vmatpush1.bf16.msra.mxu0 0
  %2371 = vmatprep.subr.bf16.mxu0 0
  %2372 = vmatpush1.bf16.msra.mxu0 0
  %2373 = vmatprep.subr.bf16.mxu0 0
  %2374 = vmatpush1.bf16.msra.mxu0 0
  %2375 = vmatprep.subr.bf16.mxu0 0
  %2376 = vmatpush1.bf16.msra.mxu0 0
  %2377 = vmatprep.subr.bf16.mxu0 0
  %2378 = vmatpush1.bf16.msra.mxu0 0
  %2379 = vmatprep.subr.bf16.mxu0 0
  %2380 = vmatpush1.bf16.msra.mxu0 0
  %2381 = vmatprep.subr.bf16.mxu0 0
  %2382 = vmatpush1.bf16.msra.mxu0 0
  %2383 = vmatprep.mubr.bf16.mxu0 0
  %2384 = vmatmul.mubr.bf16.gmra.mrb[0].mxu0 %v2136
  %v2385 = vpop.f32.mrb[0].mxu0
  %v2386 = vadd.f32 %v2174, %v2385
  %v2387 = vpop.f32.mrb[0].mxu0
  %v2388 = vadd.f32 %v2178, %v2387
  %v2389 = vpop.f32.mrb[0].mxu0
  %v2390 = vadd.f32 %v2174, %v2389
  %v2391 = vpop.f32.mrb[0].mxu0
  %v2392 = vadd.f32 %v2178, %v2391
  %2393 = vdwg.mxu0
  %2394 = vmatprep.subr.bf16.mxu0 %v2290
  %2395 = vmatpush1.bf16.msra.mxu0 %v2289
  %2396 = vmatprep.subr.bf16.mxu0 %v2294
  %2397 = vmatpush1.bf16.msra.mxu0 %v2293
  %2398 = vmatprep.subr.bf16.mxu0 %v2298
  %2399 = vmatpush1.bf16.msra.mxu0 %v2297
  %2400 = vmatprep.subr.bf16.mxu0 %v2302
  %2401 = vmatpush1.bf16.msra.mxu0 %v2301
  %2402 = vmatprep.subr.bf16.mxu0 %v2306
  %2403 = vmatpush1.bf16.msra.mxu0 %v2305
  %2404 = vmatprep.subr.bf16.mxu0 %v2310
  %2405 = vmatpush1.bf16.msra.mxu0 %v2309
  %2406 = vmatprep.subr.bf16.mxu0 %v2314
  %2407 = vmatpush1.bf16.msra.mxu0 %v2313
  %2408 = vmatprep.subr.bf16.mxu0 %v2318
  %2409 = vmatpush1.bf16.msra.mxu0 %v2317
  %2410 = vmatprep.subr.bf16.mxu0 0
  %2411 = vmatpush1.bf16.msra.mxu0 0
  %2412 = vmatprep.subr.bf16.mxu0 0
  %2413 = vmatpush1.bf16.msra.mxu0 0
  %2414 = vmatprep.subr.bf16.mxu0 0
  %2415 = vmatpush1.bf16.msra.mxu0 0
  %2416 = vmatprep.subr.bf16.mxu0 0
  %2417 = vmatpush1.bf16.msra.mxu0 0
  %2418 = vmatprep.subr.bf16.mxu0 0
  %2419 = vmatpush1.bf16.msra.mxu0 0
  %2420 = vmatprep.subr.bf16.mxu0 0
  %2421 = vmatpush1.bf16.msra.mxu0 0
  %2422 = vmatprep.subr.bf16.mxu0 0
  %2423 = vmatpush1.bf16.msra.mxu0 0
  %2424 = vmatprep.subr.bf16.mxu0 0
  %2425 = vmatpush1.bf16.msra.mxu0 0
  %2426 = vmatprep.mubr.bf16.mxu0 0
  %2427 = vmatmul.mubr.bf16.gmra.mrb[0].mxu0 %v2136
  %v2428 = vpop.f32.mrb[0].mxu0
  %v2429 = vadd.f32 %v2182, %v2428
  %v2430 = vpop.f32.mrb[0].mxu0
  %v2431 = vadd.f32 %v2186, %v2430
  %v2432 = vpop.f32.mrb[0].mxu0
  %v2433 = vadd.f32 %v2182, %v2432
  %v2434 = vpop.f32.mrb[0].mxu0
  %v2435 = vadd.f32 %v2186, %v2434
  %2436 = vdwg.mxu0
  %v2437 = vmax.f32 %v2386, 0.0
  %v2438 = vmax.f32 %v2388, 0.0
  %v2439 = vmax.f32 %v2429, 0.0
  %v2440 = vmax.f32 %v2431, 0.0
  %v2441 = vmax.f32 %v2390, 0.0
  %v2442 = vmax.f32 %v2392, 0.0
  %v2443 = vmax.f32 %v2433, 0.0
  %v2444 = vmax.f32 %v2435, 0.0
  %v2445 = vpack.c.bf16 %v2441, %v2437
  %v2446 = vpack.c.bf16 %v2442, %v2438
  %v2447 = vpack.c.bf16 %v2443, %v2439
  %v2448 = vpack.c.bf16 %v2444, %v2440
  %v2449 = vld [vmem:[%s8] sm:$0xff]
  %v2450 = vld [vmem:[%s8 + $0x8] sm:$0xff]
  %v2451 = vld [vmem:[%s8 + $0x10] sm:$0xff]
  %v2452 = vld [vmem:[%s8 + $0x18] sm:$0xf]
  %v2453 = vld [vmem:[%s8 + $0x1c] sm:$0xff]
  %v2454 = vld [vmem:[%s8 + $0x24] sm:$0xff]
  %v2455 = vld [vmem:[%s8 + $0x2c] sm:$0xff]
  %v2456 = vld [vmem:[%s8 + $0x34] sm:$0xf]
  %v2457 = vld [vmem:[%s8 + $0x38] sm:$0xff]
  %v2458 = vld [vmem:[%s8 + $0x40] sm:$0xff]
  %v2459 = vld [vmem:[%s8 + $0x48] sm:$0xff]
  %v2460 = vld [vmem:[%s8 + $0x50] sm:$0xf]
  %v2461 = vld [vmem:[%s8 + $0x54] sm:$0xff]
  %v2462 = vld [vmem:[%s8 + $0x5c] sm:$0xff]
  %v2463 = vld [vmem:[%s8 + $0x64] sm:$0xff]
  %v2464 = vld [vmem:[%s8 + $0x6c] sm:$0xf]
  %v2465 = vld [vmem:[%s8 + $0x70] sm:$0xff]
  %v2466 = vld [vmem:[%s8 + $0x78] sm:$0xff]
  %v2467 = vld [vmem:[%s8 + $0x80] sm:$0xff]
  %v2468 = vld [vmem:[%s8 + $0x88] sm:$0xf]
  %v2469 = vld [vmem:[%s8 + $0x8c] sm:$0xff]
  %v2470 = vld [vmem:[%s8 + $0x94] sm:$0xff]
  %v2471 = vld [vmem:[%s8 + $0x9c] sm:$0xff]
  %v2472 = vld [vmem:[%s8 + $0xa4] sm:$0xf]
  %v2473 = vld [vmem:[%s8 + $0xa8] sm:$0xff]
  %v2474 = vld [vmem:[%s8 + $0xb0] sm:$0xff]
  %v2475 = vld [vmem:[%s8 + $0xb8] sm:$0xff]
  %v2476 = vld [vmem:[%s8 + $0xc0] sm:$0xf]
  %v2477 = vld [vmem:[%s8 + $0xc4] sm:$0xff]
  %v2478 = vld [vmem:[%s8 + $0xcc] sm:$0xff]
  %v2479 = vld [vmem:[%s8 + $0xd4] sm:$0xff]
  %v2480 = vld [vmem:[%s8 + $0xdc] sm:$0xf]
  %v2481 = vld [vmem:[%s8 + $0xe0] sm:$0xff]
  %v2482 = vld [vmem:[%s8 + $0xe8] sm:$0xff]
  %v2483 = vld [vmem:[%s8 + $0xf0] sm:$0xff]
  %v2484 = vld [vmem:[%s8 + $0xf8] sm:$0xf]
  %v2485 = vld [vmem:[%s8 + $0xfc] sm:$0xff]
  %v2486 = vld [vmem:[%s8 + $0x104] sm:$0xff]
  %v2487 = vld [vmem:[%s8 + $0x10c] sm:$0xff]
  %v2488 = vld [vmem:[%s8 + $0x114] sm:$0xf]
  %v2489 = vld [vmem:[%s8 + $0x118] sm:$0xff]
  %v2490 = vld [vmem:[%s8 + $0x120] sm:$0xff]
  %v2491 = vld [vmem:[%s8 + $0x128] sm:$0xff]
  %v2492 = vld [vmem:[%s8 + $0x130] sm:$0xf]
  %v2493 = vld [vmem:[%s8 + $0x134] sm:$0xff]
  %v2494 = vld [vmem:[%s8 + $0x13c] sm:$0xff]
  %v2495 = vld [vmem:[%s8 + $0x144] sm:$0xff]
  %v2496 = vld [vmem:[%s8 + $0x14c] sm:$0xf]
  %v2497 = vld [vmem:[%s8 + $0x150] sm:$0xff]
  %v2498 = vld [vmem:[%s8 + $0x158] sm:$0xff]
  %v2499 = vld [vmem:[%s8 + $0x160] sm:$0xff]
  %v2500 = vld [vmem:[%s8 + $0x168] sm:$0xf]
  %v2501 = vld [vmem:[%s8 + $0x16c] sm:$0xff]
  %v2502 = vld [vmem:[%s8 + $0x174] sm:$0xff]
  %v2503 = vld [vmem:[%s8 + $0x17c] sm:$0xff]
  %v2504 = vld [vmem:[%s8 + $0x184] sm:$0xf]
  %v2505 = vld [vmem:[%s8 + $0x188] sm:$0xff]
  %v2506 = vld [vmem:[%s8 + $0x190] sm:$0xff]
  %v2507 = vld [vmem:[%s8 + $0x198] sm:$0xff]
  %v2508 = vld [vmem:[%s8 + $0x1a0] sm:$0xf]
  %v2509 = vld [vmem:[%s8 + $0x1a4] sm:$0xff]
  %v2510 = vld [vmem:[%s8 + $0x1ac] sm:$0xff]
  %v2511 = vld [vmem:[%s8 + $0x1b4] sm:$0xff]
  %v2512 = vld [vmem:[%s8 + $0x1bc] sm:$0xf]
  %v2513 = vld [vmem:[%s8 + $0x1c0] sm:$0xff]
  %v2514 = vld [vmem:[%s8 + $0x1c8] sm:$0xff]
  %v2515 = vld [vmem:[%s8 + $0x1d0] sm:$0xff]
  %v2516 = vld [vmem:[%s8 + $0x1d8] sm:$0xf]
  %v2517 = vld [vmem:[%s8 + $0x1dc] sm:$0xff]
  %v2518 = vld [vmem:[%s8 + $0x1e4] sm:$0xff]
  %v2519 = vld [vmem:[%s8 + $0x1ec] sm:$0xff]
  %v2520 = vld [vmem:[%s8 + $0x1f4] sm:$0xf]
  %v2521 = vld [vmem:[%s8 + $0x1f8] sm:$0xff]
  %v2522 = vld [vmem:[%s8 + $0x200] sm:$0xff]
  %v2523 = vld [vmem:[%s8 + $0x208] sm:$0xff]
  %v2524 = vld [vmem:[%s8 + $0x210] sm:$0xf]
  %v2525 = vld [vmem:[%s8 + $0x214] sm:$0xff]
  %v2526 = vld [vmem:[%s8 + $0x21c] sm:$0xff]
  %v2527 = vld [vmem:[%s8 + $0x224] sm:$0xff]
  %v2528 = vld [vmem:[%s8 + $0x22c] sm:$0xf]
  %v2529 = vld [vmem:[%s8 + $0x230] sm:$0xff]
  %v2530 = vld [vmem:[%s8 + $0x238] sm:$0xff]
  %v2531 = vld [vmem:[%s8 + $0x240] sm:$0xff]
  %v2532 = vld [vmem:[%s8 + $0x248] sm:$0xf]
  %v2533 = vld [vmem:[%s8 + $0x24c] sm:$0xff]
  %v2534 = vld [vmem:[%s8 + $0x254] sm:$0xff]
  %v2535 = vld [vmem:[%s8 + $0x25c] sm:$0xff]
  %v2536 = vld [vmem:[%s8 + $0x264] sm:$0xf]
  %v2537 = vld [vmem:[%s8 + $0x268] sm:$0xff]
  %v2538 = vld [vmem:[%s8 + $0x270] sm:$0xff]
  %v2539 = vld [vmem:[%s8 + $0x278] sm:$0xff]
  %v2540 = vld [vmem:[%s8 + $0x280] sm:$0xf]
  %v2541 = vld [vmem:[%s8 + $0x284] sm:$0xff]
  %v2542 = vld [vmem:[%s8 + $0x28c] sm:$0xff]
  %v2543 = vld [vmem:[%s8 + $0x294] sm:$0xff]
  %v2544 = vld [vmem:[%s8 + $0x29c] sm:$0xf]
  %v2545 = vld [vmem:[%s8 + $0x2a0] sm:$0xff]
  %v2546 = vld [vmem:[%s8 + $0x2a8] sm:$0xff]
  %v2547 = vld [vmem:[%s8 + $0x2b0] sm:$0xff]
  %v2548 = vld [vmem:[%s8 + $0x2b8] sm:$0xf]
  %v2549 = vld [vmem:[%s8 + $0x2bc] sm:$0xff]
  %v2550 = vld [vmem:[%s8 + $0x2c4] sm:$0xff]
  %v2551 = vld [vmem:[%s8 + $0x2cc] sm:$0xff]
  %v2552 = vld [vmem:[%s8 + $0x2d4] sm:$0xf]
  %v2553 = vld [vmem:[%s8 + $0x2d8] sm:$0xff]
  %v2554 = vld [vmem:[%s8 + $0x2e0] sm:$0xff]
  %v2555 = vld [vmem:[%s8 + $0x2e8] sm:$0xff]
  %v2556 = vld [vmem:[%s8 + $0x2f0] sm:$0xf]
  %v2557 = vld [vmem:[%s8 + $0x2f4] sm:$0xff]
  %v2558 = vld [vmem:[%s8 + $0x2fc] sm:$0xff]
  %v2559 = vld [vmem:[%s8 + $0x304] sm:$0xff]
  %v2560 = vld [vmem:[%s8 + $0x30c] sm:$0xf]
  %v2561 = vld [vmem:[%s8 + $0x310] sm:$0xff]
  %v2562 = vld [vmem:[%s8 + $0x318] sm:$0xff]
  %v2563 = vld [vmem:[%s8 + $0x320] sm:$0xff]
  %v2564 = vld [vmem:[%s8 + $0x328] sm:$0xf]
  %v2565 = vld [vmem:[%s8 + $0x32c] sm:$0xff]
  %v2566 = vld [vmem:[%s8 + $0x334] sm:$0xff]
  %v2567 = vld [vmem:[%s8 + $0x33c] sm:$0xff]
  %v2568 = vld [vmem:[%s8 + $0x344] sm:$0xf]
  %v2569 = vld [vmem:[%s8 + $0x348] sm:$0xff]
  %v2570 = vld [vmem:[%s8 + $0x350] sm:$0xff]
  %v2571 = vld [vmem:[%s8 + $0x358] sm:$0xff]
  %v2572 = vld [vmem:[%s8 + $0x360] sm:$0xf]
  %v2573 = vld [vmem:[%s8 + $0x364] sm:$0xff]
  %v2574 = vld [vmem:[%s8 + $0x36c] sm:$0xff]
  %v2575 = vld [vmem:[%s8 + $0x374] sm:$0xff]
  %v2576 = vld [vmem:[%s8 + $0x37c] sm:$0xf]
  %v2577 = vld [vmem:[%s8 + $0x380] sm:$0xff]
  %v2578 = vld [vmem:[%s8 + $0x388] sm:$0xff]
  %v2579 = vld [vmem:[%s8 + $0x390] sm:$0xff]
  %v2580 = vld [vmem:[%s8 + $0x398] sm:$0xf]
  %v2581 = vld [vmem:[%s8 + $0x39c] sm:$0xff]
  %v2582 = vld [vmem:[%s8 + $0x3a4] sm:$0xff]
  %v2583 = vld [vmem:[%s8 + $0x3ac] sm:$0xff]
  %v2584 = vld [vmem:[%s8 + $0x3b4] sm:$0xf]
  %v2585 = vld [vmem:[%s8 + $0x3b8] sm:$0xff]
  %v2586 = vld [vmem:[%s8 + $0x3c0] sm:$0xff]
  %v2587 = vld [vmem:[%s8 + $0x3c8] sm:$0xff]
  %v2588 = vld [vmem:[%s8 + $0x3d0] sm:$0xf]
  %v2589 = vld [vmem:[%s8 + $0x3d4] sm:$0xff]
  %v2590 = vld [vmem:[%s8 + $0x3dc] sm:$0xff]
  %v2591 = vld [vmem:[%s8 + $0x3e4] sm:$0xff]
  %v2592 = vld [vmem:[%s8 + $0x3ec] sm:$0xf]
  %v2593 = vld [vmem:[%s8 + $0x3f0] sm:$0xff]
  %v2594 = vld [vmem:[%s8 + $0x3f8] sm:$0xff]
  %v2595 = vld [vmem:[%s8 + $0x400] sm:$0xff]
  %v2596 = vld [vmem:[%s8 + $0x408] sm:$0xf]
  %v2597 = vld [vmem:[%s8 + $0x40c] sm:$0xff]
  %v2598 = vld [vmem:[%s8 + $0x414] sm:$0xff]
  %v2599 = vld [vmem:[%s8 + $0x41c] sm:$0xff]
  %v2600 = vld [vmem:[%s8 + $0x424] sm:$0xf]
  %v2601 = vld [vmem:[%s8 + $0x428] sm:$0xff]
  %v2602 = vld [vmem:[%s8 + $0x430] sm:$0xff]
  %v2603 = vld [vmem:[%s8 + $0x438] sm:$0xff]
  %v2604 = vld [vmem:[%s8 + $0x440] sm:$0xf]
  %v2605 = vld [vmem:[%s8 + $0x444] sm:$0xff]
  %v2606 = vld [vmem:[%s8 + $0x44c] sm:$0xff]
  %v2607 = vld [vmem:[%s8 + $0x454] sm:$0xff]
  %v2608 = vld [vmem:[%s8 + $0x45c] sm:$0xf]
  %v2609 = vld [vmem:[%s8 + $0x460] sm:$0xff]
  %v2610 = vld [vmem:[%s8 + $0x468] sm:$0xff]
  %v2611 = vld [vmem:[%s8 + $0x470] sm:$0xff]
  %v2612 = vld [vmem:[%s8 + $0x478] sm:$0xf]
  %v2613 = vld [vmem:[%s8 + $0x47c] sm:$0xff]
  %v2614 = vld [vmem:[%s8 + $0x484] sm:$0xff]
  %v2615 = vld [vmem:[%s8 + $0x48c] sm:$0xff]
  %v2616 = vld [vmem:[%s8 + $0x494] sm:$0xf]
  %v2617 = vld [vmem:[%s8 + $0x498] sm:$0xff]
  %v2618 = vld [vmem:[%s8 + $0x4a0] sm:$0xff]
  %v2619 = vld [vmem:[%s8 + $0x4a8] sm:$0xff]
  %v2620 = vld [vmem:[%s8 + $0x4b0] sm:$0xf]
  %v2621 = vld [vmem:[%s8 + $0x4b4] sm:$0xff]
  %v2622 = vld [vmem:[%s8 + $0x4bc] sm:$0xff]
  %v2623 = vld [vmem:[%s8 + $0x4c4] sm:$0xff]
  %v2624 = vld [vmem:[%s8 + $0x4cc] sm:$0xf]
  %v2625 = vld [vmem:[%s8 + $0x4d0] sm:$0xff]
  %v2626 = vld [vmem:[%s8 + $0x4d8] sm:$0xff]
  %v2627 = vld [vmem:[%s8 + $0x4e0] sm:$0xff]
  %v2628 = vld [vmem:[%s8 + $0x4e8] sm:$0xf]
  %v2629 = vld [vmem:[%s8 + $0x4ec] sm:$0xff]
  %v2630 = vld [vmem:[%s8 + $0x4f4] sm:$0xff]
  %v2631 = vld [vmem:[%s8 + $0x4fc] sm:$0xff]
  %v2632 = vld [vmem:[%s8 + $0x504] sm:$0xf]
  %v2633 = vld [vmem:[%s8 + $0x508] sm:$0xff]
  %v2634 = vld [vmem:[%s8 + $0x510] sm:$0xff]
  %v2635 = vld [vmem:[%s8 + $0x518] sm:$0xff]
  %v2636 = vld [vmem:[%s8 + $0x520] sm:$0xf]
  %v2637 = vld [vmem:[%s8 + $0x524] sm:$0xff]
  %v2638 = vld [vmem:[%s8 + $0x52c] sm:$0xff]
  %v2639 = vld [vmem:[%s8 + $0x534] sm:$0xff]
  %v2640 = vld [vmem:[%s8 + $0x53c] sm:$0xf]
  %v2641 = vld [vmem:[%s8 + $0x540] sm:$0xff]
  %v2642 = vld [vmem:[%s8 + $0x548] sm:$0xff]
  %v2643 = vld [vmem:[%s8 + $0x550] sm:$0xff]
  %v2644 = vld [vmem:[%s8 + $0x558] sm:$0xf]
  %v2645 = vld [vmem:[%s8 + $0x55c] sm:$0xff]
  %v2646 = vld [vmem:[%s8 + $0x564] sm:$0xff]
  %v2647 = vld [vmem:[%s8 + $0x56c] sm:$0xff]
  %v2648 = vld [vmem:[%s8 + $0x574] sm:$0xf]
  %v2649 = vld [vmem:[%s8 + $0x578] sm:$0xff]
  %v2650 = vld [vmem:[%s8 + $0x580] sm:$0xff]
  %v2651 = vld [vmem:[%s8 + $0x588] sm:$0xff]
  %v2652 = vld [vmem:[%s8 + $0x590] sm:$0xf]
  %v2653 = vld [vmem:[%s8 + $0x594] sm:$0xff]
  %v2654 = vld [vmem:[%s8 + $0x59c] sm:$0xff]
  %v2655 = vld [vmem:[%s8 + $0x5a4] sm:$0xff]
  %v2656 = vld [vmem:[%s8 + $0x5ac] sm:$0xf]
  %v2657 = vld [vmem:[%s8 + $0x5b0] sm:$0xff]
  %v2658 = vld [vmem:[%s8 + $0x5b8] sm:$0xff]
  %v2659 = vld [vmem:[%s8 + $0x5c0] sm:$0xff]
  %v2660 = vld [vmem:[%s8 + $0x5c8] sm:$0xf]
  %v2661 = vld [vmem:[%s8 + $0x5cc] sm:$0xff]
  %v2662 = vld [vmem:[%s8 + $0x5d4] sm:$0xff]
  %v2663 = vld [vmem:[%s8 + $0x5dc] sm:$0xff]
  %v2664 = vld [vmem:[%s8 + $0x5e4] sm:$0xf]
  %v2665 = vld [vmem:[%s8 + $0x5e8] sm:$0xff]
  %v2666 = vld [vmem:[%s8 + $0x5f0] sm:$0xff]
  %v2667 = vld [vmem:[%s8 + $0x5f8] sm:$0xff]
  %v2668 = vld [vmem:[%s8 + $0x600] sm:$0xf]
  %v2669 = vld [vmem:[%s8 + $0x604] sm:$0xff]
  %v2670 = vld [vmem:[%s8 + $0x60c] sm:$0xff]
  %v2671 = vld [vmem:[%s8 + $0x614] sm:$0xff]
  %v2672 = vld [vmem:[%s8 + $0x61c] sm:$0xf]
  %v2673 = vld [vmem:[%s8 + $0x620] sm:$0xff]
  %v2674 = vld [vmem:[%s8 + $0x628] sm:$0xff]
  %v2675 = vld [vmem:[%s8 + $0x630] sm:$0xff]
  %v2676 = vld [vmem:[%s8 + $0x638] sm:$0xf]
  %v2677 = vld [vmem:[%s8 + $0x63c] sm:$0xff]
  %v2678 = vld [vmem:[%s8 + $0x644] sm:$0xff]
  %v2679 = vld [vmem:[%s8 + $0x64c] sm:$0xff]
  %v2680 = vld [vmem:[%s8 + $0x654] sm:$0xf]
  %v2681 = vld [vmem:[%s8 + $0x658] sm:$0xff]
  %v2682 = vld [vmem:[%s8 + $0x660] sm:$0xff]
  %v2683 = vld [vmem:[%s8 + $0x668] sm:$0xff]
  %v2684 = vld [vmem:[%s8 + $0x670] sm:$0xf]
  %v2685 = vld [vmem:[%s8 + $0x674] sm:$0xff]
  %v2686 = vld [vmem:[%s8 + $0x67c] sm:$0xff]
  %v2687 = vld [vmem:[%s8 + $0x684] sm:$0xff]
  %v2688 = vld [vmem:[%s8 + $0x68c] sm:$0xf]
  %v2689 = vld [vmem:[%s8 + $0x690] sm:$0xff]
  %v2690 = vld [vmem:[%s8 + $0x698] sm:$0xff]
  %v2691 = vld [vmem:[%s8 + $0x6a0] sm:$0xff]
  %v2692 = vld [vmem:[%s8 + $0x6a8] sm:$0xf]
  %v2693 = vld [vmem:[%s8 + $0x6ac] sm:$0xff]
  %v2694 = vld [vmem:[%s8 + $0x6b4] sm:$0xff]
  %v2695 = vld [vmem:[%s8 + $0x6bc] sm:$0xff]
  %v2696 = vld [vmem:[%s8 + $0x6c4] sm:$0xf]
  %v2697 = vld [vmem:[%s8 + $0x6c8] sm:$0xff]
  %v2698 = vld [vmem:[%s8 + $0x6d0] sm:$0xff]
  %v2699 = vld [vmem:[%s8 + $0x6d8] sm:$0xff]
  %v2700 = vld [vmem:[%s8 + $0x6e0] sm:$0xf]
  %v2701 = vld [vmem:[%s8 + $0x6e4] sm:$0xff]
  %v2702 = vld [vmem:[%s8 + $0x6ec] sm:$0xff]
  %v2703 = vld [vmem:[%s8 + $0x6f4] sm:$0xff]
  %v2704 = vld [vmem:[%s8 + $0x6fc] sm:$0xf]
  %v2705 = vld [vmem:[%s9] sm:$0x7f]
  %v2707 = vlaneseq
  %v2708 = vshrl.u32 %v2707, 7
  %v2709 = vsub.s32 0, %v2708
  %v2710 = vrot.slane %v2705, %v2709
  %v2711 = vlaneseq
  %v2712 = vshrl.u32 %v2711, 7
  %v2713 = vsub.s32 1, %v2712
  %v2714 = vrot.slane %v2705, %v2713
  %v2715 = vlaneseq
  %v2716 = vshrl.u32 %v2715, 7
  %v2717 = vsub.s32 2, %v2716
  %v2718 = vrot.slane %v2705, %v2717
  %v2719 = vlaneseq
  %v2720 = vshrl.u32 %v2719, 7
  %v2721 = vsub.s32 3, %v2720
  %v2722 = vrot.slane %v2705, %v2721
  %v2723 = vlaneseq
  %v2724 = vshrl.u32 %v2723, 7
  %v2725 = vsub.s32 4, %v2724
  %v2726 = vrot.slane %v2705, %v2725
  %v2727 = vlaneseq
  %v2728 = vshrl.u32 %v2727, 7
  %v2729 = vsub.s32 5, %v2728
  %v2730 = vrot.slane %v2705, %v2729
  %v2731 = vlaneseq
  %v2732 = vshrl.u32 %v2731, 7
  %v2733 = vsub.s32 6, %v2732
  %v2734 = vrot.slane %v2705, %v2733
  %v2998 = vunpack.c.l.b16 %v2449
  %v2999 = vunpack.c.h.b16 %v2449
  %v3000 = vunpack.c.l.b16 %v2450
  %v3001 = vunpack.c.h.b16 %v2450
  %v3002 = vunpack.c.l.b16 %v2451
  %v3003 = vunpack.c.h.b16 %v2451
  %v3004 = vunpack.c.l.b16 %v2452
  %v3005 = vunpack.c.l.b16 %v2453
  %v3006 = vunpack.c.h.b16 %v2453
  %v3007 = vunpack.c.l.b16 %v2454
  %v3008 = vunpack.c.h.b16 %v2454
  %v3009 = vunpack.c.l.b16 %v2455
  %v3010 = vunpack.c.h.b16 %v2455
  %v3011 = vunpack.c.l.b16 %v2456
  %v3012 = vunpack.c.l.b16 %v2457
  %v3013 = vunpack.c.h.b16 %v2457
  %v3014 = vunpack.c.l.b16 %v2458
  %v3015 = vunpack.c.h.b16 %v2458
  %v3016 = vunpack.c.l.b16 %v2459
  %v3017 = vunpack.c.h.b16 %v2459
  %v3018 = vunpack.c.l.b16 %v2460
  %v3019 = vunpack.c.l.b16 %v2461
  %v3020 = vunpack.c.h.b16 %v2461
  %v3021 = vunpack.c.l.b16 %v2462
  %v3022 = vunpack.c.h.b16 %v2462
  %v3023 = vunpack.c.l.b16 %v2463
  %v3024 = vunpack.c.h.b16 %v2463
  %v3025 = vunpack.c.l.b16 %v2464
  %v3026 = vunpack.c.l.b16 %v2465
  %v3027 = vunpack.c.h.b16 %v2465
  %v3028 = vunpack.c.l.b16 %v2466
  %v3029 = vunpack.c.h.b16 %v2466
  %v3030 = vunpack.c.l.b16 %v2467
  %v3031 = vunpack.c.h.b16 %v2467
  %v3032 = vunpack.c.l.b16 %v2468
  %v3033 = vunpack.c.l.b16 %v2469
  %v3034 = vunpack.c.h.b16 %v2469
  %v3035 = vunpack.c.l.b16 %v2470
  %v3036 = vunpack.c.h.b16 %v2470
  %v3037 = vunpack.c.l.b16 %v2471
  %v3038 = vunpack.c.h.b16 %v2471
  %v3039 = vunpack.c.l.b16 %v2472
  %v3040 = vunpack.c.l.b16 %v2473
  %v3041 = vunpack.c.h.b16 %v2473
  %v3042 = vunpack.c.l.b16 %v2474
  %v3043 = vunpack.c.h.b16 %v2474
  %v3044 = vunpack.c.l.b16 %v2475
  %v3045 = vunpack.c.h.b16 %v2475
  %v3046 = vunpack.c.l.b16 %v2476
  %v3047 = vunpack.c.l.b16 %v2477
  %v3048 = vunpack.c.h.b16 %v2477
  %v3049 = vunpack.c.l.b16 %v2478
  %v3050 = vunpack.c.h.b16 %v2478
  %v3051 = vunpack.c.l.b16 %v2479
  %v3052 = vunpack.c.h.b16 %v2479
  %v3053 = vunpack.c.l.b16 %v2480
  %v3054 = vunpack.c.l.b16 %v2481
  %v3055 = vunpack.c.h.b16 %v2481
  %v3056 = vunpack.c.l.b16 %v2482
  %v3057 = vunpack.c.h.b16 %v2482
  %v3058 = vunpack.c.l.b16 %v2483
  %v3059 = vunpack.c.h.b16 %v2483
  %v3060 = vunpack.c.l.b16 %v2484
  %v3061 = vunpack.c.l.b16 %v2485
  %v3062 = vunpack.c.h.b16 %v2485
  %v3063 = vunpack.c.l.b16 %v2486
  %v3064 = vunpack.c.h.b16 %v2486
  %v3065 = vunpack.c.l.b16 %v2487
  %v3066 = vunpack.c.h.b16 %v2487
  %v3067 = vunpack.c.l.b16 %v2488
  %v3068 = vunpack.c.l.b16 %v2489
  %v3069 = vunpack.c.h.b16 %v2489
  %v3070 = vunpack.c.l.b16 %v2490
  %v3071 = vunpack.c.h.b16 %v2490
  %v3072 = vunpack.c.l.b16 %v2491
  %v3073 = vunpack.c.h.b16 %v2491
  %v3074 = vunpack.c.l.b16 %v2492
  %v3075 = vunpack.c.l.b16 %v2493
  %v3076 = vunpack.c.h.b16 %v2493
  %v3077 = vunpack.c.l.b16 %v2494
  %v3078 = vunpack.c.h.b16 %v2494
  %v3079 = vunpack.c.l.b16 %v2495
  %v3080 = vunpack.c.h.b16 %v2495
  %v3081 = vunpack.c.l.b16 %v2496
  %v3082 = vunpack.c.l.b16 %v2497
  %v3083 = vunpack.c.h.b16 %v2497
  %v3084 = vunpack.c.l.b16 %v2498
  %v3085 = vunpack.c.h.b16 %v2498
  %v3086 = vunpack.c.l.b16 %v2499
  %v3087 = vunpack.c.h.b16 %v2499
  %v3088 = vunpack.c.l.b16 %v2500
  %v3089 = vunpack.c.l.b16 %v2501
  %v3090 = vunpack.c.h.b16 %v2501
  %v3091 = vunpack.c.l.b16 %v2502
  %v3092 = vunpack.c.h.b16 %v2502
  %v3093 = vunpack.c.l.b16 %v2503
  %v3094 = vunpack.c.h.b16 %v2503
  %v3095 = vunpack.c.l.b16 %v2504
  %v3096 = vunpack.c.l.b16 %v2505
  %v3097 = vunpack.c.h.b16 %v2505
  %v3098 = vunpack.c.l.b16 %v2506
  %v3099 = vunpack.c.h.b16 %v2506
  %v3100 = vunpack.c.l.b16 %v2507
  %v3101 = vunpack.c.h.b16 %v2507
  %v3102 = vunpack.c.l.b16 %v2508
  %v3103 = vunpack.c.l.b16 %v2509
  %v3104 = vunpack.c.h.b16 %v2509
  %v3105 = vunpack.c.l.b16 %v2510
  %v3106 = vunpack.c.h.b16 %v2510
  %v3107 = vunpack.c.l.b16 %v2511
  %v3108 = vunpack.c.h.b16 %v2511
  %v3109 = vunpack.c.l.b16 %v2512
  %v3110 = vunpack.c.l.b16 %v2513
  %v3111 = vunpack.c.h.b16 %v2513
  %v3112 = vunpack.c.l.b16 %v2514
  %v3113 = vunpack.c.h.b16 %v2514
  %v3114 = vunpack.c.l.b16 %v2515
  %v3115 = vunpack.c.h.b16 %v2515
  %v3116 = vunpack.c.l.b16 %v2516
  %v3117 = vunpack.c.l.b16 %v2517
  %v3118 = vunpack.c.h.b16 %v2517
  %v3119 = vunpack.c.l.b16 %v2518
  %v3120 = vunpack.c.h.b16 %v2518
  %v3121 = vunpack.c.l.b16 %v2519
  %v3122 = vunpack.c.h.b16 %v2519
  %v3123 = vunpack.c.l.b16 %v2520
  %v3124 = vunpack.c.l.b16 %v2521
  %v3125 = vunpack.c.h.b16 %v2521
  %v3126 = vunpack.c.l.b16 %v2522
  %v3127 = vunpack.c.h.b16 %v2522
  %v3128 = vunpack.c.l.b16 %v2523
  %v3129 = vunpack.c.h.b16 %v2523
  %v3130 = vunpack.c.l.b16 %v2524
  %v3131 = vunpack.c.l.b16 %v2525
  %v3132 = vunpack.c.h.b16 %v2525
  %v3133 = vunpack.c.l.b16 %v2526
  %v3134 = vunpack.c.h.b16 %v2526
  %v3135 = vunpack.c.l.b16 %v2527
  %v3136 = vunpack.c.h.b16 %v2527
  %v3137 = vunpack.c.l.b16 %v2528
  %v3138 = vunpack.c.l.b16 %v2529
  %v3139 = vunpack.c.h.b16 %v2529
  %v3140 = vunpack.c.l.b16 %v2530
  %v3141 = vunpack.c.h.b16 %v2530
  %v3142 = vunpack.c.l.b16 %v2531
  %v3143 = vunpack.c.h.b16 %v2531
  %v3144 = vunpack.c.l.b16 %v2532
  %v3145 = vunpack.c.l.b16 %v2533
  %v3146 = vunpack.c.h.b16 %v2533
  %v3147 = vunpack.c.l.b16 %v2534
  %v3148 = vunpack.c.h.b16 %v2534
  %v3149 = vunpack.c.l.b16 %v2535
  %v3150 = vunpack.c.h.b16 %v2535
  %v3151 = vunpack.c.l.b16 %v2536
  %v3152 = vunpack.c.l.b16 %v2537
  %v3153 = vunpack.c.h.b16 %v2537
  %v3154 = vunpack.c.l.b16 %v2538
  %v3155 = vunpack.c.h.b16 %v2538
  %v3156 = vunpack.c.l.b16 %v2539
  %v3157 = vunpack.c.h.b16 %v2539
  %v3158 = vunpack.c.l.b16 %v2540
  %v3159 = vunpack.c.l.b16 %v2541
  %v3160 = vunpack.c.h.b16 %v2541
  %v3161 = vunpack.c.l.b16 %v2542
  %v3162 = vunpack.c.h.b16 %v2542
  %v3163 = vunpack.c.l.b16 %v2543
  %v3164 = vunpack.c.h.b16 %v2543
  %v3165 = vunpack.c.l.b16 %v2544
  %v3166 = vunpack.c.l.b16 %v2545
  %v3167 = vunpack.c.h.b16 %v2545
  %v3168 = vunpack.c.l.b16 %v2546
  %v3169 = vunpack.c.h.b16 %v2546
  %v3170 = vunpack.c.l.b16 %v2547
  %v3171 = vunpack.c.h.b16 %v2547
  %v3172 = vunpack.c.l.b16 %v2548
  %v3173 = vunpack.c.l.b16 %v2549
  %v3174 = vunpack.c.h.b16 %v2549
  %v3175 = vunpack.c.l.b16 %v2550
  %v3176 = vunpack.c.h.b16 %v2550
  %v3177 = vunpack.c.l.b16 %v2551
  %v3178 = vunpack.c.h.b16 %v2551
  %v3179 = vunpack.c.l.b16 %v2552
  %v3180 = vunpack.c.l.b16 %v2553
  %v3181 = vunpack.c.h.b16 %v2553
  %v3182 = vunpack.c.l.b16 %v2554
  %v3183 = vunpack.c.h.b16 %v2554
  %v3184 = vunpack.c.l.b16 %v2555
  %v3185 = vunpack.c.h.b16 %v2555
  %v3186 = vunpack.c.l.b16 %v2556
  %v3187 = vunpack.c.l.b16 %v2557
  %v3188 = vunpack.c.h.b16 %v2557
  %v3189 = vunpack.c.l.b16 %v2558
  %v3190 = vunpack.c.h.b16 %v2558
  %v3191 = vunpack.c.l.b16 %v2559
  %v3192 = vunpack.c.h.b16 %v2559
  %v3193 = vunpack.c.l.b16 %v2560
  %v3194 = vunpack.c.l.b16 %v2561
  %v3195 = vunpack.c.h.b16 %v2561
  %v3196 = vunpack.c.l.b16 %v2562
  %v3197 = vunpack.c.h.b16 %v2562
  %v3198 = vunpack.c.l.b16 %v2563
  %v3199 = vunpack.c.h.b16 %v2563
  %v3200 = vunpack.c.l.b16 %v2564
  %v3201 = vunpack.c.l.b16 %v2565
  %v3202 = vunpack.c.h.b16 %v2565
  %v3203 = vunpack.c.l.b16 %v2566
  %v3204 = vunpack.c.h.b16 %v2566
  %v3205 = vunpack.c.l.b16 %v2567
  %v3206 = vunpack.c.h.b16 %v2567
  %v3207 = vunpack.c.l.b16 %v2568
  %v3208 = vunpack.c.l.b16 %v2569
  %v3209 = vunpack.c.h.b16 %v2569
  %v3210 = vunpack.c.l.b16 %v2570
  %v3211 = vunpack.c.h.b16 %v2570
  %v3212 = vunpack.c.l.b16 %v2571
  %v3213 = vunpack.c.h.b16 %v2571
  %v3214 = vunpack.c.l.b16 %v2572
  %v3215 = vunpack.c.l.b16 %v2573
  %v3216 = vunpack.c.h.b16 %v2573
  %v3217 = vunpack.c.l.b16 %v2574
  %v3218 = vunpack.c.h.b16 %v2574
  %v3219 = vunpack.c.l.b16 %v2575
  %v3220 = vunpack.c.h.b16 %v2575
  %v3221 = vunpack.c.l.b16 %v2576
  %v3222 = vunpack.c.l.b16 %v2577
  %v3223 = vunpack.c.h.b16 %v2577
  %v3224 = vunpack.c.l.b16 %v2578
  %v3225 = vunpack.c.h.b16 %v2578
  %v3226 = vunpack.c.l.b16 %v2579
  %v3227 = vunpack.c.h.b16 %v2579
  %v3228 = vunpack.c.l.b16 %v2580
  %v3229 = vunpack.c.l.b16 %v2581
  %v3230 = vunpack.c.h.b16 %v2581
  %v3231 = vunpack.c.l.b16 %v2582
  %v3232 = vunpack.c.h.b16 %v2582
  %v3233 = vunpack.c.l.b16 %v2583
  %v3234 = vunpack.c.h.b16 %v2583
  %v3235 = vunpack.c.l.b16 %v2584
  %v3236 = vunpack.c.l.b16 %v2585
  %v3237 = vunpack.c.h.b16 %v2585
  %v3238 = vunpack.c.l.b16 %v2586
  %v3239 = vunpack.c.h.b16 %v2586
  %v3240 = vunpack.c.l.b16 %v2587
  %v3241 = vunpack.c.h.b16 %v2587
  %v3242 = vunpack.c.l.b16 %v2588
  %v3243 = vunpack.c.l.b16 %v2589
  %v3244 = vunpack.c.h.b16 %v2589
  %v3245 = vunpack.c.l.b16 %v2590
  %v3246 = vunpack.c.h.b16 %v2590
  %v3247 = vunpack.c.l.b16 %v2591
  %v3248 = vunpack.c.h.b16 %v2591
  %v3249 = vunpack.c.l.b16 %v2592
  %v3250 = vunpack.c.l.b16 %v2593
  %v3251 = vunpack.c.h.b16 %v2593
  %v3252 = vunpack.c.l.b16 %v2594
  %v3253 = vunpack.c.h.b16 %v2594
  %v3254 = vunpack.c.l.b16 %v2595
  %v3255 = vunpack.c.h.b16 %v2595
  %v3256 = vunpack.c.l.b16 %v2596
  %v3257 = vunpack.c.l.b16 %v2597
  %v3258 = vunpack.c.h.b16 %v2597
  %v3259 = vunpack.c.l.b16 %v2598
  %v3260 = vunpack.c.h.b16 %v2598
  %v3261 = vunpack.c.l.b16 %v2599
  %v3262 = vunpack.c.h.b16 %v2599
  %v3263 = vunpack.c.l.b16 %v2600
  %v3264 = vunpack.c.l.b16 %v2601
  %v3265 = vunpack.c.h.b16 %v2601
  %v3266 = vunpack.c.l.b16 %v2602
  %v3267 = vunpack.c.h.b16 %v2602
  %v3268 = vunpack.c.l.b16 %v2603
  %v3269 = vunpack.c.h.b16 %v2603
  %v3270 = vunpack.c.l.b16 %v2604
  %v3271 = vunpack.c.l.b16 %v2605
  %v3272 = vunpack.c.h.b16 %v2605
  %v3273 = vunpack.c.l.b16 %v2606
  %v3274 = vunpack.c.h.b16 %v2606
  %v3275 = vunpack.c.l.b16 %v2607
  %v3276 = vunpack.c.h.b16 %v2607
  %v3277 = vunpack.c.l.b16 %v2608
  %v3278 = vunpack.c.l.b16 %v2609
  %v3279 = vunpack.c.h.b16 %v2609
  %v3280 = vunpack.c.l.b16 %v2610
  %v3281 = vunpack.c.h.b16 %v2610
  %v3282 = vunpack.c.l.b16 %v2611
  %v3283 = vunpack.c.h.b16 %v2611
  %v3284 = vunpack.c.l.b16 %v2612
  %v3285 = vunpack.c.l.b16 %v2613
  %v3286 = vunpack.c.h.b16 %v2613
  %v3287 = vunpack.c.l.b16 %v2614
  %v3288 = vunpack.c.h.b16 %v2614
  %v3289 = vunpack.c.l.b16 %v2615
  %v3290 = vunpack.c.h.b16 %v2615
  %v3291 = vunpack.c.l.b16 %v2616
  %v3292 = vunpack.c.l.b16 %v2617
  %v3293 = vunpack.c.h.b16 %v2617
  %v3294 = vunpack.c.l.b16 %v2618
  %v3295 = vunpack.c.h.b16 %v2618
  %v3296 = vunpack.c.l.b16 %v2619
  %v3297 = vunpack.c.h.b16 %v2619
  %v3298 = vunpack.c.l.b16 %v2620
  %v3299 = vunpack.c.l.b16 %v2621
  %v3300 = vunpack.c.h.b16 %v2621
  %v3301 = vunpack.c.l.b16 %v2622
  %v3302 = vunpack.c.h.b16 %v2622
  %v3303 = vunpack.c.l.b16 %v2623
  %v3304 = vunpack.c.h.b16 %v2623
  %v3305 = vunpack.c.l.b16 %v2624
  %v3306 = vunpack.c.l.b16 %v2625
  %v3307 = vunpack.c.h.b16 %v2625
  %v3308 = vunpack.c.l.b16 %v2626
  %v3309 = vunpack.c.h.b16 %v2626
  %v3310 = vunpack.c.l.b16 %v2627
  %v3311 = vunpack.c.h.b16 %v2627
  %v3312 = vunpack.c.l.b16 %v2628
  %v3313 = vunpack.c.l.b16 %v2629
  %v3314 = vunpack.c.h.b16 %v2629
  %v3315 = vunpack.c.l.b16 %v2630
  %v3316 = vunpack.c.h.b16 %v2630
  %v3317 = vunpack.c.l.b16 %v2631
  %v3318 = vunpack.c.h.b16 %v2631
  %v3319 = vunpack.c.l.b16 %v2632
  %v3320 = vunpack.c.l.b16 %v2633
  %v3321 = vunpack.c.h.b16 %v2633
  %v3322 = vunpack.c.l.b16 %v2634
  %v3323 = vunpack.c.h.b16 %v2634
  %v3324 = vunpack.c.l.b16 %v2635
  %v3325 = vunpack.c.h.b16 %v2635
  %v3326 = vunpack.c.l.b16 %v2636
  %v3327 = vunpack.c.l.b16 %v2637
  %v3328 = vunpack.c.h.b16 %v2637
  %v3329 = vunpack.c.l.b16 %v2638
  %v3330 = vunpack.c.h.b16 %v2638
  %v3331 = vunpack.c.l.b16 %v2639
  %v3332 = vunpack.c.h.b16 %v2639
  %v3333 = vunpack.c.l.b16 %v2640
  %v3334 = vunpack.c.l.b16 %v2641
  %v3335 = vunpack.c.h.b16 %v2641
  %v3336 = vunpack.c.l.b16 %v2642
  %v3337 = vunpack.c.h.b16 %v2642
  %v3338 = vunpack.c.l.b16 %v2643
  %v3339 = vunpack.c.h.b16 %v2643
  %v3340 = vunpack.c.l.b16 %v2644
  %v3341 = vunpack.c.l.b16 %v2645
  %v3342 = vunpack.c.h.b16 %v2645
  %v3343 = vunpack.c.l.b16 %v2646
  %v3344 = vunpack.c.h.b16 %v2646
  %v3345 = vunpack.c.l.b16 %v2647
  %v3346 = vunpack.c.h.b16 %v2647
  %v3347 = vunpack.c.l.b16 %v2648
  %v3348 = vunpack.c.l.b16 %v2649
  %v3349 = vunpack.c.h.b16 %v2649
  %v3350 = vunpack.c.l.b16 %v2650
  %v3351 = vunpack.c.h.b16 %v2650
  %v3352 = vunpack.c.l.b16 %v2651
  %v3353 = vunpack.c.h.b16 %v2651
  %v3354 = vunpack.c.l.b16 %v2652
  %v3355 = vunpack.c.l.b16 %v2653
  %v3356 = vunpack.c.h.b16 %v2653
  %v3357 = vunpack.c.l.b16 %v2654
  %v3358 = vunpack.c.h.b16 %v2654
  %v3359 = vunpack.c.l.b16 %v2655
  %v3360 = vunpack.c.h.b16 %v2655
  %v3361 = vunpack.c.l.b16 %v2656
  %v3362 = vunpack.c.l.b16 %v2657
  %v3363 = vunpack.c.h.b16 %v2657
  %v3364 = vunpack.c.l.b16 %v2658
  %v3365 = vunpack.c.h.b16 %v2658
  %v3366 = vunpack.c.l.b16 %v2659
  %v3367 = vunpack.c.h.b16 %v2659
  %v3368 = vunpack.c.l.b16 %v2660
  %v3369 = vunpack.c.l.b16 %v2661
  %v3370 = vunpack.c.h.b16 %v2661
  %v3371 = vunpack.c.l.b16 %v2662
  %v3372 = vunpack.c.h.b16 %v2662
  %v3373 = vunpack.c.l.b16 %v2663
  %v3374 = vunpack.c.h.b16 %v2663
  %v3375 = vunpack.c.l.b16 %v2664
  %v3376 = vunpack.c.l.b16 %v2665
  %v3377 = vunpack.c.h.b16 %v2665
  %v3378 = vunpack.c.l.b16 %v2666
  %v3379 = vunpack.c.h.b16 %v2666
  %v3380 = vunpack.c.l.b16 %v2667
  %v3381 = vunpack.c.h.b16 %v2667
  %v3382 = vunpack.c.l.b16 %v2668
  %v3383 = vunpack.c.l.b16 %v2669
  %v3384 = vunpack.c.h.b16 %v2669
  %v3385 = vunpack.c.l.b16 %v2670
  %v3386 = vunpack.c.h.b16 %v2670
  %v3387 = vunpack.c.l.b16 %v2671
  %v3388 = vunpack.c.h.b16 %v2671
  %v3389 = vunpack.c.l.b16 %v2672
  %v3390 = vunpack.c.l.b16 %v2673
  %v3391 = vunpack.c.h.b16 %v2673
  %v3392 = vunpack.c.l.b16 %v2674
  %v3393 = vunpack.c.h.b16 %v2674
  %v3394 = vunpack.c.l.b16 %v2675
  %v3395 = vunpack.c.h.b16 %v2675
  %v3396 = vunpack.c.l.b16 %v2676
  %v3397 = vunpack.c.l.b16 %v2677
  %v3398 = vunpack.c.h.b16 %v2677
  %v3399 = vunpack.c.l.b16 %v2678
  %v3400 = vunpack.c.h.b16 %v2678
  %v3401 = vunpack.c.l.b16 %v2679
  %v3402 = vunpack.c.h.b16 %v2679
  %v3403 = vunpack.c.l.b16 %v2680
  %v3404 = vunpack.c.l.b16 %v2681
  %v3405 = vunpack.c.h.b16 %v2681
  %v3406 = vunpack.c.l.b16 %v2682
  %v3407 = vunpack.c.h.b16 %v2682
  %v3408 = vunpack.c.l.b16 %v2683
  %v3409 = vunpack.c.h.b16 %v2683
  %v3410 = vunpack.c.l.b16 %v2684
  %v3411 = vunpack.c.l.b16 %v2685
  %v3412 = vunpack.c.h.b16 %v2685
  %v3413 = vunpack.c.l.b16 %v2686
  %v3414 = vunpack.c.h.b16 %v2686
  %v3415 = vunpack.c.l.b16 %v2687
  %v3416 = vunpack.c.h.b16 %v2687
  %v3417 = vunpack.c.l.b16 %v2688
  %v3418 = vunpack.c.l.b16 %v2689
  %v3419 = vunpack.c.h.b16 %v2689
  %v3420 = vunpack.c.l.b16 %v2690
  %v3421 = vunpack.c.h.b16 %v2690
  %v3422 = vunpack.c.l.b16 %v2691
  %v3423 = vunpack.c.h.b16 %v2691
  %v3424 = vunpack.c.l.b16 %v2692
  %v3425 = vunpack.c.l.b16 %v2693
  %v3426 = vunpack.c.h.b16 %v2693
  %v3427 = vunpack.c.l.b16 %v2694
  %v3428 = vunpack.c.h.b16 %v2694
  %v3429 = vunpack.c.l.b16 %v2695
  %v3430 = vunpack.c.h.b16 %v2695
  %v3431 = vunpack.c.l.b16 %v2696
  %v3432 = vunpack.c.l.b16 %v2697
  %v3433 = vunpack.c.h.b16 %v2697
  %v3434 = vunpack.c.l.b16 %v2698
  %v3435 = vunpack.c.h.b16 %v2698
  %v3436 = vunpack.c.l.b16 %v2699
  %v3437 = vunpack.c.h.b16 %v2699
  %v3438 = vunpack.c.l.b16 %v2700
  %v3439 = vunpack.c.l.b16 %v2701
  %v3440 = vunpack.c.h.b16 %v2701
  %v3441 = vunpack.c.l.b16 %v2702
  %v3442 = vunpack.c.h.b16 %v2702
  %v3443 = vunpack.c.l.b16 %v2703
  %v3444 = vunpack.c.h.b16 %v2703
  %v3445 = vunpack.c.l.b16 %v2704
  %v3446 = vpack.c.b16 %v3005, %v2998
  %v3447 = vpack.c.b16 %v3006, %v2999
  %v3448 = vpack.c.b16 %v3007, %v3000
  %v3449 = vpack.c.b16 %v3008, %v3001
  %v3450 = vpack.c.b16 %v3009, %v3002
  %v3451 = vpack.c.b16 %v3010, %v3003
  %v3452 = vpack.c.b16 %v3011, %v3004
  %v3453 = vpack.c.b16 %v3019, %v3012
  %v3454 = vpack.c.b16 %v3020, %v3013
  %v3455 = vpack.c.b16 %v3021, %v3014
  %v3456 = vpack.c.b16 %v3022, %v3015
  %v3457 = vpack.c.b16 %v3023, %v3016
  %v3458 = vpack.c.b16 %v3024, %v3017
  %v3459 = vpack.c.b16 %v3025, %v3018
  %v3460 = vpack.c.b16 %v3033, %v3026
  %v3461 = vpack.c.b16 %v3034, %v3027
  %v3462 = vpack.c.b16 %v3035, %v3028
  %v3463 = vpack.c.b16 %v3036, %v3029
  %v3464 = vpack.c.b16 %v3037, %v3030
  %v3465 = vpack.c.b16 %v3038, %v3031
  %v3466 = vpack.c.b16 %v3039, %v3032
  %v3467 = vpack.c.b16 %v3047, %v3040
  %v3468 = vpack.c.b16 %v3048, %v3041
  %v3469 = vpack.c.b16 %v3049, %v3042
  %v3470 = vpack.c.b16 %v3050, %v3043
  %v3471 = vpack.c.b16 %v3051, %v3044
  %v3472 = vpack.c.b16 %v3052, %v3045
  %v3473 = vpack.c.b16 %v3053, %v3046
  %v3474 = vpack.c.b16 %v3061, %v3054
  %v3475 = vpack.c.b16 %v3062, %v3055
  %v3476 = vpack.c.b16 %v3063, %v3056
  %v3477 = vpack.c.b16 %v3064, %v3057
  %v3478 = vpack.c.b16 %v3065, %v3058
  %v3479 = vpack.c.b16 %v3066, %v3059
  %v3480 = vpack.c.b16 %v3067, %v3060
  %v3481 = vpack.c.b16 %v3075, %v3068
  %v3482 = vpack.c.b16 %v3076, %v3069
  %v3483 = vpack.c.b16 %v3077, %v3070
  %v3484 = vpack.c.b16 %v3078, %v3071
  %v3485 = vpack.c.b16 %v3079, %v3072
  %v3486 = vpack.c.b16 %v3080, %v3073
  %v3487 = vpack.c.b16 %v3081, %v3074
  %v3488 = vpack.c.b16 %v3089, %v3082
  %v3489 = vpack.c.b16 %v3090, %v3083
  %v3490 = vpack.c.b16 %v3091, %v3084
  %v3491 = vpack.c.b16 %v3092, %v3085
  %v3492 = vpack.c.b16 %v3093, %v3086
  %v3493 = vpack.c.b16 %v3094, %v3087
  %v3494 = vpack.c.b16 %v3095, %v3088
  %v3495 = vpack.c.b16 %v3103, %v3096
  %v3496 = vpack.c.b16 %v3104, %v3097
  %v3497 = vpack.c.b16 %v3105, %v3098
  %v3498 = vpack.c.b16 %v3106, %v3099
  %v3499 = vpack.c.b16 %v3107, %v3100
  %v3500 = vpack.c.b16 %v3108, %v3101
  %v3501 = vpack.c.b16 %v3109, %v3102
  %v3502 = vpack.c.b16 %v3117, %v3110
  %v3503 = vpack.c.b16 %v3118, %v3111
  %v3504 = vpack.c.b16 %v3119, %v3112
  %v3505 = vpack.c.b16 %v3120, %v3113
  %v3506 = vpack.c.b16 %v3121, %v3114
  %v3507 = vpack.c.b16 %v3122, %v3115
  %v3508 = vpack.c.b16 %v3123, %v3116
  %v3509 = vpack.c.b16 %v3131, %v3124
  %v3510 = vpack.c.b16 %v3132, %v3125
  %v3511 = vpack.c.b16 %v3133, %v3126
  %v3512 = vpack.c.b16 %v3134, %v3127
  %v3513 = vpack.c.b16 %v3135, %v3128
  %v3514 = vpack.c.b16 %v3136, %v3129
  %v3515 = vpack.c.b16 %v3137, %v3130
  %v3516 = vpack.c.b16 %v3145, %v3138
  %v3517 = vpack.c.b16 %v3146, %v3139
  %v3518 = vpack.c.b16 %v3147, %v3140
  %v3519 = vpack.c.b16 %v3148, %v3141
  %v3520 = vpack.c.b16 %v3149, %v3142
  %v3521 = vpack.c.b16 %v3150, %v3143
  %v3522 = vpack.c.b16 %v3151, %v3144
  %v3523 = vpack.c.b16 %v3159, %v3152
  %v3524 = vpack.c.b16 %v3160, %v3153
  %v3525 = vpack.c.b16 %v3161, %v3154
  %v3526 = vpack.c.b16 %v3162, %v3155
  %v3527 = vpack.c.b16 %v3163, %v3156
  %v3528 = vpack.c.b16 %v3164, %v3157
  %v3529 = vpack.c.b16 %v3165, %v3158
  %v3530 = vpack.c.b16 %v3173, %v3166
  %v3531 = vpack.c.b16 %v3174, %v3167
  %v3532 = vpack.c.b16 %v3175, %v3168
  %v3533 = vpack.c.b16 %v3176, %v3169
  %v3534 = vpack.c.b16 %v3177, %v3170
  %v3535 = vpack.c.b16 %v3178, %v3171
  %v3536 = vpack.c.b16 %v3179, %v3172
  %v3537 = vpack.c.b16 %v3187, %v3180
  %v3538 = vpack.c.b16 %v3188, %v3181
  %v3539 = vpack.c.b16 %v3189, %v3182
  %v3540 = vpack.c.b16 %v3190, %v3183
  %v3541 = vpack.c.b16 %v3191, %v3184
  %v3542 = vpack.c.b16 %v3192, %v3185
  %v3543 = vpack.c.b16 %v3193, %v3186
  %v3544 = vpack.c.b16 %v3201, %v3194
  %v3545 = vpack.c.b16 %v3202, %v3195
  %v3546 = vpack.c.b16 %v3203, %v3196
  %v3547 = vpack.c.b16 %v3204, %v3197
  %v3548 = vpack.c.b16 %v3205, %v3198
  %v3549 = vpack.c.b16 %v3206, %v3199
  %v3550 = vpack.c.b16 %v3207, %v3200
  %v3551 = vpack.c.b16 %v3215, %v3208
  %v3552 = vpack.c.b16 %v3216, %v3209
  %v3553 = vpack.c.b16 %v3217, %v3210
  %v3554 = vpack.c.b16 %v3218, %v3211
  %v3555 = vpack.c.b16 %v3219, %v3212
  %v3556 = vpack.c.b16 %v3220, %v3213
  %v3557 = vpack.c.b16 %v3221, %v3214
  %v3558 = vpack.c.b16 %v3229, %v3222
  %v3559 = vpack.c.b16 %v3230, %v3223
  %v3560 = vpack.c.b16 %v3231, %v3224
  %v3561 = vpack.c.b16 %v3232, %v3225
  %v3562 = vpack.c.b16 %v3233, %v3226
  %v3563 = vpack.c.b16 %v3234, %v3227
  %v3564 = vpack.c.b16 %v3235, %v3228
  %v3565 = vpack.c.b16 %v3243, %v3236
  %v3566 = vpack.c.b16 %v3244, %v3237
  %v3567 = vpack.c.b16 %v3245, %v3238
  %v3568 = vpack.c.b16 %v3246, %v3239
  %v3569 = vpack.c.b16 %v3247, %v3240
  %v3570 = vpack.c.b16 %v3248, %v3241
  %v3571 = vpack.c.b16 %v3249, %v3242
  %v3572 = vpack.c.b16 %v3257, %v3250
  %v3573 = vpack.c.b16 %v3258, %v3251
  %v3574 = vpack.c.b16 %v3259, %v3252
  %v3575 = vpack.c.b16 %v3260, %v3253
  %v3576 = vpack.c.b16 %v3261, %v3254
  %v3577 = vpack.c.b16 %v3262, %v3255
  %v3578 = vpack.c.b16 %v3263, %v3256
  %v3579 = vpack.c.b16 %v3271, %v3264
  %v3580 = vpack.c.b16 %v3272, %v3265
  %v3581 = vpack.c.b16 %v3273, %v3266
  %v3582 = vpack.c.b16 %v3274, %v3267
  %v3583 = vpack.c.b16 %v3275, %v3268
  %v3584 = vpack.c.b16 %v3276, %v3269
  %v3585 = vpack.c.b16 %v3277, %v3270
  %v3586 = vpack.c.b16 %v3285, %v3278
  %v3587 = vpack.c.b16 %v3286, %v3279
  %v3588 = vpack.c.b16 %v3287, %v3280
  %v3589 = vpack.c.b16 %v3288, %v3281
  %v3590 = vpack.c.b16 %v3289, %v3282
  %v3591 = vpack.c.b16 %v3290, %v3283
  %v3592 = vpack.c.b16 %v3291, %v3284
  %v3593 = vpack.c.b16 %v3299, %v3292
  %v3594 = vpack.c.b16 %v3300, %v3293
  %v3595 = vpack.c.b16 %v3301, %v3294
  %v3596 = vpack.c.b16 %v3302, %v3295
  %v3597 = vpack.c.b16 %v3303, %v3296
  %v3598 = vpack.c.b16 %v3304, %v3297
  %v3599 = vpack.c.b16 %v3305, %v3298
  %v3600 = vpack.c.b16 %v3313, %v3306
  %v3601 = vpack.c.b16 %v3314, %v3307
  %v3602 = vpack.c.b16 %v3315, %v3308
  %v3603 = vpack.c.b16 %v3316, %v3309
  %v3604 = vpack.c.b16 %v3317, %v3310
  %v3605 = vpack.c.b16 %v3318, %v3311
  %v3606 = vpack.c.b16 %v3319, %v3312
  %v3607 = vpack.c.b16 %v3327, %v3320
  %v3608 = vpack.c.b16 %v3328, %v3321
  %v3609 = vpack.c.b16 %v3329, %v3322
  %v3610 = vpack.c.b16 %v3330, %v3323
  %v3611 = vpack.c.b16 %v3331, %v3324
  %v3612 = vpack.c.b16 %v3332, %v3325
  %v3613 = vpack.c.b16 %v3333, %v3326
  %v3614 = vpack.c.b16 %v3341, %v3334
  %v3615 = vpack.c.b16 %v3342, %v3335
  %v3616 = vpack.c.b16 %v3343, %v3336
  %v3617 = vpack.c.b16 %v3344, %v3337
  %v3618 = vpack.c.b16 %v3345, %v3338
  %v3619 = vpack.c.b16 %v3346, %v3339
  %v3620 = vpack.c.b16 %v3347, %v3340
  %v3621 = vpack.c.b16 %v3355, %v3348
  %v3622 = vpack.c.b16 %v3356, %v3349
  %v3623 = vpack.c.b16 %v3357, %v3350
  %v3624 = vpack.c.b16 %v3358, %v3351
  %v3625 = vpack.c.b16 %v3359, %v3352
  %v3626 = vpack.c.b16 %v3360, %v3353
  %v3627 = vpack.c.b16 %v3361, %v3354
  %v3628 = vpack.c.b16 %v3369, %v3362
  %v3629 = vpack.c.b16 %v3370, %v3363
  %v3630 = vpack.c.b16 %v3371, %v3364
  %v3631 = vpack.c.b16 %v3372, %v3365
  %v3632 = vpack.c.b16 %v3373, %v3366
  %v3633 = vpack.c.b16 %v3374, %v3367
  %v3634 = vpack.c.b16 %v3375, %v3368
  %v3635 = vpack.c.b16 %v3383, %v3376
  %v3636 = vpack.c.b16 %v3384, %v3377
  %v3637 = vpack.c.b16 %v3385, %v3378
  %v3638 = vpack.c.b16 %v3386, %v3379
  %v3639 = vpack.c.b16 %v3387, %v3380
  %v3640 = vpack.c.b16 %v3388, %v3381
  %v3641 = vpack.c.b16 %v3389, %v3382
  %v3642 = vpack.c.b16 %v3397, %v3390
  %v3643 = vpack.c.b16 %v3398, %v3391
  %v3644 = vpack.c.b16 %v3399, %v3392
  %v3645 = vpack.c.b16 %v3400, %v3393
  %v3646 = vpack.c.b16 %v3401, %v3394
  %v3647 = vpack.c.b16 %v3402, %v3395
  %v3648 = vpack.c.b16 %v3403, %v3396
  %v3649 = vpack.c.b16 %v3411, %v3404
  %v3650 = vpack.c.b16 %v3412, %v3405
  %v3651 = vpack.c.b16 %v3413, %v3406
  %v3652 = vpack.c.b16 %v3414, %v3407
  %v3653 = vpack.c.b16 %v3415, %v3408
  %v3654 = vpack.c.b16 %v3416, %v3409
  %v3655 = vpack.c.b16 %v3417, %v3410
  %v3656 = vpack.c.b16 %v3425, %v3418
  %v3657 = vpack.c.b16 %v3426, %v3419
  %v3658 = vpack.c.b16 %v3427, %v3420
  %v3659 = vpack.c.b16 %v3428, %v3421
  %v3660 = vpack.c.b16 %v3429, %v3422
  %v3661 = vpack.c.b16 %v3430, %v3423
  %v3662 = vpack.c.b16 %v3431, %v3424
  %v3663 = vpack.c.b16 %v3439, %v3432
  %v3664 = vpack.c.b16 %v3440, %v3433
  %v3665 = vpack.c.b16 %v3441, %v3434
  %v3666 = vpack.c.b16 %v3442, %v3435
  %v3667 = vpack.c.b16 %v3443, %v3436
  %v3668 = vpack.c.b16 %v3444, %v3437
  %v3669 = vpack.c.b16 %v3445, %v3438
  %3894 = vmatprep.subr.bf16.mxu0 %v3447
  %3895 = vmatpush1.bf16.msra.mxu0 %v3446
  %3896 = vmatprep.subr.bf16.mxu0 %v3454
  %3897 = vmatpush1.bf16.msra.mxu0 %v3453
  %3898 = vmatprep.subr.bf16.mxu0 %v3461
  %3899 = vmatpush1.bf16.msra.mxu0 %v3460
  %3900 = vmatprep.subr.bf16.mxu0 %v3468
  %3901 = vmatpush1.bf16.msra.mxu0 %v3467
  %3902 = vmatprep.subr.bf16.mxu0 %v3475
  %3903 = vmatpush1.bf16.msra.mxu0 %v3474
  %3904 = vmatprep.subr.bf16.mxu0 %v3482
  %3905 = vmatpush1.bf16.msra.mxu0 %v3481
  %3906 = vmatprep.subr.bf16.mxu0 %v3489
  %3907 = vmatpush1.bf16.msra.mxu0 %v3488
  %3908 = vmatprep.subr.bf16.mxu0 %v3496
  %3909 = vmatpush1.bf16.msra.mxu0 %v3495
  %3910 = vmatprep.subr.bf16.mxu0 %v3503
  %3911 = vmatpush1.bf16.msra.mxu0 %v3502
  %3912 = vmatprep.subr.bf16.mxu0 %v3510
  %3913 = vmatpush1.bf16.msra.mxu0 %v3509
  %3914 = vmatprep.subr.bf16.mxu0 %v3517
  %3915 = vmatpush1.bf16.msra.mxu0 %v3516
  %3916 = vmatprep.subr.bf16.mxu0 %v3524
  %3917 = vmatpush1.bf16.msra.mxu0 %v3523
  %3918 = vmatprep.subr.bf16.mxu0 %v3531
  %3919 = vmatpush1.bf16.msra.mxu0 %v3530
  %3920 = vmatprep.subr.bf16.mxu0 %v3538
  %3921 = vmatpush1.bf16.msra.mxu0 %v3537
  %3922 = vmatprep.subr.bf16.mxu0 %v3545
  %3923 = vmatpush1.bf16.msra.mxu0 %v3544
  %3924 = vmatprep.subr.bf16.mxu0 %v3552
  %3925 = vmatpush1.bf16.msra.mxu0 %v3551
  %3926 = vmatprep.mubr.bf16.mxu0 %v2446
  %3927 = vmatmul.mubr.bf16.gmra.mrb[0].mxu0 %v2445
  %v3928 = vpop.f32.mrb[0].mxu0
  %v3929 = vadd.f32 %v2710, %v3928
  %v3930 = vpop.f32.mrb[0].mxu0
  %v3931 = vadd.f32 %v2714, %v3930
  %v3932 = vpop.f32.mrb[0].mxu0
  %v3933 = vadd.f32 %v2710, %v3932
  %v3934 = vpop.f32.mrb[0].mxu0
  %v3935 = vadd.f32 %v2714, %v3934
  %3936 = vdwg.mxu0
  %3937 = vmatprep.subr.bf16.mxu0 %v3559
  %3938 = vmatpush1.bf16.msra.mxu0 %v3558
  %3939 = vmatprep.subr.bf16.mxu0 %v3566
  %3940 = vmatpush1.bf16.msra.mxu0 %v3565
  %3941 = vmatprep.subr.bf16.mxu0 %v3573
  %3942 = vmatpush1.bf16.msra.mxu0 %v3572
  %3943 = vmatprep.subr.bf16.mxu0 %v3580
  %3944 = vmatpush1.bf16.msra.mxu0 %v3579
  %3945 = vmatprep.subr.bf16.mxu0 %v3587
  %3946 = vmatpush1.bf16.msra.mxu0 %v3586
  %3947 = vmatprep.subr.bf16.mxu0 %v3594
  %3948 = vmatpush1.bf16.msra.mxu0 %v3593
  %3949 = vmatprep.subr.bf16.mxu0 %v3601
  %3950 = vmatpush1.bf16.msra.mxu0 %v3600
  %3951 = vmatprep.subr.bf16.mxu0 %v3608
  %3952 = vmatpush1.bf16.msra.mxu0 %v3607
  %3953 = vmatprep.subr.bf16.mxu0 %v3615
  %3954 = vmatpush1.bf16.msra.mxu0 %v3614
  %3955 = vmatprep.subr.bf16.mxu0 %v3622
  %3956 = vmatpush1.bf16.msra.mxu0 %v3621
  %3957 = vmatprep.subr.bf16.mxu0 %v3629
  %3958 = vmatpush1.bf16.msra.mxu0 %v3628
  %3959 = vmatprep.subr.bf16.mxu0 %v3636
  %3960 = vmatpush1.bf16.msra.mxu0 %v3635
  %3961 = vmatprep.subr.bf16.mxu0 %v3643
  %3962 = vmatpush1.bf16.msra.mxu0 %v3642
  %3963 = vmatprep.subr.bf16.mxu0 %v3650
  %3964 = vmatpush1.bf16.msra.mxu0 %v3649
  %3965 = vmatprep.subr.bf16.mxu0 %v3657
  %3966 = vmatpush1.bf16.msra.mxu0 %v3656
  %3967 = vmatprep.subr.bf16.mxu0 %v3664
  %3968 = vmatpush1.bf16.msra.mxu0 %v3663
  %3969 = vmatprep.mubr.bf16.mxu0 %v2448
  %3970 = vmatmul.mubr.bf16.gmra.mrb[0].mxu0 %v2447
  %v3971 = vpop.f32.mrb[0].mxu0
  %v3972 = vadd.f32 %v3929, %v3971
  %v3973 = vpop.f32.mrb[0].mxu0
  %v3974 = vadd.f32 %v3931, %v3973
  %v3975 = vpop.f32.mrb[0].mxu0
  %v3976 = vadd.f32 %v3933, %v3975
  %v3977 = vpop.f32.mrb[0].mxu0
  %v3978 = vadd.f32 %v3935, %v3977
  %3979 = vdwg.mxu0
  %3980 = vmatprep.subr.bf16.mxu0 %v3449
  %3981 = vmatpush1.bf16.msra.mxu0 %v3448
  %3982 = vmatprep.subr.bf16.mxu0 %v3456
  %3983 = vmatpush1.bf16.msra.mxu0 %v3455
  %3984 = vmatprep.subr.bf16.mxu0 %v3463
  %3985 = vmatpush1.bf16.msra.mxu0 %v3462
  %3986 = vmatprep.subr.bf16.mxu0 %v3470
  %3987 = vmatpush1.bf16.msra.mxu0 %v3469
  %3988 = vmatprep.subr.bf16.mxu0 %v3477
  %3989 = vmatpush1.bf16.msra.mxu0 %v3476
  %3990 = vmatprep.subr.bf16.mxu0 %v3484
  %3991 = vmatpush1.bf16.msra.mxu0 %v3483
  %3992 = vmatprep.subr.bf16.mxu0 %v3491
  %3993 = vmatpush1.bf16.msra.mxu0 %v3490
  %3994 = vmatprep.subr.bf16.mxu0 %v3498
  %3995 = vmatpush1.bf16.msra.mxu0 %v3497
  %3996 = vmatprep.subr.bf16.mxu0 %v3505
  %3997 = vmatpush1.bf16.msra.mxu0 %v3504
  %3998 = vmatprep.subr.bf16.mxu0 %v3512
  %3999 = vmatpush1.bf16.msra.mxu0 %v3511
  %4000 = vmatprep.subr.bf16.mxu0 %v3519
  %4001 = vmatpush1.bf16.msra.mxu0 %v3518
  %4002 = vmatprep.subr.bf16.mxu0 %v3526
  %4003 = vmatpush1.bf16.msra.mxu0 %v3525
  %4004 = vmatprep.subr.bf16.mxu0 %v3533
  %4005 = vmatpush1.bf16.msra.mxu0 %v3532
  %4006 = vmatprep.subr.bf16.mxu0 %v3540
  %4007 = vmatpush1.bf16.msra.mxu0 %v3539
  %4008 = vmatprep.subr.bf16.mxu0 %v3547
  %4009 = vmatpush1.bf16.msra.mxu0 %v3546
  %4010 = vmatprep.subr.bf16.mxu0 %v3554
  %4011 = vmatpush1.bf16.msra.mxu0 %v3553
  %4012 = vmatprep.mubr.bf16.mxu0 %v2446
  %4013 = vmatmul.mubr.bf16.gmra.mrb[0].mxu0 %v2445
  %v4014 = vpop.f32.mrb[0].mxu0
  %v4015 = vadd.f32 %v2718, %v4014
  %v4016 = vpop.f32.mrb[0].mxu0
  %v4017 = vadd.f32 %v2722, %v4016
  %v4018 = vpop.f32.mrb[0].mxu0
  %v4019 = vadd.f32 %v2718, %v4018
  %v4020 = vpop.f32.mrb[0].mxu0
  %v4021 = vadd.f32 %v2722, %v4020
  %4022 = vdwg.mxu0
  %4023 = vmatprep.subr.bf16.mxu0 %v3561
  %4024 = vmatpush1.bf16.msra.mxu0 %v3560
  %4025 = vmatprep.subr.bf16.mxu0 %v3568
  %4026 = vmatpush1.bf16.msra.mxu0 %v3567
  %4027 = vmatprep.subr.bf16.mxu0 %v3575
  %4028 = vmatpush1.bf16.msra.mxu0 %v3574
  %4029 = vmatprep.subr.bf16.mxu0 %v3582
  %4030 = vmatpush1.bf16.msra.mxu0 %v3581
  %4031 = vmatprep.subr.bf16.mxu0 %v3589
  %4032 = vmatpush1.bf16.msra.mxu0 %v3588
  %4033 = vmatprep.subr.bf16.mxu0 %v3596
  %4034 = vmatpush1.bf16.msra.mxu0 %v3595
  %4035 = vmatprep.subr.bf16.mxu0 %v3603
  %4036 = vmatpush1.bf16.msra.mxu0 %v3602
  %4037 = vmatprep.subr.bf16.mxu0 %v3610
  %4038 = vmatpush1.bf16.msra.mxu0 %v3609
  %4039 = vmatprep.subr.bf16.mxu0 %v3617
  %4040 = vmatpush1.bf16.msra.mxu0 %v3616
  %4041 = vmatprep.subr.bf16.mxu0 %v3624
  %4042 = vmatpush1.bf16.msra.mxu0 %v3623
  %4043 = vmatprep.subr.bf16.mxu0 %v3631
  %4044 = vmatpush1.bf16.msra.mxu0 %v3630
  %4045 = vmatprep.subr.bf16.mxu0 %v3638
  %4046 = vmatpush1.bf16.msra.mxu0 %v3637
  %4047 = vmatprep.subr.bf16.mxu0 %v3645
  %4048 = vmatpush1.bf16.msra.mxu0 %v3644
  %4049 = vmatprep.subr.bf16.mxu0 %v3652
  %4050 = vmatpush1.bf16.msra.mxu0 %v3651
  %4051 = vmatprep.subr.bf16.mxu0 %v3659
  %4052 = vmatpush1.bf16.msra.mxu0 %v3658
  %4053 = vmatprep.subr.bf16.mxu0 %v3666
  %4054 = vmatpush1.bf16.msra.mxu0 %v3665
  %4055 = vmatprep.mubr.bf16.mxu0 %v2448
  %4056 = vmatmul.mubr.bf16.gmra.mrb[0].mxu0 %v2447
  %v4057 = vpop.f32.mrb[0].mxu0
  %v4058 = vadd.f32 %v4015, %v4057
  %v4059 = vpop.f32.mrb[0].mxu0
  %v4060 = vadd.f32 %v4017, %v4059
  %v4061 = vpop.f32.mrb[0].mxu0
  %v4062 = vadd.f32 %v4019, %v4061
  %v4063 = vpop.f32.mrb[0].mxu0
  %v4064 = vadd.f32 %v4021, %v4063
  %4065 = vdwg.mxu0
  %4066 = vmatprep.subr.bf16.mxu0 %v3451
  %4067 = vmatpush1.bf16.msra.mxu0 %v3450
  %4068 = vmatprep.subr.bf16.mxu0 %v3458
  %4069 = vmatpush1.bf16.msra.mxu0 %v3457
  %4070 = vmatprep.subr.bf16.mxu0 %v3465
  %4071 = vmatpush1.bf16.msra.mxu0 %v3464
  %4072 = vmatprep.subr.bf16.mxu0 %v3472
  %4073 = vmatpush1.bf16.msra.mxu0 %v3471
  %4074 = vmatprep.subr.bf16.mxu0 %v3479
  %4075 = vmatpush1.bf16.msra.mxu0 %v3478
  %4076 = vmatprep.subr.bf16.mxu0 %v3486
  %4077 = vmatpush1.bf16.msra.mxu0 %v3485
  %4078 = vmatprep.subr.bf16.mxu0 %v3493
  %4079 = vmatpush1.bf16.msra.mxu0 %v3492
  %4080 = vmatprep.subr.bf16.mxu0 %v3500
  %4081 = vmatpush1.bf16.msra.mxu0 %v3499
  %4082 = vmatprep.subr.bf16.mxu0 %v3507
  %4083 = vmatpush1.bf16.msra.mxu0 %v3506
  %4084 = vmatprep.subr.bf16.mxu0 %v3514
  %4085 = vmatpush1.bf16.msra.mxu0 %v3513
  %4086 = vmatprep.subr.bf16.mxu0 %v3521
  %4087 = vmatpush1.bf16.msra.mxu0 %v3520
  %4088 = vmatprep.subr.bf16.mxu0 %v3528
  %4089 = vmatpush1.bf16.msra.mxu0 %v3527
  %4090 = vmatprep.subr.bf16.mxu0 %v3535
  %4091 = vmatpush1.bf16.msra.mxu0 %v3534
  %4092 = vmatprep.subr.bf16.mxu0 %v3542
  %4093 = vmatpush1.bf16.msra.mxu0 %v3541
  %4094 = vmatprep.subr.bf16.mxu0 %v3549
  %4095 = vmatpush1.bf16.msra.mxu0 %v3548
  %4096 = vmatprep.subr.bf16.mxu0 %v3556
  %4097 = vmatpush1.bf16.msra.mxu0 %v3555
  %4098 = vmatprep.mubr.bf16.mxu0 %v2446
  %4099 = vmatmul.mubr.bf16.gmra.mrb[0].mxu0 %v2445
  %v4100 = vpop.f32.mrb[0].mxu0
  %v4101 = vadd.f32 %v2726, %v4100
  %v4102 = vpop.f32.mrb[0].mxu0
  %v4103 = vadd.f32 %v2730, %v4102
  %v4104 = vpop.f32.mrb[0].mxu0
  %v4105 = vadd.f32 %v2726, %v4104
  %v4106 = vpop.f32.mrb[0].mxu0
  %v4107 = vadd.f32 %v2730, %v4106
  %4108 = vdwg.mxu0
  %4109 = vmatprep.subr.bf16.mxu0 %v3563
  %4110 = vmatpush1.bf16.msra.mxu0 %v3562
  %4111 = vmatprep.subr.bf16.mxu0 %v3570
  %4112 = vmatpush1.bf16.msra.mxu0 %v3569
  %4113 = vmatprep.subr.bf16.mxu0 %v3577
  %4114 = vmatpush1.bf16.msra.mxu0 %v3576
  %4115 = vmatprep.subr.bf16.mxu0 %v3584
  %4116 = vmatpush1.bf16.msra.mxu0 %v3583
  %4117 = vmatprep.subr.bf16.mxu0 %v3591
  %4118 = vmatpush1.bf16.msra.mxu0 %v3590
  %4119 = vmatprep.subr.bf16.mxu0 %v3598
  %4120 = vmatpush1.bf16.msra.mxu0 %v3597
  %4121 = vmatprep.subr.bf16.mxu0 %v3605
  %4122 = vmatpush1.bf16.msra.mxu0 %v3604
  %4123 = vmatprep.subr.bf16.mxu0 %v3612
  %4124 = vmatpush1.bf16.msra.mxu0 %v3611
  %4125 = vmatprep.subr.bf16.mxu0 %v3619
  %4126 = vmatpush1.bf16.msra.mxu0 %v3618
  %4127 = vmatprep.subr.bf16.mxu0 %v3626
  %4128 = vmatpush1.bf16.msra.mxu0 %v3625
  %4129 = vmatprep.subr.bf16.mxu0 %v3633
  %4130 = vmatpush1.bf16.msra.mxu0 %v3632
  %4131 = vmatprep.subr.bf16.mxu0 %v3640
  %4132 = vmatpush1.bf16.msra.mxu0 %v3639
  %4133 = vmatprep.subr.bf16.mxu0 %v3647
  %4134 = vmatpush1.bf16.msra.mxu0 %v3646
  %4135 = vmatprep.subr.bf16.mxu0 %v3654
  %4136 = vmatpush1.bf16.msra.mxu0 %v3653
  %4137 = vmatprep.subr.bf16.mxu0 %v3661
  %4138 = vmatpush1.bf16.msra.mxu0 %v3660
  %4139 = vmatprep.subr.bf16.mxu0 %v3668
  %4140 = vmatpush1.bf16.msra.mxu0 %v3667
  %4141 = vmatprep.mubr.bf16.mxu0 %v2448
  %4142 = vmatmul.mubr.bf16.gmra.mrb[0].mxu0 %v2447
  %v4143 = vpop.f32.mrb[0].mxu0
  %v4144 = vadd.f32 %v4101, %v4143
  %v4145 = vpop.f32.mrb[0].mxu0
  %v4146 = vadd.f32 %v4103, %v4145
  %v4147 = vpop.f32.mrb[0].mxu0
  %v4148 = vadd.f32 %v4105, %v4147
  %v4149 = vpop.f32.mrb[0].mxu0
  %v4150 = vadd.f32 %v4107, %v4149
  %4151 = vdwg.mxu0
  %4152 = vmatprep.subr.bf16.mxu0 0
  %4153 = vmatpush1.bf16.msra.mxu0 %v3452
  %4154 = vmatprep.subr.bf16.mxu0 0
  %4155 = vmatpush1.bf16.msra.mxu0 %v3459
  %4156 = vmatprep.subr.bf16.mxu0 0
  %4157 = vmatpush1.bf16.msra.mxu0 %v3466
  %4158 = vmatprep.subr.bf16.mxu0 0
  %4159 = vmatpush1.bf16.msra.mxu0 %v3473
  %4160 = vmatprep.subr.bf16.mxu0 0
  %4161 = vmatpush1.bf16.msra.mxu0 %v3480
  %4162 = vmatprep.subr.bf16.mxu0 0
  %4163 = vmatpush1.bf16.msra.mxu0 %v3487
  %4164 = vmatprep.subr.bf16.mxu0 0
  %4165 = vmatpush1.bf16.msra.mxu0 %v3494
  %4166 = vmatprep.subr.bf16.mxu0 0
  %4167 = vmatpush1.bf16.msra.mxu0 %v3501
  %4168 = vmatprep.subr.bf16.mxu0 0
  %4169 = vmatpush1.bf16.msra.mxu0 %v3508
  %4170 = vmatprep.subr.bf16.mxu0 0
  %4171 = vmatpush1.bf16.msra.mxu0 %v3515
  %4172 = vmatprep.subr.bf16.mxu0 0
  %4173 = vmatpush1.bf16.msra.mxu0 %v3522
  %4174 = vmatprep.subr.bf16.mxu0 0
  %4175 = vmatpush1.bf16.msra.mxu0 %v3529
  %4176 = vmatprep.subr.bf16.mxu0 0
  %4177 = vmatpush1.bf16.msra.mxu0 %v3536
  %4178 = vmatprep.subr.bf16.mxu0 0
  %4179 = vmatpush1.bf16.msra.mxu0 %v3543
  %4180 = vmatprep.subr.bf16.mxu0 0
  %4181 = vmatpush1.bf16.msra.mxu0 %v3550
  %4182 = vmatprep.subr.bf16.mxu0 0
  %4183 = vmatpush1.bf16.msra.mxu0 %v3557
  %4184 = vmatprep.mubr.bf16.mxu0 %v2446
  %4185 = vmatmul.mubr.bf16.gmra.mrb[0].mxu0 %v2445
  %v4186 = vpop.f32.mrb[0].mxu0
  %v4187 = vadd.f32 %v2734, %v4186
  %v4188 = vpop.f32.mrb[0].mxu0
  %v4189 = vpop.f32.mrb[0].mxu0
  %v4190 = vadd.f32 %v2734, %v4189
  %v4191 = vpop.f32.mrb[0].mxu0
  %4192 = vdwg.mxu0
  %4193 = vmatprep.subr.bf16.mxu0 0
  %4194 = vmatpush1.bf16.msra.mxu0 %v3564
  %4195 = vmatprep.subr.bf16.mxu0 0
  %4196 = vmatpush1.bf16.msra.mxu0 %v3571
  %4197 = vmatprep.subr.bf16.mxu0 0
  %4198 = vmatpush1.bf16.msra.mxu0 %v3578
  %4199 = vmatprep.subr.bf16.mxu0 0
  %4200 = vmatpush1.bf16.msra.mxu0 %v3585
  %4201 = vmatprep.subr.bf16.mxu0 0
  %4202 = vmatpush1.bf16.msra.mxu0 %v3592
  %4203 = vmatprep.subr.bf16.mxu0 0
  %4204 = vmatpush1.bf16.msra.mxu0 %v3599
  %4205 = vmatprep.subr.bf16.mxu0 0
  %4206 = vmatpush1.bf16.msra.mxu0 %v3606
  %4207 = vmatprep.subr.bf16.mxu0 0
  %4208 = vmatpush1.bf16.msra.mxu0 %v3613
  %4209 = vmatprep.subr.bf16.mxu0 0
  %4210 = vmatpush1.bf16.msra.mxu0 %v3620
  %4211 = vmatprep.subr.bf16.mxu0 0
  %4212 = vmatpush1.bf16.msra.mxu0 %v3627
  %4213 = vmatprep.subr.bf16.mxu0 0
  %4214 = vmatpush1.bf16.msra.mxu0 %v3634
  %4215 = vmatprep.subr.bf16.mxu0 0
  %4216 = vmatpush1.bf16.msra.mxu0 %v3641
  %4217 = vmatprep.subr.bf16.mxu0 0
  %4218 = vmatpush1.bf16.msra.mxu0 %v3648
  %4219 = vmatprep.subr.bf16.mxu0 0
  %4220 = vmatpush1.bf16.msra.mxu0 %v3655
  %4221 = vmatprep.subr.bf16.mxu0 0
  %4222 = vmatpush1.bf16.msra.mxu0 %v3662
  %4223 = vmatprep.subr.bf16.mxu0 0
  %4224 = vmatpush1.bf16.msra.mxu0 %v3669
  %4225 = vmatprep.mubr.bf16.mxu0 %v2448
  %4226 = vmatmul.mubr.bf16.gmra.mrb[0].mxu0 %v2447
  %v4227 = vpop.f32.mrb[0].mxu0
  %v4228 = vadd.f32 %v4187, %v4227
  %v4229 = vpop.f32.mrb[0].mxu0
  %v4230 = vpop.f32.mrb[0].mxu0
  %v4231 = vadd.f32 %v4190, %v4230
  %v4232 = vpop.f32.mrb[0].mxu0
  %4233 = vdwg.mxu0
  %v4234 = vsub.f32 0.0, %v3972
  %v4235 = vsub.f32 0.0, %v3974
  %v4236 = vsub.f32 0.0, %v4058
  %v4237 = vsub.f32 0.0, %v4060
  %v4238 = vsub.f32 0.0, %v4144
  %v4239 = vsub.f32 0.0, %v4146
  %v4240 = vsub.f32 0.0, %v4228
  %v4241 = vsub.f32 0.0, %v3976
  %v4242 = vsub.f32 0.0, %v3978
  %v4243 = vsub.f32 0.0, %v4062
  %v4244 = vsub.f32 0.0, %v4064
  %v4245 = vsub.f32 0.0, %v4148
  %v4246 = vsub.f32 0.0, %v4150
  %v4247 = vsub.f32 0.0, %v4231
  %v4248 = vmul.f32 %v4234, 1.442695
  %v4249 = vpow.pop %v4248
  %v4250 = vmul.f32 %v4235, 1.442695
  %v4251 = vpow.pop %v4250
  %v4252 = vmul.f32 %v4236, 1.442695
  %v4253 = vpow.pop %v4252
  %v4254 = vmul.f32 %v4237, 1.442695
  %v4255 = vpow.pop %v4254
  %v4256 = vmul.f32 %v4238, 1.442695
  %v4257 = vpow.pop %v4256
  %v4258 = vmul.f32 %v4239, 1.442695
  %v4259 = vpow.pop %v4258
  %v4260 = vmul.f32 %v4240, 1.442695
  %v4261 = vpow.pop %v4260
  %v4262 = vmul.f32 %v4241, 1.442695
  %v4263 = vpow.pop %v4262
  %v4264 = vmul.f32 %v4242, 1.442695
  %v4265 = vpow.pop %v4264
  %v4266 = vmul.f32 %v4243, 1.442695
  %v4267 = vpow.pop %v4266
  %v4268 = vmul.f32 %v4244, 1.442695
  %v4269 = vpow.pop %v4268
  %v4270 = vmul.f32 %v4245, 1.442695
  %v4271 = vpow.pop %v4270
  %v4272 = vmul.f32 %v4246, 1.442695
  %v4273 = vpow.pop %v4272
  %v4274 = vmul.f32 %v4247, 1.442695
  %v4275 = vpow.pop %v4274
  %v4276 = vadd.f32 %v4249, 1.0
  %v4277 = vadd.f32 %v4251, 1.0
  %v4278 = vadd.f32 %v4253, 1.0
  %v4279 = vadd.f32 %v4255, 1.0
  %v4280 = vadd.f32 %v4257, 1.0
  %v4281 = vadd.f32 %v4259, 1.0
  %v4282 = vadd.f32 %v4261, 1.0
  %v4283 = vadd.f32 %v4263, 1.0
  %v4284 = vadd.f32 %v4265, 1.0
  %v4285 = vadd.f32 %v4267, 1.0
  %v4286 = vadd.f32 %v4269, 1.0
  %v4287 = vadd.f32 %v4271, 1.0
  %v4288 = vadd.f32 %v4273, 1.0
  %v4289 = vadd.f32 %v4275, 1.0
  %v4290 = vrcp.pop %v4276
  %v4291 = vrcp.pop %v4277
  %v4292 = vrcp.pop %v4278
  %v4293 = vrcp.pop %v4279
  %v4294 = vrcp.pop %v4280
  %v4295 = vrcp.pop %v4281
  %v4296 = vrcp.pop %v4282
  %v4297 = vrcp.pop %v4283
  %v4298 = vrcp.pop %v4284
  %v4299 = vrcp.pop %v4285
  %v4300 = vrcp.pop %v4286
  %v4301 = vrcp.pop %v4287
  %v4302 = vrcp.pop %v4288
  %v4303 = vrcp.pop %v4289
  %v4304 = vmax.f32 %v4290, 0.0
  %v4305 = vmax.f32 %v4291, 0.0
  %v4306 = vmax.f32 %v4292, 0.0
  %v4307 = vmax.f32 %v4293, 0.0
  %v4308 = vmax.f32 %v4294, 0.0
  %v4309 = vmax.f32 %v4295, 0.0
  %v4310 = vmax.f32 %v4296, 0.0
  %v4311 = vmax.f32 %v4297, 0.0
  %v4312 = vmax.f32 %v4298, 0.0
  %v4313 = vmax.f32 %v4299, 0.0
  %v4314 = vmax.f32 %v4300, 0.0
  %v4315 = vmax.f32 %v4301, 0.0
  %v4316 = vmax.f32 %v4302, 0.0
  %v4317 = vmax.f32 %v4303, 0.0
  %v4318 = vmin.f32 %v4304, 1.0
  %v4319 = vmin.f32 %v4305, 1.0
  %v4320 = vmin.f32 %v4306, 1.0
  %v4321 = vmin.f32 %v4307, 1.0
  %v4322 = vmin.f32 %v4308, 1.0
  %v4323 = vmin.f32 %v4309, 1.0
  %v4324 = vmin.f32 %v4310, 1.0
  %v4325 = vmin.f32 %v4311, 1.0
  %v4326 = vmin.f32 %v4312, 1.0
  %v4327 = vmin.f32 %v4313, 1.0
  %v4328 = vmin.f32 %v4314, 1.0
  %v4329 = vmin.f32 %v4315, 1.0
  %v4330 = vmin.f32 %v4316, 1.0
  %v4331 = vmin.f32 %v4317, 1.0
  %4332 = vst [vmem:[%s10] sm:$0xff] %v4318
  %4333 = vst [vmem:[%s10 + $0x8] sm:$0xff] %v4319
  %4334 = vst [vmem:[%s10 + $0x10] sm:$0xff] %v4320
  %4335 = vst [vmem:[%s10 + $0x18] sm:$0xff] %v4321
  %4336 = vst [vmem:[%s10 + $0x20] sm:$0xff] %v4322
  %4337 = vst [vmem:[%s10 + $0x28] sm:$0xff] %v4323
  %4338 = vst.msk [vmem:[%s10 + $0x30] sm:$0xff] %vm1284, %v4324
  %4339 = vst [vmem:[%s10 + $0x38] sm:$0xff] %v4325
  %4340 = vst [vmem:[%s10 + $0x40] sm:$0xff] %v4326
  %4341 = vst [vmem:[%s10 + $0x48] sm:$0xff] %v4327
  %4342 = vst [vmem:[%s10 + $0x50] sm:$0xff] %v4328
  %4343 = vst [vmem:[%s10 + $0x58] sm:$0xff] %v4329
  %4344 = vst [vmem:[%s10 + $0x60] sm:$0xff] %v4330
  %4345 = vst.msk [vmem:[%s10 + $0x68] sm:$0xff] %vm1284, %v4331
  %4346 = vst [vmem:[%s11] sm:$0xff] %v2118
  %4347 = vst [vmem:[%s11 + $0x8] sm:$0xff] %v2122
  %4348 = vst [vmem:[%s12] sm:$0xff] %v2120
  %4349 = vst [vmem:[%s12 + $0x8] sm:$0xff] %v2124
  // Predicated region
  $region42: #{vae_forward.1} parent=0 // pred_check
    _
  $region43: #{vae_forward.1} parent=0 // pred_check_branch
    %4351 = sbr.rel (0) target = $region45
  $region44: #{vae_forward.1} parent=0 // pred_region
    _
  $region45: #{vae_forward.1} parent=0 // pred_fallthru
    _
  // Predicated region
  $region46: #{vae_forward.1} parent=0 // pred_check
    _
  $region47: #{vae_forward.1} parent=0 // pred_check_branch
    %4353 = sbr.rel (0) target = $region49
  $region48: #{vae_forward.1} parent=0 // pred_region
    _
  $region49: #{vae_forward.1} parent=0 // pred_fallthru
    _
  // Predicated region
  $region50: #{vae_forward.1} parent=0 // pred_check
    _
  $region51: #{vae_forward.1} parent=0 // pred_check_branch
    %4355 = sbr.rel (0) target = $region53
  $region52: #{vae_forward.1} parent=0 // pred_region
    _
  $region53: #{vae_forward.1} parent=0 // pred_fallthru
    _
  // Predicated region
  $region54: #{vae_forward.1} parent=0 // pred_check
    _
  $region55: #{vae_forward.1} parent=0 // pred_check_branch
    %4357 = sbr.rel (0) target = $region57
  $region56: #{vae_forward.1} parent=0 // pred_region
    _
  $region57: #{vae_forward.1} parent=0 // pred_fallthru
    _
  // Predicated region
  $region58: #{vae_forward.1} parent=0 // pred_check
    _
  $region59: #{vae_forward.1} parent=0 // pred_check_branch
    %4359 = sbr.rel (0) target = $region61
  $region60: #{vae_forward.1} parent=0 // pred_region
    _
  $region61: #{vae_forward.1} parent=0 // pred_fallthru
    _
  // Predicated region
  $region62: #{vae_forward.1} parent=0 // pred_check
    _
  $region63: #{vae_forward.1} parent=0 // pred_check_branch
    %4361 = sbr.rel (0) target = $region65
  $region64: #{vae_forward.1} parent=0 // pred_region
    _
  $region65: #{vae_forward.1} parent=0 // pred_fallthru
    _

</llo_original>
